<compile_context>
chip_gen: v6e
topology: v6e:2x2x1
jax: 0.10.0
libtpu: 0.0.40
codegen_flags: <defaults>
</compile_context>

<pallas_src>
import math

import jax
import jax.numpy as jnp
from jax.experimental import pallas as pl
from jax.experimental.pallas import tpu as pltpu


# ---------------------------------------------------------------------------
# Tunables
# ---------------------------------------------------------------------------

MLP_TILE_M = 1024   # row tile for every MLP kernel
AGG_TILE_N = 1024   # node-row tile for the fused scatter-add + node-MLP kernel
AGG_TILE_E = 2048   # edge (reduction) tile for the scatter-add

# MXU operand dtype for the one-hot scatter-add matmul.  bf16 is exact for the
# 0/1 one-hot operand and gives the full MXU rate on v6e/v7x; casting the
# messages to bf16 trades ~3 decimal digits of precision for throughput.
# Set to jnp.float32 to restore bit-exact f32 aggregation numerics.
AGG_MXU_DTYPE = jnp.bfloat16

LN_EPS = 1e-5

_VMEM_LIMIT = None


def _round_up(x, m):
    return ((x + m - 1) // m) * m


def _vmem_limit():
    """~96 MiB on 128-MiB parts (v5e/v6e), ~48 MiB on 64-MiB parts (v7x)."""
    global _VMEM_LIMIT
    if _VMEM_LIMIT is None:
        cap = 128 * 1024 * 1024
        try:
            info = pltpu.get_tpu_info()
            cap = int(getattr(info, "vmem_capacity_bytes", cap))
        except Exception:
            pass
        _VMEM_LIMIT = int(min(96 * 1024 * 1024, cap * 3 // 4))
    return _VMEM_LIMIT


# ---------------------------------------------------------------------------
# Fused MLP (+ LayerNorm, + optional residual) kernel, row-tiled
# ---------------------------------------------------------------------------

def _make_fused_mlp_kernel(n_in, num_linear, apply_ln, residual_idx):
    """h = sum_t in_t @ W0_t + b0 -> ReLU -> (W_i + b_i, ReLU)* -> W_last + b_last
       [-> LayerNorm] [-> + in_residual]."""

    def kernel(*refs):
        idx = 0
        xs = [refs[idx + t][...].astype(jnp.float32) for t in range(n_in)]
        idx += n_in

        h = jnp.dot(xs[0], refs[idx][...], preferred_element_type=jnp.float32)
        for t in range(1, n_in):
            h = h + jnp.dot(xs[t], refs[idx + t][...],
                            preferred_element_type=jnp.float32)
        idx += n_in
        h = h + refs[idx][...]
        idx += 1
        if num_linear > 1:
            h = jnp.maximum(h, 0.0)

        for i in range(num_linear - 1):
            w = refs[idx][...]
            b = refs[idx + 1][...]
            idx += 2
            h = jnp.dot(h, w, preferred_element_type=jnp.float32) + b
            if i < num_linear - 2:          # hidden activations only
                h = jnp.maximum(h, 0.0)

        if apply_ln:
            gamma = refs[idx][...]
            beta = refs[idx + 1][...]
            idx += 2
            mean = jnp.mean(h, axis=-1, keepdims=True)
            var = jnp.mean(jnp.square(h - mean), axis=-1, keepdims=True)
            h = (h - mean) * jax.lax.rsqrt(var + LN_EPS) * gamma + beta

        if residual_idx is not None:
            h = h + xs[residual_idx]

        out_ref = refs[idx]
        out_ref[...] = h.astype(out_ref.dtype)

    return kernel


def fused_mlp(inputs, w0_list, b0, ws_rest, bs_rest, ln=None, residual_idx=None,
              tile_m=MLP_TILE_M):
    """One pallas_call for a full MLP stack with split first-layer weights.

    Rows are tiled over a 1-D parallel grid; weights/bias/LN params get
    constant index_maps so they are DMA'd once and stay VMEM-resident.
    """
    rows = inputs[0].shape[0]
    out_dim = (ws_rest[-1] if ws_rest else w0_list[0]).shape[1]
    n_in = len(inputs)
    num_linear = 1 + len(ws_rest)
    tile_m = int(min(tile_m, _round_up(rows, 8)))
    grid = (pl.cdiv(rows, tile_m),)

    def row_spec(d):
        return pl.BlockSpec((tile_m, d), lambda i: (i, 0))

    def const_spec(arr):
        return pl.BlockSpec(arr.shape, lambda i: (0, 0))

    args, in_specs = [], []
    for xin in inputs:
        args.append(xin)
        in_specs.append(row_spec(xin.shape[1]))
    for w in w0_list:
        args.append(w)
        in_specs.append(const_spec(w))
    args.append(b0)
    in_specs.append(const_spec(b0))
    for w, b in zip(ws_rest, bs_rest):
        args += [w, b]
        in_specs += [const_spec(w), const_spec(b)]
    if ln is not None:
        args += [ln[0], ln[1]]
        in_specs += [const_spec(ln[0]), const_spec(ln[1])]

    kernel = _make_fused_mlp_kernel(n_in, num_linear, ln is not None, residual_idx)
    return pl.pallas_call(
        kernel,
        out_shape=jax.ShapeDtypeStruct((rows, out_dim), jnp.float32),
        grid=grid,
        in_specs=in_specs,
        out_specs=pl.BlockSpec((tile_m, out_dim), lambda i: (i, 0)),
        compiler_params=pltpu.CompilerParams(
            dimension_semantics=("parallel",),
            vmem_limit_bytes=_vmem_limit()),
    )(*args)


# ---------------------------------------------------------------------------
# Fused scatter-add (aggr='add') + node MLP + LayerNorm + residual kernel
# ---------------------------------------------------------------------------

def _make_agg_node_kernel(tile_n, tile_e, num_linear, mxu_dtype):
    """Grid (node tiles, edge tiles); edge axis is the reduction (last,
    'arbitrary').  Accumulates one-hot @ msg into a VMEM f32 scratch; at the
    last edge tile runs node_fn(cat[agg, x]) (split W0) + LayerNorm + x."""

    def kernel(*refs):
        recv_ref, msg_ref, x_ref = refs[0], refs[1], refs[2]
        out_ref = refs[-2]
        acc_ref = refs[-1]
        ei = pl.program_id(1)

        @pl.when(ei == 0)
        def _():
            acc_ref[...] = jnp.zeros_like(acc_ref)

        recv = recv_ref[...]                                   # (1, tile_e) int32
        msg = msg_ref[...].astype(mxu_dtype)                   # (tile_e, D)
        base = pl.program_id(0) * tile_n
        node_ids = base + jax.lax.broadcasted_iota(jnp.int32, (tile_n, tile_e), 0)
        onehot = (node_ids == recv).astype(mxu_dtype)          # (tile_n, tile_e)
        acc_ref[...] += jnp.dot(onehot, msg, preferred_element_type=jnp.float32)

        @pl.when(ei == pl.num_programs(1) - 1)
        def _():
            x = x_ref[...].astype(jnp.float32)
            agg = acc_ref[...]
            idx = 3
            w0_a = refs[idx][...]
            w0_x = refs[idx + 1][...]
            b0 = refs[idx + 2][...]
            idx += 3
            h = (jnp.dot(agg, w0_a, preferred_element_type=jnp.float32)
                 + jnp.dot(x, w0_x, preferred_element_type=jnp.float32) + b0)
            if num_linear > 1:
                h = jnp.maximum(h, 0.0)
            for i in range(num_linear - 1):
                w = refs[idx][...]
                b = refs[idx + 1][...]
                idx += 2
                h = jnp.dot(h, w, preferred_element_type=jnp.float32) + b
                if i < num_linear - 2:
                    h = jnp.maximum(h, 0.0)
            gamma = refs[idx][...]
            beta = refs[idx + 1][...]
            mean = jnp.mean(h, axis=-1, keepdims=True)
            var = jnp.mean(jnp.square(h - mean), axis=-1, keepdims=True)
            h = (h - mean) * jax.lax.rsqrt(var + LN_EPS) * gamma + beta
            out_ref[...] = (h + x).astype(out_ref.dtype)       # residual in-kernel

    return kernel


def agg_node_update(receivers, messages, x, w0_agg, w0_x, b0, ws_rest, bs_rest, ln,
                    tile_n=AGG_TILE_N, tile_e=AGG_TILE_E):
    num_nodes, latent = x.shape
    num_edges, d = messages.shape
    tile_e = int(min(tile_e, _round_up(num_edges, 128)))
    tile_n = int(min(tile_n, _round_up(num_nodes, 8)))
    e_pad = _round_up(num_edges, tile_e)

    # Pad the edge axis so the reduction tiles are exact: padded recv = -1
    # (never matches a node id) and padded messages = 0, so they add nothing.
    recv = receivers.astype(jnp.int32).reshape(1, -1)
    recv = jnp.pad(recv, ((0, 0), (0, e_pad - num_edges)), constant_values=-1)
    msg = jnp.pad(messages, ((0, e_pad - num_edges), (0, 0)))

    num_linear = 1 + len(ws_rest)
    out_dim = (ws_rest[-1] if ws_rest else w0_agg).shape[1]
    grid = (pl.cdiv(num_nodes, tile_n), e_pad // tile_e)

    def const_spec(arr):
        return pl.BlockSpec(arr.shape, lambda ni, ei: (0, 0))

    args = [recv, msg, x, w0_agg, w0_x, b0]
    in_specs = [
        pl.BlockSpec((1, tile_e), lambda ni, ei: (0, ei)),
        pl.BlockSpec((tile_e, d), lambda ni, ei: (ei, 0)),
        pl.BlockSpec((tile_n, latent), lambda ni, ei: (ni, 0)),
        const_spec(w0_agg), const_spec(w0_x), const_spec(b0),
    ]
    for w, b in zip(ws_rest, bs_rest):
        args += [w, b]
        in_specs += [const_spec(w), const_spec(b)]
    args += [ln[0], ln[1]]
    in_specs += [const_spec(ln[0]), const_spec(ln[1])]

    return pl.pallas_call(
        _make_agg_node_kernel(tile_n, tile_e, num_linear, AGG_MXU_DTYPE),
        out_shape=jax.ShapeDtypeStruct((num_nodes, out_dim), jnp.float32),
        grid=grid,
        in_specs=in_specs,
        out_specs=pl.BlockSpec((tile_n, out_dim), lambda ni, ei: (ni, 0)),
        scratch_shapes=[pltpu.VMEM((tile_n, d), jnp.float32)],
        compiler_params=pltpu.CompilerParams(
            dimension_semantics=("parallel", "arbitrary"),
            vmem_limit_bytes=_vmem_limit()),
    )(*args)


# ---------------------------------------------------------------------------
# Deterministic parameter init (same shapes as the torch module)
# ---------------------------------------------------------------------------

def _init_linear(key, fan_in, fan_out):
    k1, k2 = jax.random.split(key)
    bound = 1.0 / math.sqrt(fan_in)
    w = jax.random.uniform(k1, (fan_in, fan_out), jnp.float32, -bound, bound)
    b = jax.random.uniform(k2, (1, fan_out), jnp.float32, -bound, bound)
    return w, b


def _init_mlp(key, sizes):
    ws, bs = [], []
    keys = jax.random.split(key, len(sizes) - 1)
    for k, fi, fo in zip(keys, sizes[:-1], sizes[1:]):
        w, b = _init_linear(k, fi, fo)
        ws.append(w)
        bs.append(b)
    return ws, bs


def _init_ln(dim):
    return (jnp.ones((1, dim), jnp.float32), jnp.zeros((1, dim), jnp.float32))


def init_params(key, node_in, node_out, edge_in, latent_dim,
                num_message_passing_steps, mlp_num_layers, mlp_hidden_dim):
    hs = [mlp_hidden_dim] * mlp_num_layers
    keys = jax.random.split(key, 3 + 2 * num_message_passing_steps)
    params = {}

    w, b = _init_mlp(keys[0], [node_in] + hs + [latent_dim])
    params["enc_node"] = {"w": w, "b": b, "ln": _init_ln(latent_dim)}
    w, b = _init_mlp(keys[1], [edge_in] + hs + [latent_dim])
    params["enc_edge"] = {"w": w, "b": b, "ln": _init_ln(latent_dim)}

    proc = []
    for s in range(num_message_passing_steps):
        we, be = _init_mlp(keys[2 + 2 * s], [3 * latent_dim] + hs + [latent_dim])
        wn, bn = _init_mlp(keys[3 + 2 * s], [2 * latent_dim] + hs + [latent_dim])
        proc.append({
            "edge": {"w": we, "b": be, "ln": _init_ln(latent_dim)},
            "node": {"w": wn, "b": bn, "ln": _init_ln(latent_dim)},
        })
    params["proc"] = proc

    w, b = _init_mlp(keys[2 + 2 * num_message_passing_steps],
                     [latent_dim] + hs + [node_out])
    params["dec"] = {"w": w, "b": b}
    return params


# ---------------------------------------------------------------------------
# EncodeProcessDecode forward
# ---------------------------------------------------------------------------

def forward(params, x, edge_index, e_features):
    senders = edge_index[0]     # x_j
    receivers = edge_index[1]   # x_i (aggregation targets; PyG flow source_to_target)

    # Encoder: MLP + LayerNorm for nodes and edges (one kernel each).
    enc_n = params["enc_node"]
    x = fused_mlp([x], [enc_n["w"][0]], enc_n["b"][0],
                  enc_n["w"][1:], enc_n["b"][1:], ln=enc_n["ln"])
    enc_e = params["enc_edge"]
    e = fused_mlp([e_features], [enc_e["w"][0]], enc_e["b"][0],
                  enc_e["w"][1:], enc_e["b"][1:], ln=enc_e["ln"])

    latent = x.shape[1]

    # Processor: stacked InteractionNetworks (aggr='add'), 2 pallas_calls/step.
    # PyG quirk: update() returns the ORIGINAL e_features kwarg, so each layer's
    # edge output is e + e.  e only ever feeds later edge MLPs, so the exact
    # power-of-two scale 2**step is folded into the e-slice of W0 instead of an
    # extra HBM pass.
    for step, layer in enumerate(params["proc"]):
        e_scale = 2.0 ** step

        # Edge MLP, concat-free: W0 split row-wise into x_i / x_j / e parts.
        w0e = layer["edge"]["w"][0]
        w0_xi = w0e[:latent]
        w0_xj = w0e[latent:2 * latent]
        w0_e = w0e[2 * latent:] * e_scale
        # TODO(synk): data-dependent per-edge row gather stays in XLA (jnp.take);
        # an in-kernel dynamic gather would remove these two HBM passes.
        x_i = jnp.take(x, receivers, axis=0)
        x_j = jnp.take(x, senders, axis=0)
        msg = fused_mlp([x_i, x_j, e], [w0_xi, w0_xj, w0_e], layer["edge"]["b"][0],
                        layer["edge"]["w"][1:], layer["edge"]["b"][1:],
                        ln=layer["edge"]["ln"])

        # Fused scatter-add + node MLP + LayerNorm + residual (concat-free).
        w0n = layer["node"]["w"][0]
        x = agg_node_update(receivers, msg, x,
                            w0n[:latent], w0n[latent:], layer["node"]["b"][0],
                            layer["node"]["w"][1:], layer["node"]["b"][1:],
                            layer["node"]["ln"])

    # Decoder: MLP only (no LayerNorm).
    dec = params["dec"]
    return fused_mlp([x], [dec["w"][0]], dec["b"][0], dec["w"][1:], dec["b"][1:])


# ---------------------------------------------------------------------------
# Demo
# ---------------------------------------------------------------------------

if __name__ == "__main__":
    NODE_IN, NODE_OUT, EDGE_IN = 16, 3, 8
    LATENT_DIM = 32
    NUM_MP_STEPS = 2
    MLP_NUM_LAYERS = 2
    MLP_HIDDEN_DIM = 32
    N_NODES, N_EDGES = 32, 64

    key = jax.random.PRNGKey(0)
    kp, kx, ke, ki = jax.random.split(key, 4)

    params = init_params(kp, NODE_IN, NODE_OUT, EDGE_IN, LATENT_DIM,
                         NUM_MP_STEPS, MLP_NUM_LAYERS, MLP_HIDDEN_DIM)

    x = jax.random.normal(kx, (N_NODES, NODE_IN), jnp.float32)
    e_features = jax.random.normal(ke, (N_EDGES, EDGE_IN), jnp.float32)
    edge_index = jax.random.randint(ki, (2, N_EDGES), 0, N_NODES, jnp.int32)

    out = jax.jit(forward)(params, x, edge_index, e_features)
    out = jax.block_until_ready(out)
    assert out.shape == (N_NODES, NODE_OUT)
    assert out.dtype == jnp.float32
    print("KERNEL_OK")
</pallas_src>

<mosaic_0001>
module attributes {stable_mosaic.version = 11 : i64} {
  func.func @kernel(%arg0: i32, %arg1: memref<32x16xf32, #tpu.memory_space<vmem>>, %arg2: memref<16x32xf32, #tpu.memory_space<vmem>>, %arg3: memref<1x32xf32, #tpu.memory_space<vmem>>, %arg4: memref<32x32xf32, #tpu.memory_space<vmem>>, %arg5: memref<1x32xf32, #tpu.memory_space<vmem>>, %arg6: memref<32x32xf32, #tpu.memory_space<vmem>>, %arg7: memref<1x32xf32, #tpu.memory_space<vmem>>, %arg8: memref<1x32xf32, #tpu.memory_space<vmem>>, %arg9: memref<1x32xf32, #tpu.memory_space<vmem>>, %arg10: memref<32x32xf32, #tpu.memory_space<vmem>>) attributes {dimension_semantics = [#tpu.dimension_semantics<parallel>], iteration_bounds = array<i64: 1>, scalar_prefetch = 0 : i64, scratch_operands = 0 : i64, tpu.core_type = #tpu.core_type<tc>, window_params = [{transform_indices = @transform_0, window_bounds = array<i64: 32, 16>}, {pipeline_mode = #tpu.pipeline_mode<synchronous>, transform_indices = @transform_1, window_bounds = array<i64: 16, 32>}, {pipeline_mode = #tpu.pipeline_mode<synchronous>, transform_indices = @transform_2, window_bounds = array<i64: 1, 32>}, {pipeline_mode = #tpu.pipeline_mode<synchronous>, transform_indices = @transform_3, window_bounds = array<i64: 32, 32>}, {pipeline_mode = #tpu.pipeline_mode<synchronous>, transform_indices = @transform_4, window_bounds = array<i64: 1, 32>}, {pipeline_mode = #tpu.pipeline_mode<synchronous>, transform_indices = @transform_5, window_bounds = array<i64: 32, 32>}, {pipeline_mode = #tpu.pipeline_mode<synchronous>, transform_indices = @transform_6, window_bounds = array<i64: 1, 32>}, {pipeline_mode = #tpu.pipeline_mode<synchronous>, transform_indices = @transform_7, window_bounds = array<i64: 1, 32>}, {pipeline_mode = #tpu.pipeline_mode<synchronous>, transform_indices = @transform_8, window_bounds = array<i64: 1, 32>}, {transform_indices = @transform_9, window_bounds = array<i64: 32, 32>}]} {
    %c0 = arith.constant 0 : index
    %c0_0 = arith.constant 0 : index
    %0 = vector.load %arg1[%c0, %c0_0] : memref<32x16xf32, #tpu.memory_space<vmem>>, vector<32x16xf32>
    %c0_1 = arith.constant 0 : index
    %c0_2 = arith.constant 0 : index
    %1 = vector.load %arg2[%c0_1, %c0_2] : memref<16x32xf32, #tpu.memory_space<vmem>>, vector<16x32xf32>
    %cst = arith.constant dense<0.000000e+00> : vector<32x32xf32>
    %2 = tpu.matmul %0, %1, %cst {dimension_numbers = #tpu.dot_dimension_numbers<[1], [0], [0], [1], [0, 0, 1, 1], [], []>} : vector<32x16xf32>, vector<16x32xf32>, vector<32x32xf32> -> vector<32x32xf32>
    %c0_3 = arith.constant 0 : index
    %c0_4 = arith.constant 0 : index
    %3 = vector.load %arg3[%c0_3, %c0_4] : memref<1x32xf32, #tpu.memory_space<vmem>>, vector<1x32xf32>
    %4 = vector.broadcast %3 : vector<1x32xf32> to vector<32x32xf32>
    %5 = arith.addf %2, %4 : vector<32x32xf32>
    %cst_5 = arith.constant 0.000000e+00 : f32
    %6 = vector.broadcast %cst_5 : f32 to vector<32x32xf32>
    %7 = arith.maximumf %5, %6 : vector<32x32xf32>
    %c0_6 = arith.constant 0 : index
    %c0_7 = arith.constant 0 : index
    %8 = vector.load %arg4[%c0_6, %c0_7] : memref<32x32xf32, #tpu.memory_space<vmem>>, vector<32x32xf32>
    %c0_8 = arith.constant 0 : index
    %c0_9 = arith.constant 0 : index
    %9 = vector.load %arg5[%c0_8, %c0_9] : memref<1x32xf32, #tpu.memory_space<vmem>>, vector<1x32xf32>
    %cst_10 = arith.constant dense<0.000000e+00> : vector<32x32xf32>
    %10 = tpu.matmul %7, %8, %cst_10 {dimension_numbers = #tpu.dot_dimension_numbers<[1], [0], [0], [1], [0, 0, 1, 1], [], []>} : vector<32x32xf32>, vector<32x32xf32>, vector<32x32xf32> -> vector<32x32xf32>
    %11 = vector.broadcast %9 : vector<1x32xf32> to vector<32x32xf32>
    %12 = arith.addf %10, %11 : vector<32x32xf32>
    %cst_11 = arith.constant 0.000000e+00 : f32
    %13 = vector.broadcast %cst_11 : f32 to vector<32x32xf32>
    %14 = arith.maximumf %12, %13 : vector<32x32xf32>
    %c0_12 = arith.constant 0 : index
    %c0_13 = arith.constant 0 : index
    %15 = vector.load %arg6[%c0_12, %c0_13] : memref<32x32xf32, #tpu.memory_space<vmem>>, vector<32x32xf32>
    %c0_14 = arith.constant 0 : index
    %c0_15 = arith.constant 0 : index
    %16 = vector.load %arg7[%c0_14, %c0_15] : memref<1x32xf32, #tpu.memory_space<vmem>>, vector<1x32xf32>
    %cst_16 = arith.constant dense<0.000000e+00> : vector<32x32xf32>
    %17 = tpu.matmul %14, %15, %cst_16 {dimension_numbers = #tpu.dot_dimension_numbers<[1], [0], [0], [1], [0, 0, 1, 1], [], []>} : vector<32x32xf32>, vector<32x32xf32>, vector<32x32xf32> -> vector<32x32xf32>
    %18 = vector.broadcast %16 : vector<1x32xf32> to vector<32x32xf32>
    %19 = arith.addf %17, %18 : vector<32x32xf32>
    %c0_17 = arith.constant 0 : index
    %c0_18 = arith.constant 0 : index
    %20 = vector.load %arg8[%c0_17, %c0_18] : memref<1x32xf32, #tpu.memory_space<vmem>>, vector<1x32xf32>
    %c0_19 = arith.constant 0 : index
    %c0_20 = arith.constant 0 : index
    %21 = vector.load %arg9[%c0_19, %c0_20] : memref<1x32xf32, #tpu.memory_space<vmem>>, vector<1x32xf32>
    %cst_21 = arith.constant dense<0.000000e+00> : vector<32xf32>
    %22 = vector.multi_reduction <add>, %19, %cst_21 [1] : vector<32x32xf32> to vector<32xf32>
    %23 = vector.shape_cast %22 : vector<32xf32> to vector<32x1xf32>
    %cst_22 = arith.constant 3.200000e+01 : f32
    %24 = vector.broadcast %cst_22 : f32 to vector<32x1xf32>
    %25 = arith.divf %23, %24 : vector<32x1xf32>
    %26 = vector.broadcast %25 : vector<32x1xf32> to vector<32x32xf32>
    %27 = arith.subf %19, %26 : vector<32x32xf32>
    %28 = arith.mulf %27, %27 : vector<32x32xf32>
    %cst_23 = arith.constant dense<0.000000e+00> : vector<32xf32>
    %29 = vector.multi_reduction <add>, %28, %cst_23 [1] : vector<32x32xf32> to vector<32xf32>
    %30 = vector.shape_cast %29 : vector<32xf32> to vector<32x1xf32>
    %cst_24 = arith.constant 3.200000e+01 : f32
    %31 = vector.broadcast %cst_24 : f32 to vector<32x1xf32>
    %32 = arith.divf %30, %31 : vector<32x1xf32>
    %33 = vector.broadcast %25 : vector<32x1xf32> to vector<32x32xf32>
    %34 = arith.subf %19, %33 : vector<32x32xf32>
    %cst_25 = arith.constant 9.99999974E-6 : f32
    %35 = vector.broadcast %cst_25 : f32 to vector<32x1xf32>
    %36 = arith.addf %32, %35 : vector<32x1xf32>
    %37 = math.rsqrt %36 : vector<32x1xf32>
    %38 = vector.broadcast %37 : vector<32x1xf32> to vector<32x32xf32>
    %39 = arith.mulf %34, %38 : vector<32x32xf32>
    %40 = vector.broadcast %20 : vector<1x32xf32> to vector<32x32xf32>
    %41 = arith.mulf %39, %40 : vector<32x32xf32>
    %42 = vector.broadcast %21 : vector<1x32xf32> to vector<32x32xf32>
    %43 = arith.addf %41, %42 : vector<32x32xf32>
    %c0_26 = arith.constant 0 : index
    %c0_27 = arith.constant 0 : index
    %44 = vector.load %arg10[%c0_26, %c0_27] : memref<32x32xf32, #tpu.memory_space<vmem>>, vector<32x32xf32>
    tpu.vector_store %arg10[%c0_26, %c0_27], %43 {strides = array<i32>} : memref<32x32xf32, #tpu.memory_space<vmem>>, vector<32x32xf32>,
    return
  }
  func.func @transform_0(%arg0: i32) -> (i32, i32) {
    %c0_i32 = arith.constant 0 : i32
    %c0_i32_0 = arith.constant 0 : i32
    return %arg0, %c0_i32 : i32, i32
  }
  func.func @transform_1(%arg0: i32) -> (i32, i32) {
    %c0_i32 = arith.constant 0 : i32
    %c0_i32_0 = arith.constant 0 : i32
    %c0_i32_1 = arith.constant 0 : i32
    return %c0_i32, %c0_i32_0 : i32, i32
  }
  func.func @transform_2(%arg0: i32) -> (i32, i32) {
    %c0_i32 = arith.constant 0 : i32
    %c0_i32_0 = arith.constant 0 : i32
    %c0_i32_1 = arith.constant 0 : i32
    return %c0_i32, %c0_i32_0 : i32, i32
  }
  func.func @transform_3(%arg0: i32) -> (i32, i32) {
    %c0_i32 = arith.constant 0 : i32
    %c0_i32_0 = arith.constant 0 : i32
    %c0_i32_1 = arith.constant 0 : i32
    return %c0_i32, %c0_i32_0 : i32, i32
  }
  func.func @transform_4(%arg0: i32) -> (i32, i32) {
    %c0_i32 = arith.constant 0 : i32
    %c0_i32_0 = arith.constant 0 : i32
    %c0_i32_1 = arith.constant 0 : i32
    return %c0_i32, %c0_i32_0 : i32, i32
  }
  func.func @transform_5(%arg0: i32) -> (i32, i32) {
    %c0_i32 = arith.constant 0 : i32
    %c0_i32_0 = arith.constant 0 : i32
    %c0_i32_1 = arith.constant 0 : i32
    return %c0_i32, %c0_i32_0 : i32, i32
  }
  func.func @transform_6(%arg0: i32) -> (i32, i32) {
    %c0_i32 = arith.constant 0 : i32
    %c0_i32_0 = arith.constant 0 : i32
    %c0_i32_1 = arith.constant 0 : i32
    return %c0_i32, %c0_i32_0 : i32, i32
  }
  func.func @transform_7(%arg0: i32) -> (i32, i32) {
    %c0_i32 = arith.constant 0 : i32
    %c0_i32_0 = arith.constant 0 : i32
    %c0_i32_1 = arith.constant 0 : i32
    return %c0_i32, %c0_i32_0 : i32, i32
  }
  func.func @transform_8(%arg0: i32) -> (i32, i32) {
    %c0_i32 = arith.constant 0 : i32
    %c0_i32_0 = arith.constant 0 : i32
    %c0_i32_1 = arith.constant 0 : i32
    return %c0_i32, %c0_i32_0 : i32, i32
  }
  func.func @transform_9(%arg0: i32) -> (i32, i32) {
    %c0_i32 = arith.constant 0 : i32
    %c0_i32_0 = arith.constant 0 : i32
    return %arg0, %c0_i32 : i32, i32
  }
}

module attributes {stable_mosaic.version = 11 : i64} {
  func.func @kernel(%arg0: i32, %arg1: memref<64x32xf32, #tpu.memory_space<vmem>>, %arg2: memref<64x32xf32, #tpu.memory_space<vmem>>, %arg3: memref<64x32xf32, #tpu.memory_space<vmem>>, %arg4: memref<32x32xf32, #tpu.memory_space<vmem>>, %arg5: memref<32x32xf32, #tpu.memory_space<vmem>>, %arg6: memref<32x32xf32, #tpu.memory_space<vmem>>, %arg7: memref<1x32xf32, #tpu.memory_space<vmem>>, %arg8: memref<32x32xf32, #tpu.memory_space<vmem>>, %arg9: memref<1x32xf32, #tpu.memory_space<vmem>>, %arg10: memref<32x32xf32, #tpu.memory_space<vmem>>, %arg11: memref<1x32xf32, #tpu.memory_space<vmem>>, %arg12: memref<1x32xf32, #tpu.memory_space<vmem>>, %arg13: memref<1x32xf32, #tpu.memory_space<vmem>>, %arg14: memref<64x32xf32, #tpu.memory_space<vmem>>) attributes {dimension_semantics = [#tpu.dimension_semantics<parallel>], iteration_bounds = array<i64: 1>, scalar_prefetch = 0 : i64, scratch_operands = 0 : i64, tpu.core_type = #tpu.core_type<tc>, window_params = [{transform_indices = @transform_0, window_bounds = array<i64: 64, 32>}, {transform_indices = @transform_1, window_bounds = array<i64: 64, 32>}, {transform_indices = @transform_2, window_bounds = array<i64: 64, 32>}, {pipeline_mode = #tpu.pipeline_mode<synchronous>, transform_indices = @transform_3, window_bounds = array<i64: 32, 32>}, {pipeline_mode = #tpu.pipeline_mode<synchronous>, transform_indices = @transform_4, window_bounds = array<i64: 32, 32>}, {pipeline_mode = #tpu.pipeline_mode<synchronous>, transform_indices = @transform_5, window_bounds = array<i64: 32, 32>}, {pipeline_mode = #tpu.pipeline_mode<synchronous>, transform_indices = @transform_6, window_bounds = array<i64: 1, 32>}, {pipeline_mode = #tpu.pipeline_mode<synchronous>, transform_indices = @transform_7, window_bounds = array<i64: 32, 32>}, {pipeline_mode = #tpu.pipeline_mode<synchronous>, transform_indices = @transform_8, window_bounds = array<i64: 1, 32>}, {pipeline_mode = #tpu.pipeline_mode<synchronous>, transform_indices = @transform_9, window_bounds = array<i64: 32, 32>}, {pipeline_mode = #tpu.pipeline_mode<synchronous>, transform_indices = @transform_10, window_bounds = array<i64: 1, 32>}, {pipeline_mode = #tpu.pipeline_mode<synchronous>, transform_indices = @transform_11, window_bounds = array<i64: 1, 32>}, {pipeline_mode = #tpu.pipeline_mode<synchronous>, transform_indices = @transform_12, window_bounds = array<i64: 1, 32>}, {transform_indices = @transform_13, window_bounds = array<i64: 64, 32>}]} {
    %c0 = arith.constant 0 : index
    %c0_0 = arith.constant 0 : index
    %0 = vector.load %arg1[%c0, %c0_0] : memref<64x32xf32, #tpu.memory_space<vmem>>, vector<64x32xf32>
    %c0_1 = arith.constant 0 : index
    %c0_2 = arith.constant 0 : index
    %1 = vector.load %arg2[%c0_1, %c0_2] : memref<64x32xf32, #tpu.memory_space<vmem>>, vector<64x32xf32>
    %c0_3 = arith.constant 0 : index
    %c0_4 = arith.constant 0 : index
    %2 = vector.load %arg3[%c0_3, %c0_4] : memref<64x32xf32, #tpu.memory_space<vmem>>, vector<64x32xf32>
    %c0_5 = arith.constant 0 : index
    %c0_6 = arith.constant 0 : index
    %3 = vector.load %arg4[%c0_5, %c0_6] : memref<32x32xf32, #tpu.memory_space<vmem>>, vector<32x32xf32>
    %cst = arith.constant dense<0.000000e+00> : vector<64x32xf32>
    %4 = tpu.matmul %0, %3, %cst {dimension_numbers = #tpu.dot_dimension_numbers<[1], [0], [0], [1], [0, 0, 1, 1], [], []>} : vector<64x32xf32>, vector<32x32xf32>, vector<64x32xf32> -> vector<64x32xf32>
    %c0_7 = arith.constant 0 : index
    %c0_8 = arith.constant 0 : index
    %5 = vector.load %arg5[%c0_7, %c0_8] : memref<32x32xf32, #tpu.memory_space<vmem>>, vector<32x32xf32>
    %cst_9 = arith.constant dense<0.000000e+00> : vector<64x32xf32>
    %6 = tpu.matmul %1, %5, %cst_9 {dimension_numbers = #tpu.dot_dimension_numbers<[1], [0], [0], [1], [0, 0, 1, 1], [], []>} : vector<64x32xf32>, vector<32x32xf32>, vector<64x32xf32> -> vector<64x32xf32>
    %7 = arith.addf %4, %6 : vector<64x32xf32>
    %c0_10 = arith.constant 0 : index
    %c0_11 = arith.constant 0 : index
    %8 = vector.load %arg6[%c0_10, %c0_11] : memref<32x32xf32, #tpu.memory_space<vmem>>, vector<32x32xf32>
    %cst_12 = arith.constant dense<0.000000e+00> : vector<64x32xf32>
    %9 = tpu.matmul %2, %8, %cst_12 {dimension_numbers = #tpu.dot_dimension_numbers<[1], [0], [0], [1], [0, 0, 1, 1], [], []>} : vector<64x32xf32>, vector<32x32xf32>, vector<64x32xf32> -> vector<64x32xf32>
    %10 = arith.addf %7, %9 : vector<64x32xf32>
    %c0_13 = arith.constant 0 : index
    %c0_14 = arith.constant 0 : index
    %11 = vector.load %arg7[%c0_13, %c0_14] : memref<1x32xf32, #tpu.memory_space<vmem>>, vector<1x32xf32>
    %12 = vector.broadcast %11 : vector<1x32xf32> to vector<64x32xf32>
    %13 = arith.addf %10, %12 : vector<64x32xf32>
    %cst_15 = arith.constant 0.000000e+00 : f32
    %14 = vector.broadcast %cst_15 : f32 to vector<64x32xf32>
    %15 = arith.maximumf %13, %14 : vector<64x32xf32>
    %c0_16 = arith.constant 0 : index
    %c0_17 = arith.constant 0 : index
    %16 = vector.load %arg8[%c0_16, %c0_17] : memref<32x32xf32, #tpu.memory_space<vmem>>, vector<32x32xf32>
    %c0_18 = arith.constant 0 : index
    %c0_19 = arith.constant 0 : index
    %17 = vector.load %arg9[%c0_18, %c0_19] : memref<1x32xf32, #tpu.memory_space<vmem>>, vector<1x32xf32>
    %cst_20 = arith.constant dense<0.000000e+00> : vector<64x32xf32>
    %18 = tpu.matmul %15, %16, %cst_20 {dimension_numbers = #tpu.dot_dimension_numbers<[1], [0], [0], [1], [0, 0, 1, 1], [], []>} : vector<64x32xf32>, vector<32x32xf32>, vector<64x32xf32> -> vector<64x32xf32>
    %19 = vector.broadcast %17 : vector<1x32xf32> to vector<64x32xf32>
    %20 = arith.addf %18, %19 : vector<64x32xf32>
    %cst_21 = arith.constant 0.000000e+00 : f32
    %21 = vector.broadcast %cst_21 : f32 to vector<64x32xf32>
    %22 = arith.maximumf %20, %21 : vector<64x32xf32>
    %c0_22 = arith.constant 0 : index
    %c0_23 = arith.constant 0 : index
    %23 = vector.load %arg10[%c0_22, %c0_23] : memref<32x32xf32, #tpu.memory_space<vmem>>, vector<32x32xf32>
    %c0_24 = arith.constant 0 : index
    %c0_25 = arith.constant 0 : index
    %24 = vector.load %arg11[%c0_24, %c0_25] : memref<1x32xf32, #tpu.memory_space<vmem>>, vector<1x32xf32>
    %cst_26 = arith.constant dense<0.000000e+00> : vector<64x32xf32>
    %25 = tpu.matmul %22, %23, %cst_26 {dimension_numbers = #tpu.dot_dimension_numbers<[1], [0], [0], [1], [0, 0, 1, 1], [], []>} : vector<64x32xf32>, vector<32x32xf32>, vector<64x32xf32> -> vector<64x32xf32>
    %26 = vector.broadcast %24 : vector<1x32xf32> to vector<64x32xf32>
    %27 = arith.addf %25, %26 : vector<64x32xf32>
    %c0_27 = arith.constant 0 : index
    %c0_28 = arith.constant 0 : index
    %28 = vector.load %arg12[%c0_27, %c0_28] : memref<1x32xf32, #tpu.memory_space<vmem>>, vector<1x32xf32>
    %c0_29 = arith.constant 0 : index
    %c0_30 = arith.constant 0 : index
    %29 = vector.load %arg13[%c0_29, %c0_30] : memref<1x32xf32, #tpu.memory_space<vmem>>, vector<1x32xf32>
    %cst_31 = arith.constant dense<0.000000e+00> : vector<64xf32>
    %30 = vector.multi_reduction <add>, %27, %cst_31 [1] : vector<64x32xf32> to vector<64xf32>
    %31 = vector.shape_cast %30 : vector<64xf32> to vector<64x1xf32>
    %cst_32 = arith.constant 3.200000e+01 : f32
    %32 = vector.broadcast %cst_32 : f32 to vector<64x1xf32>
    %33 = arith.divf %31, %32 : vector<64x1xf32>
    %34 = vector.broadcast %33 : vector<64x1xf32> to vector<64x32xf32>
    %35 = arith.subf %27, %34 : vector<64x32xf32>
    %36 = arith.mulf %35, %35 : vector<64x32xf32>
    %cst_33 = arith.constant dense<0.000000e+00> : vector<64xf32>
    %37 = vector.multi_reduction <add>, %36, %cst_33 [1] : vector<64x32xf32> to vector<64xf32>
    %38 = vector.shape_cast %37 : vector<64xf32> to vector<64x1xf32>
    %cst_34 = arith.constant 3.200000e+01 : f32
    %39 = vector.broadcast %cst_34 : f32 to vector<64x1xf32>
    %40 = arith.divf %38, %39 : vector<64x1xf32>
    %41 = vector.broadcast %33 : vector<64x1xf32> to vector<64x32xf32>
    %42 = arith.subf %27, %41 : vector<64x32xf32>
    %cst_35 = arith.constant 9.99999974E-6 : f32
    %43 = vector.broadcast %cst_35 : f32 to vector<64x1xf32>
    %44 = arith.addf %40, %43 : vector<64x1xf32>
    %45 = math.rsqrt %44 : vector<64x1xf32>
    %46 = vector.broadcast %45 : vector<64x1xf32> to vector<64x32xf32>
    %47 = arith.mulf %42, %46 : vector<64x32xf32>
    %48 = vector.broadcast %28 : vector<1x32xf32> to vector<64x32xf32>
    %49 = arith.mulf %47, %48 : vector<64x32xf32>
    %50 = vector.broadcast %29 : vector<1x32xf32> to vector<64x32xf32>
    %51 = arith.addf %49, %50 : vector<64x32xf32>
    %c0_36 = arith.constant 0 : index
    %c0_37 = arith.constant 0 : index
    %52 = vector.load %arg14[%c0_36, %c0_37] : memref<64x32xf32, #tpu.memory_space<vmem>>, vector<64x32xf32>
    tpu.vector_store %arg14[%c0_36, %c0_37], %51 {strides = array<i32>} : memref<64x32xf32, #tpu.memory_space<vmem>>, vector<64x32xf32>,
    return
  }
  func.func @transform_0(%arg0: i32) -> (i32, i32) {
    %c0_i32 = arith.constant 0 : i32
    %c0_i32_0 = arith.constant 0 : i32
    return %arg0, %c0_i32 : i32, i32
  }
  func.func @transform_1(%arg0: i32) -> (i32, i32) {
    %c0_i32 = arith.constant 0 : i32
    %c0_i32_0 = arith.constant 0 : i32
    return %arg0, %c0_i32 : i32, i32
  }
  func.func @transform_2(%arg0: i32) -> (i32, i32) {
    %c0_i32 = arith.constant 0 : i32
    %c0_i32_0 = arith.constant 0 : i32
    return %arg0, %c0_i32 : i32, i32
  }
  func.func @transform_3(%arg0: i32) -> (i32, i32) {
    %c0_i32 = arith.constant 0 : i32
    %c0_i32_0 = arith.constant 0 : i32
    %c0_i32_1 = arith.constant 0 : i32
    return %c0_i32, %c0_i32_0 : i32, i32
  }
  func.func @transform_4(%arg0: i32) -> (i32, i32) {
    %c0_i32 = arith.constant 0 : i32
    %c0_i32_0 = arith.constant 0 : i32
    %c0_i32_1 = arith.constant 0 : i32
    return %c0_i32, %c0_i32_0 : i32, i32
  }
  func.func @transform_5(%arg0: i32) -> (i32, i32) {
    %c0_i32 = arith.constant 0 : i32
    %c0_i32_0 = arith.constant 0 : i32
    %c0_i32_1 = arith.constant 0 : i32
    return %c0_i32, %c0_i32_0 : i32, i32
  }
  func.func @transform_6(%arg0: i32) -> (i32, i32) {
    %c0_i32 = arith.constant 0 : i32
    %c0_i32_0 = arith.constant 0 : i32
    %c0_i32_1 = arith.constant 0 : i32
    return %c0_i32, %c0_i32_0 : i32, i32
  }
  func.func @transform_7(%arg0: i32) -> (i32, i32) {
    %c0_i32 = arith.constant 0 : i32
    %c0_i32_0 = arith.constant 0 : i32
    %c0_i32_1 = arith.constant 0 : i32
    return %c0_i32, %c0_i32_0 : i32, i32
  }
  func.func @transform_8(%arg0: i32) -> (i32, i32) {
    %c0_i32 = arith.constant 0 : i32
    %c0_i32_0 = arith.constant 0 : i32
    %c0_i32_1 = arith.constant 0 : i32
    return %c0_i32, %c0_i32_0 : i32, i32
  }
  func.func @transform_9(%arg0: i32) -> (i32, i32) {
    %c0_i32 = arith.constant 0 : i32
    %c0_i32_0 = arith.constant 0 : i32
    %c0_i32_1 = arith.constant 0 : i32
    return %c0_i32, %c0_i32_0 : i32, i32
  }
  func.func @transform_10(%arg0: i32) -> (i32, i32) {
    %c0_i32 = arith.constant 0 : i32
    %c0_i32_0 = arith.constant 0 : i32
    %c0_i32_1 = arith.constant 0 : i32
    return %c0_i32, %c0_i32_0 : i32, i32
  }
  func.func @transform_11(%arg0: i32) -> (i32, i32) {
    %c0_i32 = arith.constant 0 : i32
    %c0_i32_0 = arith.constant 0 : i32
    %c0_i32_1 = arith.constant 0 : i32
    return %c0_i32, %c0_i32_0 : i32, i32
  }
  func.func @transform_12(%arg0: i32) -> (i32, i32) {
    %c0_i32 = arith.constant 0 : i32
    %c0_i32_0 = arith.constant 0 : i32
    %c0_i32_1 = arith.constant 0 : i32
    return %c0_i32, %c0_i32_0 : i32, i32
  }
  func.func @transform_13(%arg0: i32) -> (i32, i32) {
    %c0_i32 = arith.constant 0 : i32
    %c0_i32_0 = arith.constant 0 : i32
    return %arg0, %c0_i32 : i32, i32
  }
}

module attributes {stable_mosaic.version = 11 : i64} {
  func.func @kernel(%arg0: i32, %arg1: memref<64x8xf32, #tpu.memory_space<vmem>>, %arg2: memref<8x32xf32, #tpu.memory_space<vmem>>, %arg3: memref<1x32xf32, #tpu.memory_space<vmem>>, %arg4: memref<32x32xf32, #tpu.memory_space<vmem>>, %arg5: memref<1x32xf32, #tpu.memory_space<vmem>>, %arg6: memref<32x32xf32, #tpu.memory_space<vmem>>, %arg7: memref<1x32xf32, #tpu.memory_space<vmem>>, %arg8: memref<1x32xf32, #tpu.memory_space<vmem>>, %arg9: memref<1x32xf32, #tpu.memory_space<vmem>>, %arg10: memref<64x32xf32, #tpu.memory_space<vmem>>) attributes {dimension_semantics = [#tpu.dimension_semantics<parallel>], iteration_bounds = array<i64: 1>, scalar_prefetch = 0 : i64, scratch_operands = 0 : i64, tpu.core_type = #tpu.core_type<tc>, window_params = [{transform_indices = @transform_0, window_bounds = array<i64: 64, 8>}, {pipeline_mode = #tpu.pipeline_mode<synchronous>, transform_indices = @transform_1, window_bounds = array<i64: 8, 32>}, {pipeline_mode = #tpu.pipeline_mode<synchronous>, transform_indices = @transform_2, window_bounds = array<i64: 1, 32>}, {pipeline_mode = #tpu.pipeline_mode<synchronous>, transform_indices = @transform_3, window_bounds = array<i64: 32, 32>}, {pipeline_mode = #tpu.pipeline_mode<synchronous>, transform_indices = @transform_4, window_bounds = array<i64: 1, 32>}, {pipeline_mode = #tpu.pipeline_mode<synchronous>, transform_indices = @transform_5, window_bounds = array<i64: 32, 32>}, {pipeline_mode = #tpu.pipeline_mode<synchronous>, transform_indices = @transform_6, window_bounds = array<i64: 1, 32>}, {pipeline_mode = #tpu.pipeline_mode<synchronous>, transform_indices = @transform_7, window_bounds = array<i64: 1, 32>}, {pipeline_mode = #tpu.pipeline_mode<synchronous>, transform_indices = @transform_8, window_bounds = array<i64: 1, 32>}, {transform_indices = @transform_9, window_bounds = array<i64: 64, 32>}]} {
    %c0 = arith.constant 0 : index
    %c0_0 = arith.constant 0 : index
    %0 = vector.load %arg1[%c0, %c0_0] : memref<64x8xf32, #tpu.memory_space<vmem>>, vector<64x8xf32>
    %c0_1 = arith.constant 0 : index
    %c0_2 = arith.constant 0 : index
    %1 = vector.load %arg2[%c0_1, %c0_2] : memref<8x32xf32, #tpu.memory_space<vmem>>, vector<8x32xf32>
    %cst = arith.constant dense<0.000000e+00> : vector<64x32xf32>
    %2 = tpu.matmul %0, %1, %cst {dimension_numbers = #tpu.dot_dimension_numbers<[1], [0], [0], [1], [0, 0, 1, 1], [], []>} : vector<64x8xf32>, vector<8x32xf32>, vector<64x32xf32> -> vector<64x32xf32>
    %c0_3 = arith.constant 0 : index
    %c0_4 = arith.constant 0 : index
    %3 = vector.load %arg3[%c0_3, %c0_4] : memref<1x32xf32, #tpu.memory_space<vmem>>, vector<1x32xf32>
    %4 = vector.broadcast %3 : vector<1x32xf32> to vector<64x32xf32>
    %5 = arith.addf %2, %4 : vector<64x32xf32>
    %cst_5 = arith.constant 0.000000e+00 : f32
    %6 = vector.broadcast %cst_5 : f32 to vector<64x32xf32>
    %7 = arith.maximumf %5, %6 : vector<64x32xf32>
    %c0_6 = arith.constant 0 : index
    %c0_7 = arith.constant 0 : index
    %8 = vector.load %arg4[%c0_6, %c0_7] : memref<32x32xf32, #tpu.memory_space<vmem>>, vector<32x32xf32>
    %c0_8 = arith.constant 0 : index
    %c0_9 = arith.constant 0 : index
    %9 = vector.load %arg5[%c0_8, %c0_9] : memref<1x32xf32, #tpu.memory_space<vmem>>, vector<1x32xf32>
    %cst_10 = arith.constant dense<0.000000e+00> : vector<64x32xf32>
    %10 = tpu.matmul %7, %8, %cst_10 {dimension_numbers = #tpu.dot_dimension_numbers<[1], [0], [0], [1], [0, 0, 1, 1], [], []>} : vector<64x32xf32>, vector<32x32xf32>, vector<64x32xf32> -> vector<64x32xf32>
    %11 = vector.broadcast %9 : vector<1x32xf32> to vector<64x32xf32>
    %12 = arith.addf %10, %11 : vector<64x32xf32>
    %cst_11 = arith.constant 0.000000e+00 : f32
    %13 = vector.broadcast %cst_11 : f32 to vector<64x32xf32>
    %14 = arith.maximumf %12, %13 : vector<64x32xf32>
    %c0_12 = arith.constant 0 : index
    %c0_13 = arith.constant 0 : index
    %15 = vector.load %arg6[%c0_12, %c0_13] : memref<32x32xf32, #tpu.memory_space<vmem>>, vector<32x32xf32>
    %c0_14 = arith.constant 0 : index
    %c0_15 = arith.constant 0 : index
    %16 = vector.load %arg7[%c0_14, %c0_15] : memref<1x32xf32, #tpu.memory_space<vmem>>, vector<1x32xf32>
    %cst_16 = arith.constant dense<0.000000e+00> : vector<64x32xf32>
    %17 = tpu.matmul %14, %15, %cst_16 {dimension_numbers = #tpu.dot_dimension_numbers<[1], [0], [0], [1], [0, 0, 1, 1], [], []>} : vector<64x32xf32>, vector<32x32xf32>, vector<64x32xf32> -> vector<64x32xf32>
    %18 = vector.broadcast %16 : vector<1x32xf32> to vector<64x32xf32>
    %19 = arith.addf %17, %18 : vector<64x32xf32>
    %c0_17 = arith.constant 0 : index
    %c0_18 = arith.constant 0 : index
    %20 = vector.load %arg8[%c0_17, %c0_18] : memref<1x32xf32, #tpu.memory_space<vmem>>, vector<1x32xf32>
    %c0_19 = arith.constant 0 : index
    %c0_20 = arith.constant 0 : index
    %21 = vector.load %arg9[%c0_19, %c0_20] : memref<1x32xf32, #tpu.memory_space<vmem>>, vector<1x32xf32>
    %cst_21 = arith.constant dense<0.000000e+00> : vector<64xf32>
    %22 = vector.multi_reduction <add>, %19, %cst_21 [1] : vector<64x32xf32> to vector<64xf32>
    %23 = vector.shape_cast %22 : vector<64xf32> to vector<64x1xf32>
    %cst_22 = arith.constant 3.200000e+01 : f32
    %24 = vector.broadcast %cst_22 : f32 to vector<64x1xf32>
    %25 = arith.divf %23, %24 : vector<64x1xf32>
    %26 = vector.broadcast %25 : vector<64x1xf32> to vector<64x32xf32>
    %27 = arith.subf %19, %26 : vector<64x32xf32>
    %28 = arith.mulf %27, %27 : vector<64x32xf32>
    %cst_23 = arith.constant dense<0.000000e+00> : vector<64xf32>
    %29 = vector.multi_reduction <add>, %28, %cst_23 [1] : vector<64x32xf32> to vector<64xf32>
    %30 = vector.shape_cast %29 : vector<64xf32> to vector<64x1xf32>
    %cst_24 = arith.constant 3.200000e+01 : f32
    %31 = vector.broadcast %cst_24 : f32 to vector<64x1xf32>
    %32 = arith.divf %30, %31 : vector<64x1xf32>
    %33 = vector.broadcast %25 : vector<64x1xf32> to vector<64x32xf32>
    %34 = arith.subf %19, %33 : vector<64x32xf32>
    %cst_25 = arith.constant 9.99999974E-6 : f32
    %35 = vector.broadcast %cst_25 : f32 to vector<64x1xf32>
    %36 = arith.addf %32, %35 : vector<64x1xf32>
    %37 = math.rsqrt %36 : vector<64x1xf32>
    %38 = vector.broadcast %37 : vector<64x1xf32> to vector<64x32xf32>
    %39 = arith.mulf %34, %38 : vector<64x32xf32>
    %40 = vector.broadcast %20 : vector<1x32xf32> to vector<64x32xf32>
    %41 = arith.mulf %39, %40 : vector<64x32xf32>
    %42 = vector.broadcast %21 : vector<1x32xf32> to vector<64x32xf32>
    %43 = arith.addf %41, %42 : vector<64x32xf32>
    %c0_26 = arith.constant 0 : index
    %c0_27 = arith.constant 0 : index
    %44 = vector.load %arg10[%c0_26, %c0_27] : memref<64x32xf32, #tpu.memory_space<vmem>>, vector<64x32xf32>
    tpu.vector_store %arg10[%c0_26, %c0_27], %43 {strides = array<i32>} : memref<64x32xf32, #tpu.memory_space<vmem>>, vector<64x32xf32>,
    return
  }
  func.func @transform_0(%arg0: i32) -> (i32, i32) {
    %c0_i32 = arith.constant 0 : i32
    %c0_i32_0 = arith.constant 0 : i32
    return %arg0, %c0_i32 : i32, i32
  }
  func.func @transform_1(%arg0: i32) -> (i32, i32) {
    %c0_i32 = arith.constant 0 : i32
    %c0_i32_0 = arith.constant 0 : i32
    %c0_i32_1 = arith.constant 0 : i32
    return %c0_i32, %c0_i32_0 : i32, i32
  }
  func.func @transform_2(%arg0: i32) -> (i32, i32) {
    %c0_i32 = arith.constant 0 : i32
    %c0_i32_0 = arith.constant 0 : i32
    %c0_i32_1 = arith.constant 0 : i32
    return %c0_i32, %c0_i32_0 : i32, i32
  }
  func.func @transform_3(%arg0: i32) -> (i32, i32) {
    %c0_i32 = arith.constant 0 : i32
    %c0_i32_0 = arith.constant 0 : i32
    %c0_i32_1 = arith.constant 0 : i32
    return %c0_i32, %c0_i32_0 : i32, i32
  }
  func.func @transform_4(%arg0: i32) -> (i32, i32) {
    %c0_i32 = arith.constant 0 : i32
    %c0_i32_0 = arith.constant 0 : i32
    %c0_i32_1 = arith.constant 0 : i32
    return %c0_i32, %c0_i32_0 : i32, i32
  }
  func.func @transform_5(%arg0: i32) -> (i32, i32) {
    %c0_i32 = arith.constant 0 : i32
    %c0_i32_0 = arith.constant 0 : i32
    %c0_i32_1 = arith.constant 0 : i32
    return %c0_i32, %c0_i32_0 : i32, i32
  }
  func.func @transform_6(%arg0: i32) -> (i32, i32) {
    %c0_i32 = arith.constant 0 : i32
    %c0_i32_0 = arith.constant 0 : i32
    %c0_i32_1 = arith.constant 0 : i32
    return %c0_i32, %c0_i32_0 : i32, i32
  }
  func.func @transform_7(%arg0: i32) -> (i32, i32) {
    %c0_i32 = arith.constant 0 : i32
    %c0_i32_0 = arith.constant 0 : i32
    %c0_i32_1 = arith.constant 0 : i32
    return %c0_i32, %c0_i32_0 : i32, i32
  }
  func.func @transform_8(%arg0: i32) -> (i32, i32) {
    %c0_i32 = arith.constant 0 : i32
    %c0_i32_0 = arith.constant 0 : i32
    %c0_i32_1 = arith.constant 0 : i32
    return %c0_i32, %c0_i32_0 : i32, i32
  }
  func.func @transform_9(%arg0: i32) -> (i32, i32) {
    %c0_i32 = arith.constant 0 : i32
    %c0_i32_0 = arith.constant 0 : i32
    return %arg0, %c0_i32 : i32, i32
  }
}

module attributes {stable_mosaic.version = 11 : i64} {
  func.func @kernel(%arg0: i32, %arg1: i32, %arg2: memref<1x128xi32, #tpu.memory_space<vmem>>, %arg3: memref<128x32xf32, #tpu.memory_space<vmem>>, %arg4: memref<32x32xf32, #tpu.memory_space<vmem>>, %arg5: memref<32x32xf32, #tpu.memory_space<vmem>>, %arg6: memref<32x32xf32, #tpu.memory_space<vmem>>, %arg7: memref<1x32xf32, #tpu.memory_space<vmem>>, %arg8: memref<32x32xf32, #tpu.memory_space<vmem>>, %arg9: memref<1x32xf32, #tpu.memory_space<vmem>>, %arg10: memref<32x32xf32, #tpu.memory_space<vmem>>, %arg11: memref<1x32xf32, #tpu.memory_space<vmem>>, %arg12: memref<1x32xf32, #tpu.memory_space<vmem>>, %arg13: memref<1x32xf32, #tpu.memory_space<vmem>>, %arg14: memref<32x32xf32, #tpu.memory_space<vmem>>, %arg15: memref<32x32xf32, #tpu.memory_space<vmem>>) attributes {dimension_semantics = [#tpu.dimension_semantics<parallel>, #tpu.dimension_semantics<arbitrary>], iteration_bounds = array<i64: 1, 1>, scalar_prefetch = 0 : i64, scratch_operands = 1 : i64, tpu.core_type = #tpu.core_type<tc>, window_params = [{transform_indices = @transform_0, window_bounds = array<i64: 1, 128>}, {transform_indices = @transform_1, window_bounds = array<i64: 128, 32>}, {transform_indices = @transform_2, window_bounds = array<i64: 32, 32>}, {pipeline_mode = #tpu.pipeline_mode<synchronous>, transform_indices = @transform_3, window_bounds = array<i64: 32, 32>}, {pipeline_mode = #tpu.pipeline_mode<synchronous>, transform_indices = @transform_4, window_bounds = array<i64: 32, 32>}, {pipeline_mode = #tpu.pipeline_mode<synchronous>, transform_indices = @transform_5, window_bounds = array<i64: 1, 32>}, {pipeline_mode = #tpu.pipeline_mode<synchronous>, transform_indices = @transform_6, window_bounds = array<i64: 32, 32>}, {pipeline_mode = #tpu.pipeline_mode<synchronous>, transform_indices = @transform_7, window_bounds = array<i64: 1, 32>}, {pipeline_mode = #tpu.pipeline_mode<synchronous>, transform_indices = @transform_8, window_bounds = array<i64: 32, 32>}, {pipeline_mode = #tpu.pipeline_mode<synchronous>, transform_indices = @transform_9, window_bounds = array<i64: 1, 32>}, {pipeline_mode = #tpu.pipeline_mode<synchronous>, transform_indices = @transform_10, window_bounds = array<i64: 1, 32>}, {pipeline_mode = #tpu.pipeline_mode<synchronous>, transform_indices = @transform_11, window_bounds = array<i64: 1, 32>}, {transform_indices = @transform_12, window_bounds = array<i64: 32, 32>}]} {
    %c0_i32 = arith.constant 0 : i32
    %0 = arith.cmpi eq, %arg1, %c0_i32 : i32
    %1 = arith.extui %0 : i1 to i32
    %c0_i32_0 = arith.constant 0 : i32
    %2 = arith.cmpi ne, %1, %c0_i32_0 : i32
    scf.if %2 {
      %cst_10 = arith.constant 0.000000e+00 : f32
      %22 = vector.broadcast %cst_10 : f32 to vector<32x32xf32>
      %c0_11 = arith.constant 0 : index
      %c0_12 = arith.constant 0 : index
      %23 = vector.load %arg15[%c0_11, %c0_12] : memref<32x32xf32, #tpu.memory_space<vmem>>, vector<32x32xf32>
      tpu.vector_store %arg15[%c0_11, %c0_12], %22 {strides = array<i32>} : memref<32x32xf32, #tpu.memory_space<vmem>>, vector<32x32xf32>,
    } else {
    }
    %c0 = arith.constant 0 : index
    %c0_1 = arith.constant 0 : index
    %3 = vector.load %arg2[%c0, %c0_1] : memref<1x128xi32, #tpu.memory_space<vmem>>, vector<1x128xi32>
    %c0_2 = arith.constant 0 : index
    %c0_3 = arith.constant 0 : index
    %4 = vector.load %arg3[%c0_2, %c0_3] : memref<128x32xf32, #tpu.memory_space<vmem>>, vector<128x32xf32>
    %5 = arith.truncf %4 : vector<128x32xf32> to vector<128x32xbf16>
    %c32_i32 = arith.constant 32 : i32
    %6 = arith.muli %arg0, %c32_i32 : i32
    %7 = tpu.iota {dimensions = array<i32: 0>} : vector<32x128xi32>
    %8 = vector.broadcast %6 : i32 to vector<32x128xi32>
    %9 = arith.addi %8, %7 : vector<32x128xi32>
    %10 = vector.broadcast %3 : vector<1x128xi32> to vector<32x128xi32>
    %11 = arith.cmpi eq, %9, %10 : vector<32x128xi32>
    %12 = arith.extui %11 : vector<32x128xi1> to vector<32x128xi32>
    %13 = arith.sitofp %12 : vector<32x128xi32> to vector<32x128xf32>
    %14 = arith.truncf %13 : vector<32x128xf32> to vector<32x128xbf16>
    %c0_4 = arith.constant 0 : index
    %c0_5 = arith.constant 0 : index
    %15 = vector.load %arg15[%c0_4, %c0_5] : memref<32x32xf32, #tpu.memory_space<vmem>>, vector<32x32xf32>
    %cst = arith.constant dense<0.000000e+00> : vector<32x32xf32>
    %16 = tpu.matmul %14, %5, %cst {dimension_numbers = #tpu.dot_dimension_numbers<[1], [0], [0], [1], [0, 0, 1, 1], [], []>} : vector<32x128xbf16>, vector<128x32xbf16>, vector<32x32xf32> -> vector<32x32xf32>
    %17 = arith.addf %15, %16 : vector<32x32xf32>
    %c0_6 = arith.constant 0 : index
    %c0_7 = arith.constant 0 : index
    %18 = vector.load %arg15[%c0_6, %c0_7] : memref<32x32xf32, #tpu.memory_space<vmem>>, vector<32x32xf32>
    tpu.vector_store %arg15[%c0_6, %c0_7], %17 {strides = array<i32>} : memref<32x32xf32, #tpu.memory_space<vmem>>, vector<32x32xf32>,
    %c0_i32_8 = arith.constant 0 : i32
    %19 = arith.cmpi eq, %arg1, %c0_i32_8 : i32
    %20 = arith.extui %19 : i1 to i32
    %c0_i32_9 = arith.constant 0 : i32
    %21 = arith.cmpi ne, %20, %c0_i32_9 : i32
    scf.if %21 {
      %c0_10 = arith.constant 0 : index
      %c0_11 = arith.constant 0 : index
      %22 = vector.load %arg4[%c0_10, %c0_11] : memref<32x32xf32, #tpu.memory_space<vmem>>, vector<32x32xf32>
      %c0_12 = arith.constant 0 : index
      %c0_13 = arith.constant 0 : index
      %23 = vector.load %arg15[%c0_12, %c0_13] : memref<32x32xf32, #tpu.memory_space<vmem>>, vector<32x32xf32>
      %c0_14 = arith.constant 0 : index
      %c0_15 = arith.constant 0 : index
      %24 = vector.load %arg5[%c0_14, %c0_15] : memref<32x32xf32, #tpu.memory_space<vmem>>, vector<32x32xf32>
      %c0_16 = arith.constant 0 : index
      %c0_17 = arith.constant 0 : index
      %25 = vector.load %arg6[%c0_16, %c0_17] : memref<32x32xf32, #tpu.memory_space<vmem>>, vector<32x32xf32>
      %c0_18 = arith.constant 0 : index
      %c0_19 = arith.constant 0 : index
      %26 = vector.load %arg7[%c0_18, %c0_19] : memref<1x32xf32, #tpu.memory_space<vmem>>, vector<1x32xf32>
      %cst_20 = arith.constant dense<0.000000e+00> : vector<32x32xf32>
      %27 = tpu.matmul %23, %24, %cst_20 {dimension_numbers = #tpu.dot_dimension_numbers<[1], [0], [0], [1], [0, 0, 1, 1], [], []>} : vector<32x32xf32>, vector<32x32xf32>, vector<32x32xf32> -> vector<32x32xf32>
      %cst_21 = arith.constant dense<0.000000e+00> : vector<32x32xf32>
      %28 = tpu.matmul %22, %25, %cst_21 {dimension_numbers = #tpu.dot_dimension_numbers<[1], [0], [0], [1], [0, 0, 1, 1], [], []>} : vector<32x32xf32>, vector<32x32xf32>, vector<32x32xf32> -> vector<32x32xf32>
      %29 = arith.addf %27, %28 : vector<32x32xf32>
      %30 = vector.broadcast %26 : vector<1x32xf32> to vector<32x32xf32>
      %31 = arith.addf %29, %30 : vector<32x32xf32>
      %cst_22 = arith.constant 0.000000e+00 : f32
      %32 = vector.broadcast %cst_22 : f32 to vector<32x32xf32>
      %33 = arith.maximumf %31, %32 : vector<32x32xf32>
      %c0_23 = arith.constant 0 : index
      %c0_24 = arith.constant 0 : index
      %34 = vector.load %arg8[%c0_23, %c0_24] : memref<32x32xf32, #tpu.memory_space<vmem>>, vector<32x32xf32>
      %c0_25 = arith.constant 0 : index
      %c0_26 = arith.constant 0 : index
      %35 = vector.load %arg9[%c0_25, %c0_26] : memref<1x32xf32, #tpu.memory_space<vmem>>, vector<1x32xf32>
      %cst_27 = arith.constant dense<0.000000e+00> : vector<32x32xf32>
      %36 = tpu.matmul %33, %34, %cst_27 {dimension_numbers = #tpu.dot_dimension_numbers<[1], [0], [0], [1], [0, 0, 1, 1], [], []>} : vector<32x32xf32>, vector<32x32xf32>, vector<32x32xf32> -> vector<32x32xf32>
      %37 = vector.broadcast %35 : vector<1x32xf32> to vector<32x32xf32>
      %38 = arith.addf %36, %37 : vector<32x32xf32>
      %cst_28 = arith.constant 0.000000e+00 : f32
      %39 = vector.broadcast %cst_28 : f32 to vector<32x32xf32>
      %40 = arith.maximumf %38, %39 : vector<32x32xf32>
      %c0_29 = arith.constant 0 : index
      %c0_30 = arith.constant 0 : index
      %41 = vector.load %arg10[%c0_29, %c0_30] : memref<32x32xf32, #tpu.memory_space<vmem>>, vector<32x32xf32>
      %c0_31 = arith.constant 0 : index
      %c0_32 = arith.constant 0 : index
      %42 = vector.load %arg11[%c0_31, %c0_32] : memref<1x32xf32, #tpu.memory_space<vmem>>, vector<1x32xf32>
      %cst_33 = arith.constant dense<0.000000e+00> : vector<32x32xf32>
      %43 = tpu.matmul %40, %41, %cst_33 {dimension_numbers = #tpu.dot_dimension_numbers<[1], [0], [0], [1], [0, 0, 1, 1], [], []>} : vector<32x32xf32>, vector<32x32xf32>, vector<32x32xf32> -> vector<32x32xf32>
      %44 = vector.broadcast %42 : vector<1x32xf32> to vector<32x32xf32>
      %45 = arith.addf %43, %44 : vector<32x32xf32>
      %c0_34 = arith.constant 0 : index
      %c0_35 = arith.constant 0 : index
      %46 = vector.load %arg12[%c0_34, %c0_35] : memref<1x32xf32, #tpu.memory_space<vmem>>, vector<1x32xf32>
      %c0_36 = arith.constant 0 : index
      %c0_37 = arith.constant 0 : index
      %47 = vector.load %arg13[%c0_36, %c0_37] : memref<1x32xf32, #tpu.memory_space<vmem>>, vector<1x32xf32>
      %cst_38 = arith.constant dense<0.000000e+00> : vector<32xf32>
      %48 = vector.multi_reduction <add>, %45, %cst_38 [1] : vector<32x32xf32> to vector<32xf32>
      %49 = vector.shape_cast %48 : vector<32xf32> to vector<32x1xf32>
      %cst_39 = arith.constant 3.200000e+01 : f32
      %50 = vector.broadcast %cst_39 : f32 to vector<32x1xf32>
      %51 = arith.divf %49, %50 : vector<32x1xf32>
      %52 = vector.broadcast %51 : vector<32x1xf32> to vector<32x32xf32>
      %53 = arith.subf %45, %52 : vector<32x32xf32>
      %54 = arith.mulf %53, %53 : vector<32x32xf32>
      %cst_40 = arith.constant dense<0.000000e+00> : vector<32xf32>
      %55 = vector.multi_reduction <add>, %54, %cst_40 [1] : vector<32x32xf32> to vector<32xf32>
      %56 = vector.shape_cast %55 : vector<32xf32> to vector<32x1xf32>
      %cst_41 = arith.constant 3.200000e+01 : f32
      %57 = vector.broadcast %cst_41 : f32 to vector<32x1xf32>
      %58 = arith.divf %56, %57 : vector<32x1xf32>
      %59 = vector.broadcast %51 : vector<32x1xf32> to vector<32x32xf32>
      %60 = arith.subf %45, %59 : vector<32x32xf32>
      %cst_42 = arith.constant 9.99999974E-6 : f32
      %61 = vector.broadcast %cst_42 : f32 to vector<32x1xf32>
      %62 = arith.addf %58, %61 : vector<32x1xf32>
      %63 = math.rsqrt %62 : vector<32x1xf32>
      %64 = vector.broadcast %63 : vector<32x1xf32> to vector<32x32xf32>
      %65 = arith.mulf %60, %64 : vector<32x32xf32>
      %66 = vector.broadcast %46 : vector<1x32xf32> to vector<32x32xf32>
      %67 = arith.mulf %65, %66 : vector<32x32xf32>
      %68 = vector.broadcast %47 : vector<1x32xf32> to vector<32x32xf32>
      %69 = arith.addf %67, %68 : vector<32x32xf32>
      %70 = arith.addf %69, %22 : vector<32x32xf32>
      %c0_43 = arith.constant 0 : index
      %c0_44 = arith.constant 0 : index
      %71 = vector.load %arg14[%c0_43, %c0_44] : memref<32x32xf32, #tpu.memory_space<vmem>>, vector<32x32xf32>
      tpu.vector_store %arg14[%c0_43, %c0_44], %70 {strides = array<i32>} : memref<32x32xf32, #tpu.memory_space<vmem>>, vector<32x32xf32>,
    } else {
    }
    return
  }
  func.func @transform_0(%arg0: i32, %arg1: i32) -> (i32, i32) {
    %c0_i32 = arith.constant 0 : i32
    %c0_i32_0 = arith.constant 0 : i32
    return %c0_i32, %arg1 : i32, i32
  }
  func.func @transform_1(%arg0: i32, %arg1: i32) -> (i32, i32) {
    %c0_i32 = arith.constant 0 : i32
    %c0_i32_0 = arith.constant 0 : i32
    return %arg1, %c0_i32 : i32, i32
  }
  func.func @transform_2(%arg0: i32, %arg1: i32) -> (i32, i32) {
    %c0_i32 = arith.constant 0 : i32
    %c0_i32_0 = arith.constant 0 : i32
    return %arg0, %c0_i32 : i32, i32
  }
  func.func @transform_3(%arg0: i32, %arg1: i32) -> (i32, i32) {
    %c0_i32 = arith.constant 0 : i32
    %c0_i32_0 = arith.constant 0 : i32
    %c0_i32_1 = arith.constant 0 : i32
    return %c0_i32, %c0_i32_0 : i32, i32
  }
  func.func @transform_4(%arg0: i32, %arg1: i32) -> (i32, i32) {
    %c0_i32 = arith.constant 0 : i32
    %c0_i32_0 = arith.constant 0 : i32
    %c0_i32_1 = arith.constant 0 : i32
    return %c0_i32, %c0_i32_0 : i32, i32
  }
  func.func @transform_5(%arg0: i32, %arg1: i32) -> (i32, i32) {
    %c0_i32 = arith.constant 0 : i32
    %c0_i32_0 = arith.constant 0 : i32
    %c0_i32_1 = arith.constant 0 : i32
    return %c0_i32, %c0_i32_0 : i32, i32
  }
  func.func @transform_6(%arg0: i32, %arg1: i32) -> (i32, i32) {
    %c0_i32 = arith.constant 0 : i32
    %c0_i32_0 = arith.constant 0 : i32
    %c0_i32_1 = arith.constant 0 : i32
    return %c0_i32, %c0_i32_0 : i32, i32
  }
  func.func @transform_7(%arg0: i32, %arg1: i32) -> (i32, i32) {
    %c0_i32 = arith.constant 0 : i32
    %c0_i32_0 = arith.constant 0 : i32
    %c0_i32_1 = arith.constant 0 : i32
    return %c0_i32, %c0_i32_0 : i32, i32
  }
  func.func @transform_8(%arg0: i32, %arg1: i32) -> (i32, i32) {
    %c0_i32 = arith.constant 0 : i32
    %c0_i32_0 = arith.constant 0 : i32
    %c0_i32_1 = arith.constant 0 : i32
    return %c0_i32, %c0_i32_0 : i32, i32
  }
  func.func @transform_9(%arg0: i32, %arg1: i32) -> (i32, i32) {
    %c0_i32 = arith.constant 0 : i32
    %c0_i32_0 = arith.constant 0 : i32
    %c0_i32_1 = arith.constant 0 : i32
    return %c0_i32, %c0_i32_0 : i32, i32
  }
  func.func @transform_10(%arg0: i32, %arg1: i32) -> (i32, i32) {
    %c0_i32 = arith.constant 0 : i32
    %c0_i32_0 = arith.constant 0 : i32
    %c0_i32_1 = arith.constant 0 : i32
    return %c0_i32, %c0_i32_0 : i32, i32
  }
  func.func @transform_11(%arg0: i32, %arg1: i32) -> (i32, i32) {
    %c0_i32 = arith.constant 0 : i32
    %c0_i32_0 = arith.constant 0 : i32
    %c0_i32_1 = arith.constant 0 : i32
    return %c0_i32, %c0_i32_0 : i32, i32
  }
  func.func @transform_12(%arg0: i32, %arg1: i32) -> (i32, i32) {
    %c0_i32 = arith.constant 0 : i32
    %c0_i32_0 = arith.constant 0 : i32
    return %arg0, %c0_i32 : i32, i32
  }
}

module attributes {stable_mosaic.version = 11 : i64} {
  func.func @kernel(%arg0: i32, %arg1: memref<32x32xf32, #tpu.memory_space<vmem>>, %arg2: memref<32x32xf32, #tpu.memory_space<vmem>>, %arg3: memref<1x32xf32, #tpu.memory_space<vmem>>, %arg4: memref<32x32xf32, #tpu.memory_space<vmem>>, %arg5: memref<1x32xf32, #tpu.memory_space<vmem>>, %arg6: memref<32x3xf32, #tpu.memory_space<vmem>>, %arg7: memref<1x3xf32, #tpu.memory_space<vmem>>, %arg8: memref<32x3xf32, #tpu.memory_space<vmem>>) attributes {dimension_semantics = [#tpu.dimension_semantics<parallel>], iteration_bounds = array<i64: 1>, scalar_prefetch = 0 : i64, scratch_operands = 0 : i64, tpu.core_type = #tpu.core_type<tc>, window_params = [{transform_indices = @transform_0, window_bounds = array<i64: 32, 32>}, {pipeline_mode = #tpu.pipeline_mode<synchronous>, transform_indices = @transform_1, window_bounds = array<i64: 32, 32>}, {pipeline_mode = #tpu.pipeline_mode<synchronous>, transform_indices = @transform_2, window_bounds = array<i64: 1, 32>}, {pipeline_mode = #tpu.pipeline_mode<synchronous>, transform_indices = @transform_3, window_bounds = array<i64: 32, 32>}, {pipeline_mode = #tpu.pipeline_mode<synchronous>, transform_indices = @transform_4, window_bounds = array<i64: 1, 32>}, {pipeline_mode = #tpu.pipeline_mode<synchronous>, transform_indices = @transform_5, window_bounds = array<i64: 32, 3>}, {pipeline_mode = #tpu.pipeline_mode<synchronous>, transform_indices = @transform_6, window_bounds = array<i64: 1, 3>}, {transform_indices = @transform_7, window_bounds = array<i64: 32, 3>}]} {
    %c0 = arith.constant 0 : index
    %c0_0 = arith.constant 0 : index
    %0 = vector.load %arg1[%c0, %c0_0] : memref<32x32xf32, #tpu.memory_space<vmem>>, vector<32x32xf32>
    %c0_1 = arith.constant 0 : index
    %c0_2 = arith.constant 0 : index
    %1 = vector.load %arg2[%c0_1, %c0_2] : memref<32x32xf32, #tpu.memory_space<vmem>>, vector<32x32xf32>
    %cst = arith.constant dense<0.000000e+00> : vector<32x32xf32>
    %2 = tpu.matmul %0, %1, %cst {dimension_numbers = #tpu.dot_dimension_numbers<[1], [0], [0], [1], [0, 0, 1, 1], [], []>} : vector<32x32xf32>, vector<32x32xf32>, vector<32x32xf32> -> vector<32x32xf32>
    %c0_3 = arith.constant 0 : index
    %c0_4 = arith.constant 0 : index
    %3 = vector.load %arg3[%c0_3, %c0_4] : memref<1x32xf32, #tpu.memory_space<vmem>>, vector<1x32xf32>
    %4 = vector.broadcast %3 : vector<1x32xf32> to vector<32x32xf32>
    %5 = arith.addf %2, %4 : vector<32x32xf32>
    %cst_5 = arith.constant 0.000000e+00 : f32
    %6 = vector.broadcast %cst_5 : f32 to vector<32x32xf32>
    %7 = arith.maximumf %5, %6 : vector<32x32xf32>
    %c0_6 = arith.constant 0 : index
    %c0_7 = arith.constant 0 : index
    %8 = vector.load %arg4[%c0_6, %c0_7] : memref<32x32xf32, #tpu.memory_space<vmem>>, vector<32x32xf32>
    %c0_8 = arith.constant 0 : index
    %c0_9 = arith.constant 0 : index
    %9 = vector.load %arg5[%c0_8, %c0_9] : memref<1x32xf32, #tpu.memory_space<vmem>>, vector<1x32xf32>
    %cst_10 = arith.constant dense<0.000000e+00> : vector<32x32xf32>
    %10 = tpu.matmul %7, %8, %cst_10 {dimension_numbers = #tpu.dot_dimension_numbers<[1], [0], [0], [1], [0, 0, 1, 1], [], []>} : vector<32x32xf32>, vector<32x32xf32>, vector<32x32xf32> -> vector<32x32xf32>
    %11 = vector.broadcast %9 : vector<1x32xf32> to vector<32x32xf32>
    %12 = arith.addf %10, %11 : vector<32x32xf32>
    %cst_11 = arith.constant 0.000000e+00 : f32
    %13 = vector.broadcast %cst_11 : f32 to vector<32x32xf32>
    %14 = arith.maximumf %12, %13 : vector<32x32xf32>
    %c0_12 = arith.constant 0 : index
    %c0_13 = arith.constant 0 : index
    %15 = vector.load %arg6[%c0_12, %c0_13] : memref<32x3xf32, #tpu.memory_space<vmem>>, vector<32x3xf32>
    %c0_14 = arith.constant 0 : index
    %c0_15 = arith.constant 0 : index
    %16 = vector.load %arg7[%c0_14, %c0_15] : memref<1x3xf32, #tpu.memory_space<vmem>>, vector<1x3xf32>
    %cst_16 = arith.constant dense<0.000000e+00> : vector<32x3xf32>
    %17 = tpu.matmul %14, %15, %cst_16 {dimension_numbers = #tpu.dot_dimension_numbers<[1], [0], [0], [1], [0, 0, 1, 1], [], []>} : vector<32x32xf32>, vector<32x3xf32>, vector<32x3xf32> -> vector<32x3xf32>
    %18 = vector.broadcast %16 : vector<1x3xf32> to vector<32x3xf32>
    %19 = arith.addf %17, %18 : vector<32x3xf32>
    %c0_17 = arith.constant 0 : index
    %c0_18 = arith.constant 0 : index
    %20 = vector.load %arg8[%c0_17, %c0_18] : memref<32x3xf32, #tpu.memory_space<vmem>>, vector<32x3xf32>
    tpu.vector_store %arg8[%c0_17, %c0_18], %19 {strides = array<i32>} : memref<32x3xf32, #tpu.memory_space<vmem>>, vector<32x3xf32>,
    return
  }
  func.func @transform_0(%arg0: i32) -> (i32, i32) {
    %c0_i32 = arith.constant 0 : i32
    %c0_i32_0 = arith.constant 0 : i32
    return %arg0, %c0_i32 : i32, i32
  }
  func.func @transform_1(%arg0: i32) -> (i32, i32) {
    %c0_i32 = arith.constant 0 : i32
    %c0_i32_0 = arith.constant 0 : i32
    %c0_i32_1 = arith.constant 0 : i32
    return %c0_i32, %c0_i32_0 : i32, i32
  }
  func.func @transform_2(%arg0: i32) -> (i32, i32) {
    %c0_i32 = arith.constant 0 : i32
    %c0_i32_0 = arith.constant 0 : i32
    %c0_i32_1 = arith.constant 0 : i32
    return %c0_i32, %c0_i32_0 : i32, i32
  }
  func.func @transform_3(%arg0: i32) -> (i32, i32) {
    %c0_i32 = arith.constant 0 : i32
    %c0_i32_0 = arith.constant 0 : i32
    %c0_i32_1 = arith.constant 0 : i32
    return %c0_i32, %c0_i32_0 : i32, i32
  }
  func.func @transform_4(%arg0: i32) -> (i32, i32) {
    %c0_i32 = arith.constant 0 : i32
    %c0_i32_0 = arith.constant 0 : i32
    %c0_i32_1 = arith.constant 0 : i32
    return %c0_i32, %c0_i32_0 : i32, i32
  }
  func.func @transform_5(%arg0: i32) -> (i32, i32) {
    %c0_i32 = arith.constant 0 : i32
    %c0_i32_0 = arith.constant 0 : i32
    %c0_i32_1 = arith.constant 0 : i32
    return %c0_i32, %c0_i32_0 : i32, i32
  }
  func.func @transform_6(%arg0: i32) -> (i32, i32) {
    %c0_i32 = arith.constant 0 : i32
    %c0_i32_0 = arith.constant 0 : i32
    %c0_i32_1 = arith.constant 0 : i32
    return %c0_i32, %c0_i32_0 : i32, i32
  }
  func.func @transform_7(%arg0: i32) -> (i32, i32) {
    %c0_i32 = arith.constant 0 : i32
    %c0_i32_0 = arith.constant 0 : i32
    return %arg0, %c0_i32 : i32, i32
  }
}

</mosaic_0001>

<llo_original>
// kernel: forward.8
$region0: #{forward.8}
  #allocation0 [shape = 'u32[]', space=smem, size = 0x4, offset = 0x4, fixed_abs, tag = 'smem constant byte address 0x4 - core index']
  #allocation1 [shape = 'u32[144,128]{1,0:T(1,128)}', space=vmem, size = 0x12000, scoped, tag = 'internal scratch']
  %s0 = inlined_call_operand.vmem [shape: f32[64,8], index: 0, kind: input, shape index: {}]
  %s1 = inlined_call_operand.vmem [shape: f32[8,32], index: 1, kind: input, shape index: {}]
  %s2 = inlined_call_operand.vmem [shape: f32[1,32], index: 2, kind: input, shape index: {}]
  %s3 = inlined_call_operand.vmem [shape: f32[32,32], index: 3, kind: input, shape index: {}]
  %s4 = inlined_call_operand.vmem [shape: f32[1,32], index: 4, kind: input, shape index: {}]
  %s5 = inlined_call_operand.vmem [shape: f32[32,32], index: 5, kind: input, shape index: {}]
  %s6 = inlined_call_operand.vmem [shape: f32[1,32], index: 6, kind: input, shape index: {}]
  %s7 = inlined_call_operand.vmem [shape: f32[1,32], index: 7, kind: input, shape index: {}]
  %s8 = inlined_call_operand.vmem [shape: f32[1,32], index: 8, kind: input, shape index: {}]
  %s9 = inlined_call_operand.vmem [shape: f32[64,32], index: 9, kind: output, shape index: {}]
  %s10 = sld [smem:[#allocation0]]
  $region46: #{forward.8} parent=0
    _
  %s12 = ssub.s32 1, %s10
  %s13 = scalar_select 0, %s12, %s10
  // Predicated region
  $region2: #{forward.8} parent=0 // pred_check
    _
  $region3: #{forward.8} parent=0 // pred_check_branch
    %15 = sbr.rel (0) target = $region5
  $region4: #{forward.8} parent=0 // pred_region
    _
  $region5: #{forward.8} parent=0 // pred_fallthru
    _
  // Predicated region
  $region6: #{forward.8} parent=0 // pred_check
    _
  $region7: #{forward.8} parent=0 // pred_check_branch
    %17 = sbr.rel (0) target = $region9
  $region8: #{forward.8} parent=0 // pred_region
    _
  $region9: #{forward.8} parent=0 // pred_fallthru
    _
  // Predicated region
  $region10: #{forward.8} parent=0 // pred_check
    _
  $region11: #{forward.8} parent=0 // pred_check_branch
    %19 = sbr.rel (0) target = $region13
  $region12: #{forward.8} parent=0 // pred_region
    _
  $region13: #{forward.8} parent=0 // pred_fallthru
    _
  // Predicated region
  $region14: #{forward.8} parent=0 // pred_check
    _
  $region15: #{forward.8} parent=0 // pred_check_branch
    %21 = sbr.rel (0) target = $region17
  $region16: #{forward.8} parent=0 // pred_region
    _
  $region17: #{forward.8} parent=0 // pred_fallthru
    _
  // Predicated region
  $region18: #{forward.8} parent=0 // pred_check
    _
  $region19: #{forward.8} parent=0 // pred_check_branch
    %23 = sbr.rel (0) target = $region21
  $region20: #{forward.8} parent=0 // pred_region
    _
  $region21: #{forward.8} parent=0 // pred_fallthru
    _
  // Predicated region
  $region22: #{forward.8} parent=0 // pred_check
    _
  $region23: #{forward.8} parent=0 // pred_check_branch
    %25 = sbr.rel (0) target = $region25
  $region24: #{forward.8} parent=0 // pred_region
    _
  $region25: #{forward.8} parent=0 // pred_fallthru
    _
  // Predicated region
  $region26: #{forward.8} parent=0 // pred_check
    _
  $region27: #{forward.8} parent=0 // pred_check_branch
    %27 = sbr.rel (0) target = $region29
  $region28: #{forward.8} parent=0 // pred_region
    _
  $region29: #{forward.8} parent=0 // pred_fallthru
    _
  // Predicated region
  $region30: #{forward.8} parent=0 // pred_check
    _
  $region31: #{forward.8} parent=0 // pred_check_branch
    %29 = sbr.rel (0) target = $region33
  $region32: #{forward.8} parent=0 // pred_region
    _
  $region33: #{forward.8} parent=0 // pred_fallthru
    _
  // Predicated region
  $region34: #{forward.8} parent=0 // pred_check
    _
  $region35: #{forward.8} parent=0 // pred_check_branch
    %31 = sbr.rel (0) target = $region37
  $region36: #{forward.8} parent=0 // pred_region
    _
  $region37: #{forward.8} parent=0 // pred_fallthru
    _
  %v32 = vld [vmem:[%s0] sm:$0xff]
  %v33 = vld [vmem:[%s0 + $0x8] sm:$0xff]
  %v34 = vld [vmem:[%s0 + $0x10] sm:$0xff]
  %v35 = vld [vmem:[%s0 + $0x18] sm:$0xff]
  %v36 = vld [vmem:[%s0 + $0x20] sm:$0xff]
  %v37 = vld [vmem:[%s0 + $0x28] sm:$0xff]
  %v38 = vld [vmem:[%s0 + $0x30] sm:$0xff]
  %v39 = vld [vmem:[%s0 + $0x38] sm:$0xff]
  %v40 = vld [vmem:[%s1] sm:$0xff]
  %v41 = vld [vmem:[%s2] sm:$0x1]
  %v43 = vlaneseq
  %v44 = vshrl.u32 %v43, 7
  %v45 = vsub.s32 0, %v44
  %v46 = vrot.slane %v41, %v45
  %vm48 = vcmask 64512
  %v50 = vsel %vm48, %v32, 0
  %v53 = vsel %vm48, %v33, 0
  %v56 = vsel %vm48, %v34, 0
  %v59 = vsel %vm48, %v35, 0
  %v62 = vsel %vm48, %v36, 0
  %v65 = vsel %vm48, %v37, 0
  %v68 = vsel %vm48, %v38, 0
  %v71 = vsel %vm48, %v39, 0
  %73 = vmatprep.subr.mxu0 0.0
  %74 = vmatpush1.msra.mxu0 0.0
  %75 = vmatprep.subr.mxu0 0.0
  %76 = vmatpush1.msra.mxu0 0.0
  %77 = vmatprep.subr.mxu0 0.0
  %78 = vmatpush1.msra.mxu0 0.0
  %79 = vmatprep.subr.mxu0 0.0
  %80 = vmatpush1.msra.mxu0 0.0
  %81 = vmatprep.subr.mxu0 0.0
  %82 = vmatpush1.msra.mxu0 0.0
  %83 = vmatprep.subr.mxu0 0.0
  %84 = vmatpush1.msra.mxu0 0.0
  %85 = vmatprep.subr.mxu0 0.0
  %86 = vmatpush1.msra.mxu0 0.0
  %87 = vmatprep.subr.mxu0 0.0
  %88 = vmatpush1.msra.mxu0 0.0
  %89 = vmatprep.subr.mxu0 0.0
  %90 = vmatpush1.msra.mxu0 0.0
  %91 = vmatprep.subr.mxu0 0.0
  %92 = vmatpush1.msra.mxu0 0.0
  %93 = vmatprep.subr.mxu0 0.0
  %94 = vmatpush1.msra.mxu0 0.0
  %95 = vmatprep.subr.mxu0 0.0
  %96 = vmatpush1.msra.mxu0 0.0
  %97 = vmatprep.subr.mxu0 0.0
  %98 = vmatpush1.msra.mxu0 0.0
  %99 = vmatprep.subr.mxu0 0.0
  %100 = vmatpush1.msra.mxu0 0.0
  %101 = vmatprep.subr.mxu0 0.0
  %102 = vmatpush1.msra.mxu0 0.0
  %103 = vmatprep.subr.mxu0 0.0
  %104 = vmatpush1.msra.mxu0 %v40
  %105 = vmatprep.subr.mxu0 0.0
  %106 = vmatpush2.msra.mxu0 0.0
  %107 = vmatprep.subr.mxu0 0.0
  %108 = vmatpush2.msra.mxu0 0.0
  %109 = vmatprep.subr.mxu0 0.0
  %110 = vmatpush2.msra.mxu0 0.0
  %111 = vmatprep.subr.mxu0 0.0
  %112 = vmatpush2.msra.mxu0 0.0
  %113 = vmatprep.subr.mxu0 0.0
  %114 = vmatpush2.msra.mxu0 0.0
  %115 = vmatprep.subr.mxu0 0.0
  %116 = vmatpush2.msra.mxu0 0.0
  %117 = vmatprep.subr.mxu0 0.0
  %118 = vmatpush2.msra.mxu0 0.0
  %119 = vmatprep.subr.mxu0 0.0
  %120 = vmatpush2.msra.mxu0 0.0
  %121 = vmatprep.subr.mxu0 0.0
  %122 = vmatpush2.msra.mxu0 0.0
  %123 = vmatprep.subr.mxu0 0.0
  %124 = vmatpush2.msra.mxu0 0.0
  %125 = vmatprep.subr.mxu0 0.0
  %126 = vmatpush2.msra.mxu0 0.0
  %127 = vmatprep.subr.mxu0 0.0
  %128 = vmatpush2.msra.mxu0 0.0
  %129 = vmatprep.subr.mxu0 0.0
  %130 = vmatpush2.msra.mxu0 0.0
  %131 = vmatprep.subr.mxu0 0.0
  %132 = vmatpush2.msra.mxu0 0.0
  %133 = vmatprep.subr.mxu0 0.0
  %134 = vmatpush2.msra.mxu0 0.0
  %135 = vmatprep.subr.mxu0 0.0
  %136 = vmatpush2.msra.mxu0 0.0
  %137 = vmatprep.mubr.f32.mxu0 0.0
  %138 = vmatmul.mubr.f32.gmra.mxu0 %v50
  %v139 = vpop.f32.mrf.mxu0
  %v140 = vadd.f32 %v46, %v139
  %v141 = vpop.f32.mrf.mxu0
  %142 = vmatprep.mubr.f32.mxu0 0.0
  %143 = vmatmul.mubr.f32.gmra.mxu0 %v53
  %v144 = vpop.f32.mrf.mxu0
  %v145 = vadd.f32 %v46, %v144
  %v146 = vpop.f32.mrf.mxu0
  %147 = vmatprep.mubr.f32.mxu0 0.0
  %148 = vmatmul.mubr.f32.gmra.mxu0 %v56
  %v149 = vpop.f32.mrf.mxu0
  %v150 = vadd.f32 %v46, %v149
  %v151 = vpop.f32.mrf.mxu0
  %152 = vmatprep.mubr.f32.mxu0 0.0
  %153 = vmatmul.mubr.f32.gmra.mxu0 %v59
  %v154 = vpop.f32.mrf.mxu0
  %v155 = vadd.f32 %v46, %v154
  %v156 = vpop.f32.mrf.mxu0
  %157 = vmatprep.mubr.f32.mxu0 0.0
  %158 = vmatmul.mubr.f32.gmra.mxu0 %v62
  %v159 = vpop.f32.mrf.mxu0
  %v160 = vadd.f32 %v46, %v159
  %v161 = vpop.f32.mrf.mxu0
  %162 = vmatprep.mubr.f32.mxu0 0.0
  %163 = vmatmul.mubr.f32.gmra.mxu0 %v65
  %v164 = vpop.f32.mrf.mxu0
  %v165 = vadd.f32 %v46, %v164
  %v166 = vpop.f32.mrf.mxu0
  %167 = vmatprep.mubr.f32.mxu0 0.0
  %168 = vmatmul.mubr.f32.gmra.mxu0 %v68
  %v169 = vpop.f32.mrf.mxu0
  %v170 = vadd.f32 %v46, %v169
  %v171 = vpop.f32.mrf.mxu0
  %172 = vmatprep.mubr.f32.mxu0 0.0
  %173 = vmatmul.mubr.f32.gmra.mxu0 %v71
  %v174 = vpop.f32.mrf.mxu0
  %v175 = vadd.f32 %v46, %v174
  %v176 = vpop.f32.mrf.mxu0
  %177 = vdwg.mxu0
  %v178 = vmax.f32 %v140, 0.0
  %v179 = vmax.f32 %v145, 0.0
  %v180 = vmax.f32 %v150, 0.0
  %v181 = vmax.f32 %v155, 0.0
  %v182 = vmax.f32 %v160, 0.0
  %v183 = vmax.f32 %v165, 0.0
  %v184 = vmax.f32 %v170, 0.0
  %v185 = vmax.f32 %v175, 0.0
  %v186 = vld [vmem:[%s3] sm:$0xff]
  %v187 = vld [vmem:[%s3 + $0x8] sm:$0xff]
  %v188 = vld [vmem:[%s3 + $0x10] sm:$0xff]
  %v189 = vld [vmem:[%s3 + $0x18] sm:$0xff]
  %v190 = vld [vmem:[%s4] sm:$0x1]
  %v192 = vlaneseq
  %v193 = vshrl.u32 %v192, 7
  %v194 = vsub.s32 0, %v193
  %v195 = vrot.slane %v190, %v194
  %vm197 = vcmask 261120
  %v199 = vsel %vm197, %v178, 0
  %v202 = vsel %vm197, %v179, 0
  %v205 = vsel %vm197, %v180, 0
  %v208 = vsel %vm197, %v181, 0
  %v211 = vsel %vm197, %v182, 0
  %v214 = vsel %vm197, %v183, 0
  %v217 = vsel %vm197, %v184, 0
  %v220 = vsel %vm197, %v185, 0
  %222 = vmatprep.subr.mxu0 0.0
  %223 = vmatpush1.msra.mxu0 0.0
  %224 = vmatprep.subr.mxu0 0.0
  %225 = vmatpush1.msra.mxu0 0.0
  %226 = vmatprep.subr.mxu0 0.0
  %227 = vmatpush1.msra.mxu0 0.0
  %228 = vmatprep.subr.mxu0 0.0
  %229 = vmatpush1.msra.mxu0 0.0
  %230 = vmatprep.subr.mxu0 0.0
  %231 = vmatpush1.msra.mxu0 0.0
  %232 = vmatprep.subr.mxu0 0.0
  %233 = vmatpush1.msra.mxu0 0.0
  %234 = vmatprep.subr.mxu0 0.0
  %235 = vmatpush1.msra.mxu0 0.0
  %236 = vmatprep.subr.mxu0 0.0
  %237 = vmatpush1.msra.mxu0 0.0
  %238 = vmatprep.subr.mxu0 0.0
  %239 = vmatpush1.msra.mxu0 0.0
  %240 = vmatprep.subr.mxu0 0.0
  %241 = vmatpush1.msra.mxu0 0.0
  %242 = vmatprep.subr.mxu0 0.0
  %243 = vmatpush1.msra.mxu0 0.0
  %244 = vmatprep.subr.mxu0 0.0
  %245 = vmatpush1.msra.mxu0 0.0
  %246 = vmatprep.subr.mxu0 0.0
  %247 = vmatpush1.msra.mxu0 %v189
  %248 = vmatprep.subr.mxu0 0.0
  %249 = vmatpush1.msra.mxu0 %v188
  %250 = vmatprep.subr.mxu0 0.0
  %251 = vmatpush1.msra.mxu0 %v187
  %252 = vmatprep.subr.mxu0 0.0
  %253 = vmatpush1.msra.mxu0 %v186
  %254 = vmatprep.subr.mxu0 0.0
  %255 = vmatpush2.msra.mxu0 0.0
  %256 = vmatprep.subr.mxu0 0.0
  %257 = vmatpush2.msra.mxu0 0.0
  %258 = vmatprep.subr.mxu0 0.0
  %259 = vmatpush2.msra.mxu0 0.0
  %260 = vmatprep.subr.mxu0 0.0
  %261 = vmatpush2.msra.mxu0 0.0
  %262 = vmatprep.subr.mxu0 0.0
  %263 = vmatpush2.msra.mxu0 0.0
  %264 = vmatprep.subr.mxu0 0.0
  %265 = vmatpush2.msra.mxu0 0.0
  %266 = vmatprep.subr.mxu0 0.0
  %267 = vmatpush2.msra.mxu0 0.0
  %268 = vmatprep.subr.mxu0 0.0
  %269 = vmatpush2.msra.mxu0 0.0
  %270 = vmatprep.subr.mxu0 0.0
  %271 = vmatpush2.msra.mxu0 0.0
  %272 = vmatprep.subr.mxu0 0.0
  %273 = vmatpush2.msra.mxu0 0.0
  %274 = vmatprep.subr.mxu0 0.0
  %275 = vmatpush2.msra.mxu0 0.0
  %276 = vmatprep.subr.mxu0 0.0
  %277 = vmatpush2.msra.mxu0 0.0
  %278 = vmatprep.subr.mxu0 0.0
  %279 = vmatpush2.msra.mxu0 0.0
  %280 = vmatprep.subr.mxu0 0.0
  %281 = vmatpush2.msra.mxu0 0.0
  %282 = vmatprep.subr.mxu0 0.0
  %283 = vmatpush2.msra.mxu0 0.0
  %284 = vmatprep.subr.mxu0 0.0
  %285 = vmatpush2.msra.mxu0 0.0
  %286 = vmatprep.mubr.f32.mxu0 0.0
  %287 = vmatmul.mubr.f32.gmra.mxu0 %v199
  %v288 = vpop.f32.mrf.mxu0
  %v289 = vadd.f32 %v195, %v288
  %v290 = vpop.f32.mrf.mxu0
  %291 = vmatprep.mubr.f32.mxu0 0.0
  %292 = vmatmul.mubr.f32.gmra.mxu0 %v202
  %v293 = vpop.f32.mrf.mxu0
  %v294 = vadd.f32 %v195, %v293
  %v295 = vpop.f32.mrf.mxu0
  %296 = vmatprep.mubr.f32.mxu0 0.0
  %297 = vmatmul.mubr.f32.gmra.mxu0 %v205
  %v298 = vpop.f32.mrf.mxu0
  %v299 = vadd.f32 %v195, %v298
  %v300 = vpop.f32.mrf.mxu0
  %301 = vmatprep.mubr.f32.mxu0 0.0
  %302 = vmatmul.mubr.f32.gmra.mxu0 %v208
  %v303 = vpop.f32.mrf.mxu0
  %v304 = vadd.f32 %v195, %v303
  %v305 = vpop.f32.mrf.mxu0
  %306 = vmatprep.mubr.f32.mxu0 0.0
  %307 = vmatmul.mubr.f32.gmra.mxu0 %v211
  %v308 = vpop.f32.mrf.mxu0
  %v309 = vadd.f32 %v195, %v308
  %v310 = vpop.f32.mrf.mxu0
  %311 = vmatprep.mubr.f32.mxu0 0.0
  %312 = vmatmul.mubr.f32.gmra.mxu0 %v214
  %v313 = vpop.f32.mrf.mxu0
  %v314 = vadd.f32 %v195, %v313
  %v315 = vpop.f32.mrf.mxu0
  %316 = vmatprep.mubr.f32.mxu0 0.0
  %317 = vmatmul.mubr.f32.gmra.mxu0 %v217
  %v318 = vpop.f32.mrf.mxu0
  %v319 = vadd.f32 %v195, %v318
  %v320 = vpop.f32.mrf.mxu0
  %321 = vmatprep.mubr.f32.mxu0 0.0
  %322 = vmatmul.mubr.f32.gmra.mxu0 %v220
  %v323 = vpop.f32.mrf.mxu0
  %v324 = vadd.f32 %v195, %v323
  %v325 = vpop.f32.mrf.mxu0
  %326 = vdwg.mxu0
  %v327 = vmax.f32 %v289, 0.0
  %v328 = vmax.f32 %v294, 0.0
  %v329 = vmax.f32 %v299, 0.0
  %v330 = vmax.f32 %v304, 0.0
  %v331 = vmax.f32 %v309, 0.0
  %v332 = vmax.f32 %v314, 0.0
  %v333 = vmax.f32 %v319, 0.0
  %v334 = vmax.f32 %v324, 0.0
  %v335 = vld [vmem:[%s5] sm:$0xff]
  %v336 = vld [vmem:[%s5 + $0x8] sm:$0xff]
  %v337 = vld [vmem:[%s5 + $0x10] sm:$0xff]
  %v338 = vld [vmem:[%s5 + $0x18] sm:$0xff]
  %v339 = vld [vmem:[%s6] sm:$0x1]
  %v341 = vlaneseq
  %v342 = vshrl.u32 %v341, 7
  %v343 = vsub.s32 0, %v342
  %v344 = vrot.slane %v339, %v343
  %v347 = vsel %vm197, %v327, 0
  %v350 = vsel %vm197, %v328, 0
  %v353 = vsel %vm197, %v329, 0
  %v356 = vsel %vm197, %v330, 0
  %v359 = vsel %vm197, %v331, 0
  %v362 = vsel %vm197, %v332, 0
  %v365 = vsel %vm197, %v333, 0
  %v368 = vsel %vm197, %v334, 0
  %370 = vmatprep.subr.mxu0 0.0
  %371 = vmatpush1.msra.mxu0 0.0
  %372 = vmatprep.subr.mxu0 0.0
  %373 = vmatpush1.msra.mxu0 0.0
  %374 = vmatprep.subr.mxu0 0.0
  %375 = vmatpush1.msra.mxu0 0.0
  %376 = vmatprep.subr.mxu0 0.0
  %377 = vmatpush1.msra.mxu0 0.0
  %378 = vmatprep.subr.mxu0 0.0
  %379 = vmatpush1.msra.mxu0 0.0
  %380 = vmatprep.subr.mxu0 0.0
  %381 = vmatpush1.msra.mxu0 0.0
  %382 = vmatprep.subr.mxu0 0.0
  %383 = vmatpush1.msra.mxu0 0.0
  %384 = vmatprep.subr.mxu0 0.0
  %385 = vmatpush1.msra.mxu0 0.0
  %386 = vmatprep.subr.mxu0 0.0
  %387 = vmatpush1.msra.mxu0 0.0
  %388 = vmatprep.subr.mxu0 0.0
  %389 = vmatpush1.msra.mxu0 0.0
  %390 = vmatprep.subr.mxu0 0.0
  %391 = vmatpush1.msra.mxu0 0.0
  %392 = vmatprep.subr.mxu0 0.0
  %393 = vmatpush1.msra.mxu0 0.0
  %394 = vmatprep.subr.mxu0 0.0
  %395 = vmatpush1.msra.mxu0 %v338
  %396 = vmatprep.subr.mxu0 0.0
  %397 = vmatpush1.msra.mxu0 %v337
  %398 = vmatprep.subr.mxu0 0.0
  %399 = vmatpush1.msra.mxu0 %v336
  %400 = vmatprep.subr.mxu0 0.0
  %401 = vmatpush1.msra.mxu0 %v335
  %402 = vmatprep.subr.mxu0 0.0
  %403 = vmatpush2.msra.mxu0 0.0
  %404 = vmatprep.subr.mxu0 0.0
  %405 = vmatpush2.msra.mxu0 0.0
  %406 = vmatprep.subr.mxu0 0.0
  %407 = vmatpush2.msra.mxu0 0.0
  %408 = vmatprep.subr.mxu0 0.0
  %409 = vmatpush2.msra.mxu0 0.0
  %410 = vmatprep.subr.mxu0 0.0
  %411 = vmatpush2.msra.mxu0 0.0
  %412 = vmatprep.subr.mxu0 0.0
  %413 = vmatpush2.msra.mxu0 0.0
  %414 = vmatprep.subr.mxu0 0.0
  %415 = vmatpush2.msra.mxu0 0.0
  %416 = vmatprep.subr.mxu0 0.0
  %417 = vmatpush2.msra.mxu0 0.0
  %418 = vmatprep.subr.mxu0 0.0
  %419 = vmatpush2.msra.mxu0 0.0
  %420 = vmatprep.subr.mxu0 0.0
  %421 = vmatpush2.msra.mxu0 0.0
  %422 = vmatprep.subr.mxu0 0.0
  %423 = vmatpush2.msra.mxu0 0.0
  %424 = vmatprep.subr.mxu0 0.0
  %425 = vmatpush2.msra.mxu0 0.0
  %426 = vmatprep.subr.mxu0 0.0
  %427 = vmatpush2.msra.mxu0 0.0
  %428 = vmatprep.subr.mxu0 0.0
  %429 = vmatpush2.msra.mxu0 0.0
  %430 = vmatprep.subr.mxu0 0.0
  %431 = vmatpush2.msra.mxu0 0.0
  %432 = vmatprep.subr.mxu0 0.0
  %433 = vmatpush2.msra.mxu0 0.0
  %434 = vmatprep.mubr.f32.mxu0 0.0
  %435 = vmatmul.mubr.f32.gmra.mxu0 %v347
  %v436 = vpop.f32.mrf.mxu0
  %v437 = vadd.f32 %v344, %v436
  %v438 = vpop.f32.mrf.mxu0
  %439 = vmatprep.mubr.f32.mxu0 0.0
  %440 = vmatmul.mubr.f32.gmra.mxu0 %v350
  %v441 = vpop.f32.mrf.mxu0
  %v442 = vadd.f32 %v344, %v441
  %v443 = vpop.f32.mrf.mxu0
  %444 = vmatprep.mubr.f32.mxu0 0.0
  %445 = vmatmul.mubr.f32.gmra.mxu0 %v353
  %v446 = vpop.f32.mrf.mxu0
  %v447 = vadd.f32 %v344, %v446
  %v448 = vpop.f32.mrf.mxu0
  %449 = vmatprep.mubr.f32.mxu0 0.0
  %450 = vmatmul.mubr.f32.gmra.mxu0 %v356
  %v451 = vpop.f32.mrf.mxu0
  %v452 = vadd.f32 %v344, %v451
  %v453 = vpop.f32.mrf.mxu0
  %454 = vmatprep.mubr.f32.mxu0 0.0
  %455 = vmatmul.mubr.f32.gmra.mxu0 %v359
  %v456 = vpop.f32.mrf.mxu0
  %v457 = vadd.f32 %v344, %v456
  %v458 = vpop.f32.mrf.mxu0
  %459 = vmatprep.mubr.f32.mxu0 0.0
  %460 = vmatmul.mubr.f32.gmra.mxu0 %v362
  %v461 = vpop.f32.mrf.mxu0
  %v462 = vadd.f32 %v344, %v461
  %v463 = vpop.f32.mrf.mxu0
  %464 = vmatprep.mubr.f32.mxu0 0.0
  %465 = vmatmul.mubr.f32.gmra.mxu0 %v365
  %v466 = vpop.f32.mrf.mxu0
  %v467 = vadd.f32 %v344, %v466
  %v468 = vpop.f32.mrf.mxu0
  %469 = vmatprep.mubr.f32.mxu0 0.0
  %470 = vmatmul.mubr.f32.gmra.mxu0 %v368
  %v471 = vpop.f32.mrf.mxu0
  %v472 = vadd.f32 %v344, %v471
  %v473 = vpop.f32.mrf.mxu0
  %474 = vdwg.mxu0
  %v475 = vld [vmem:[%s7] sm:$0x1]
  %v476 = vld [vmem:[%s8] sm:$0x1]
  %v477 = vsel %vm197, %v437, 0.0
  %478 = vadd.xlane.f32.xlu0 %v477
  %v479 = vpop.xlane.xlu0 %478
  %v480 = vsel %vm197, %v442, 0.0
  %481 = vadd.xlane.f32.xlu0 %v480
  %v482 = vpop.xlane.xlu0 %481
  %v483 = vsel %vm197, %v447, 0.0
  %484 = vadd.xlane.f32.xlu0 %v483
  %v485 = vpop.xlane.xlu0 %484
  %v486 = vsel %vm197, %v452, 0.0
  %487 = vadd.xlane.f32.xlu0 %v486
  %v488 = vpop.xlane.xlu0 %487
  %v489 = vsel %vm197, %v457, 0.0
  %490 = vadd.xlane.f32.xlu0 %v489
  %v491 = vpop.xlane.xlu0 %490
  %v492 = vsel %vm197, %v462, 0.0
  %493 = vadd.xlane.f32.xlu0 %v492
  %v494 = vpop.xlane.xlu0 %493
  %v495 = vsel %vm197, %v467, 0.0
  %496 = vadd.xlane.f32.xlu0 %v495
  %v497 = vpop.xlane.xlu0 %496
  %v498 = vsel %vm197, %v472, 0.0
  %499 = vadd.xlane.f32.xlu0 %v498
  %v500 = vpop.xlane.xlu0 %499
  %v501 = vrcp.pop 32.0
  %v502 = vmul.f32 %v479, %v501
  %v503 = vmul.f32 %v482, %v501
  %v504 = vmul.f32 %v485, %v501
  %v505 = vmul.f32 %v488, %v501
  %v506 = vmul.f32 %v491, %v501
  %v507 = vmul.f32 %v494, %v501
  %v508 = vmul.f32 %v497, %v501
  %v509 = vmul.f32 %v500, %v501
  %v510 = vsub.f32 %v437, %v502
  %v511 = vsub.f32 %v442, %v503
  %v512 = vsub.f32 %v447, %v504
  %v513 = vsub.f32 %v452, %v505
  %v514 = vsub.f32 %v457, %v506
  %v515 = vsub.f32 %v462, %v507
  %v516 = vsub.f32 %v467, %v508
  %v517 = vsub.f32 %v472, %v509
  %v518 = vmul.f32 %v510, %v510
  %v519 = vmul.f32 %v511, %v511
  %v520 = vmul.f32 %v512, %v512
  %v521 = vmul.f32 %v513, %v513
  %v522 = vmul.f32 %v514, %v514
  %v523 = vmul.f32 %v515, %v515
  %v524 = vmul.f32 %v516, %v516
  %v525 = vmul.f32 %v517, %v517
  %v526 = vsel %vm197, %v518, 0.0
  %527 = vadd.xlane.f32.xlu0 %v526
  %v528 = vpop.xlane.xlu0 %527
  %v529 = vsel %vm197, %v519, 0.0
  %530 = vadd.xlane.f32.xlu0 %v529
  %v531 = vpop.xlane.xlu0 %530
  %v532 = vsel %vm197, %v520, 0.0
  %533 = vadd.xlane.f32.xlu0 %v532
  %v534 = vpop.xlane.xlu0 %533
  %v535 = vsel %vm197, %v521, 0.0
  %536 = vadd.xlane.f32.xlu0 %v535
  %v537 = vpop.xlane.xlu0 %536
  %v538 = vsel %vm197, %v522, 0.0
  %539 = vadd.xlane.f32.xlu0 %v538
  %v540 = vpop.xlane.xlu0 %539
  %v541 = vsel %vm197, %v523, 0.0
  %542 = vadd.xlane.f32.xlu0 %v541
  %v543 = vpop.xlane.xlu0 %542
  %v544 = vsel %vm197, %v524, 0.0
  %545 = vadd.xlane.f32.xlu0 %v544
  %v546 = vpop.xlane.xlu0 %545
  %v547 = vsel %vm197, %v525, 0.0
  %548 = vadd.xlane.f32.xlu0 %v547
  %v549 = vpop.xlane.xlu0 %548
  %v550 = vmul.f32 %v528, %v501
  %v551 = vmul.f32 %v531, %v501
  %v552 = vmul.f32 %v534, %v501
  %v553 = vmul.f32 %v537, %v501
  %v554 = vmul.f32 %v540, %v501
  %v555 = vmul.f32 %v543, %v501
  %v556 = vmul.f32 %v546, %v501
  %v557 = vmul.f32 %v549, %v501
  %v558 = vadd.f32 %v550, 1e-05
  %v559 = vadd.f32 %v551, 1e-05
  %v560 = vadd.f32 %v552, 1e-05
  %v561 = vadd.f32 %v553, 1e-05
  %v562 = vadd.f32 %v554, 1e-05
  %v563 = vadd.f32 %v555, 1e-05
  %v564 = vadd.f32 %v556, 1e-05
  %v565 = vadd.f32 %v557, 1e-05
  %v566 = vrsqrt.pop %v558
  %v567 = vrsqrt.pop %v559
  %v568 = vrsqrt.pop %v560
  %v569 = vrsqrt.pop %v561
  %v570 = vrsqrt.pop %v562
  %v571 = vrsqrt.pop %v563
  %v572 = vrsqrt.pop %v564
  %v573 = vrsqrt.pop %v565
  %v574 = vmul.f32 %v510, %v566
  %v575 = vmul.f32 %v511, %v567
  %v576 = vmul.f32 %v512, %v568
  %v577 = vmul.f32 %v513, %v569
  %v578 = vmul.f32 %v514, %v570
  %v579 = vmul.f32 %v515, %v571
  %v580 = vmul.f32 %v516, %v572
  %v581 = vmul.f32 %v517, %v573
  %v583 = vlaneseq
  %v584 = vshrl.u32 %v583, 7
  %v585 = vsub.s32 0, %v584
  %v586 = vrot.slane %v475, %v585
  %v588 = vmul.f32 %v574, %v586
  %v589 = vmul.f32 %v575, %v586
  %v590 = vmul.f32 %v576, %v586
  %v591 = vmul.f32 %v577, %v586
  %v592 = vmul.f32 %v578, %v586
  %v593 = vmul.f32 %v579, %v586
  %v594 = vmul.f32 %v580, %v586
  %v595 = vmul.f32 %v581, %v586
  %v597 = vlaneseq
  %v598 = vshrl.u32 %v597, 7
  %v599 = vsub.s32 0, %v598
  %v600 = vrot.slane %v476, %v599
  %v602 = vadd.f32 %v588, %v600
  %v603 = vadd.f32 %v589, %v600
  %v604 = vadd.f32 %v590, %v600
  %v605 = vadd.f32 %v591, %v600
  %v606 = vadd.f32 %v592, %v600
  %v607 = vadd.f32 %v593, %v600
  %v608 = vadd.f32 %v594, %v600
  %v609 = vadd.f32 %v595, %v600
  %610 = vst.msk [vmem:[%s9] sm:$0xff] %vm197, %v602
  %611 = vst.msk [vmem:[%s9 + $0x8] sm:$0xff] %vm197, %v603
  %612 = vst.msk [vmem:[%s9 + $0x10] sm:$0xff] %vm197, %v604
  %613 = vst.msk [vmem:[%s9 + $0x18] sm:$0xff] %vm197, %v605
  %614 = vst.msk [vmem:[%s9 + $0x20] sm:$0xff] %vm197, %v606
  %615 = vst.msk [vmem:[%s9 + $0x28] sm:$0xff] %vm197, %v607
  %616 = vst.msk [vmem:[%s9 + $0x30] sm:$0xff] %vm197, %v608
  %617 = vst.msk [vmem:[%s9 + $0x38] sm:$0xff] %vm197, %v609
  // Predicated region
  $region38: #{forward.8} parent=0 // pred_check
    _
  $region39: #{forward.8} parent=0 // pred_check_branch
    %619 = sbr.rel (0) target = $region41
  $region40: #{forward.8} parent=0 // pred_region
    _
  $region41: #{forward.8} parent=0 // pred_fallthru
    _
  // Predicated region
  $region42: #{forward.8} parent=0 // pred_check
    _
  $region43: #{forward.8} parent=0 // pred_check_branch
    %621 = sbr.rel (0) target = $region45
  $region44: #{forward.8} parent=0 // pred_region
    _
  $region45: #{forward.8} parent=0 // pred_fallthru
    _

// kernel: forward.7
$region0: #{forward.7}
  #allocation0 [shape = 'u32[]', space=smem, size = 0x4, offset = 0x4, fixed_abs, tag = 'smem constant byte address 0x4 - core index']
  #allocation1 [shape = 'u32[144,128]{1,0:T(1,128)}', space=vmem, size = 0x12000, scoped, tag = 'internal scratch']
  %s0 = inlined_call_operand.vmem [shape: f32[32,16], index: 0, kind: input, shape index: {}]
  %s1 = inlined_call_operand.vmem [shape: f32[16,32], index: 1, kind: input, shape index: {}]
  %s2 = inlined_call_operand.vmem [shape: f32[1,32], index: 2, kind: input, shape index: {}]
  %s3 = inlined_call_operand.vmem [shape: f32[32,32], index: 3, kind: input, shape index: {}]
  %s4 = inlined_call_operand.vmem [shape: f32[1,32], index: 4, kind: input, shape index: {}]
  %s5 = inlined_call_operand.vmem [shape: f32[32,32], index: 5, kind: input, shape index: {}]
  %s6 = inlined_call_operand.vmem [shape: f32[1,32], index: 6, kind: input, shape index: {}]
  %s7 = inlined_call_operand.vmem [shape: f32[1,32], index: 7, kind: input, shape index: {}]
  %s8 = inlined_call_operand.vmem [shape: f32[1,32], index: 8, kind: input, shape index: {}]
  %s9 = inlined_call_operand.vmem [shape: f32[32,32], index: 9, kind: output, shape index: {}]
  %s10 = sld [smem:[#allocation0]]
  $region46: #{forward.7} parent=0
    _
  %s12 = ssub.s32 1, %s10
  %s13 = scalar_select 0, %s12, %s10
  // Predicated region
  $region2: #{forward.7} parent=0 // pred_check
    _
  $region3: #{forward.7} parent=0 // pred_check_branch
    %15 = sbr.rel (0) target = $region5
  $region4: #{forward.7} parent=0 // pred_region
    _
  $region5: #{forward.7} parent=0 // pred_fallthru
    _
  // Predicated region
  $region6: #{forward.7} parent=0 // pred_check
    _
  $region7: #{forward.7} parent=0 // pred_check_branch
    %17 = sbr.rel (0) target = $region9
  $region8: #{forward.7} parent=0 // pred_region
    _
  $region9: #{forward.7} parent=0 // pred_fallthru
    _
  // Predicated region
  $region10: #{forward.7} parent=0 // pred_check
    _
  $region11: #{forward.7} parent=0 // pred_check_branch
    %19 = sbr.rel (0) target = $region13
  $region12: #{forward.7} parent=0 // pred_region
    _
  $region13: #{forward.7} parent=0 // pred_fallthru
    _
  // Predicated region
  $region14: #{forward.7} parent=0 // pred_check
    _
  $region15: #{forward.7} parent=0 // pred_check_branch
    %21 = sbr.rel (0) target = $region17
  $region16: #{forward.7} parent=0 // pred_region
    _
  $region17: #{forward.7} parent=0 // pred_fallthru
    _
  // Predicated region
  $region18: #{forward.7} parent=0 // pred_check
    _
  $region19: #{forward.7} parent=0 // pred_check_branch
    %23 = sbr.rel (0) target = $region21
  $region20: #{forward.7} parent=0 // pred_region
    _
  $region21: #{forward.7} parent=0 // pred_fallthru
    _
  // Predicated region
  $region22: #{forward.7} parent=0 // pred_check
    _
  $region23: #{forward.7} parent=0 // pred_check_branch
    %25 = sbr.rel (0) target = $region25
  $region24: #{forward.7} parent=0 // pred_region
    _
  $region25: #{forward.7} parent=0 // pred_fallthru
    _
  // Predicated region
  $region26: #{forward.7} parent=0 // pred_check
    _
  $region27: #{forward.7} parent=0 // pred_check_branch
    %27 = sbr.rel (0) target = $region29
  $region28: #{forward.7} parent=0 // pred_region
    _
  $region29: #{forward.7} parent=0 // pred_fallthru
    _
  // Predicated region
  $region30: #{forward.7} parent=0 // pred_check
    _
  $region31: #{forward.7} parent=0 // pred_check_branch
    %29 = sbr.rel (0) target = $region33
  $region32: #{forward.7} parent=0 // pred_region
    _
  $region33: #{forward.7} parent=0 // pred_fallthru
    _
  // Predicated region
  $region34: #{forward.7} parent=0 // pred_check
    _
  $region35: #{forward.7} parent=0 // pred_check_branch
    %31 = sbr.rel (0) target = $region37
  $region36: #{forward.7} parent=0 // pred_region
    _
  $region37: #{forward.7} parent=0 // pred_fallthru
    _
  %v32 = vld [vmem:[%s0] sm:$0xff]
  %v33 = vld [vmem:[%s0 + $0x8] sm:$0xff]
  %v34 = vld [vmem:[%s0 + $0x10] sm:$0xff]
  %v35 = vld [vmem:[%s0 + $0x18] sm:$0xff]
  %v36 = vld [vmem:[%s1] sm:$0xff]
  %v37 = vld [vmem:[%s1 + $0x8] sm:$0xff]
  %v38 = vld [vmem:[%s2] sm:$0x1]
  %v40 = vlaneseq
  %v41 = vshrl.u32 %v40, 7
  %v42 = vsub.s32 0, %v41
  %v43 = vrot.slane %v38, %v42
  %vm45 = vcmask 130048
  %v47 = vsel %vm45, %v32, 0
  %v50 = vsel %vm45, %v33, 0
  %v53 = vsel %vm45, %v34, 0
  %v56 = vsel %vm45, %v35, 0
  %58 = vmatprep.subr.mxu0 0.0
  %59 = vmatpush1.msra.mxu0 0.0
  %60 = vmatprep.subr.mxu0 0.0
  %61 = vmatpush1.msra.mxu0 0.0
  %62 = vmatprep.subr.mxu0 0.0
  %63 = vmatpush1.msra.mxu0 0.0
  %64 = vmatprep.subr.mxu0 0.0
  %65 = vmatpush1.msra.mxu0 0.0
  %66 = vmatprep.subr.mxu0 0.0
  %67 = vmatpush1.msra.mxu0 0.0
  %68 = vmatprep.subr.mxu0 0.0
  %69 = vmatpush1.msra.mxu0 0.0
  %70 = vmatprep.subr.mxu0 0.0
  %71 = vmatpush1.msra.mxu0 0.0
  %72 = vmatprep.subr.mxu0 0.0
  %73 = vmatpush1.msra.mxu0 0.0
  %74 = vmatprep.subr.mxu0 0.0
  %75 = vmatpush1.msra.mxu0 0.0
  %76 = vmatprep.subr.mxu0 0.0
  %77 = vmatpush1.msra.mxu0 0.0
  %78 = vmatprep.subr.mxu0 0.0
  %79 = vmatpush1.msra.mxu0 0.0
  %80 = vmatprep.subr.mxu0 0.0
  %81 = vmatpush1.msra.mxu0 0.0
  %82 = vmatprep.subr.mxu0 0.0
  %83 = vmatpush1.msra.mxu0 0.0
  %84 = vmatprep.subr.mxu0 0.0
  %85 = vmatpush1.msra.mxu0 0.0
  %86 = vmatprep.subr.mxu0 0.0
  %87 = vmatpush1.msra.mxu0 %v37
  %88 = vmatprep.subr.mxu0 0.0
  %89 = vmatpush1.msra.mxu0 %v36
  %90 = vmatprep.subr.mxu0 0.0
  %91 = vmatpush2.msra.mxu0 0.0
  %92 = vmatprep.subr.mxu0 0.0
  %93 = vmatpush2.msra.mxu0 0.0
  %94 = vmatprep.subr.mxu0 0.0
  %95 = vmatpush2.msra.mxu0 0.0
  %96 = vmatprep.subr.mxu0 0.0
  %97 = vmatpush2.msra.mxu0 0.0
  %98 = vmatprep.subr.mxu0 0.0
  %99 = vmatpush2.msra.mxu0 0.0
  %100 = vmatprep.subr.mxu0 0.0
  %101 = vmatpush2.msra.mxu0 0.0
  %102 = vmatprep.subr.mxu0 0.0
  %103 = vmatpush2.msra.mxu0 0.0
  %104 = vmatprep.subr.mxu0 0.0
  %105 = vmatpush2.msra.mxu0 0.0
  %106 = vmatprep.subr.mxu0 0.0
  %107 = vmatpush2.msra.mxu0 0.0
  %108 = vmatprep.subr.mxu0 0.0
  %109 = vmatpush2.msra.mxu0 0.0
  %110 = vmatprep.subr.mxu0 0.0
  %111 = vmatpush2.msra.mxu0 0.0
  %112 = vmatprep.subr.mxu0 0.0
  %113 = vmatpush2.msra.mxu0 0.0
  %114 = vmatprep.subr.mxu0 0.0
  %115 = vmatpush2.msra.mxu0 0.0
  %116 = vmatprep.subr.mxu0 0.0
  %117 = vmatpush2.msra.mxu0 0.0
  %118 = vmatprep.subr.mxu0 0.0
  %119 = vmatpush2.msra.mxu0 0.0
  %120 = vmatprep.subr.mxu0 0.0
  %121 = vmatpush2.msra.mxu0 0.0
  %122 = vmatprep.mubr.f32.mxu0 0.0
  %123 = vmatmul.mubr.f32.gmra.mxu0 %v47
  %v124 = vpop.f32.mrf.mxu0
  %v125 = vadd.f32 %v43, %v124
  %v126 = vpop.f32.mrf.mxu0
  %127 = vmatprep.mubr.f32.mxu0 0.0
  %128 = vmatmul.mubr.f32.gmra.mxu0 %v50
  %v129 = vpop.f32.mrf.mxu0
  %v130 = vadd.f32 %v43, %v129
  %v131 = vpop.f32.mrf.mxu0
  %132 = vmatprep.mubr.f32.mxu0 0.0
  %133 = vmatmul.mubr.f32.gmra.mxu0 %v53
  %v134 = vpop.f32.mrf.mxu0
  %v135 = vadd.f32 %v43, %v134
  %v136 = vpop.f32.mrf.mxu0
  %137 = vmatprep.mubr.f32.mxu0 0.0
  %138 = vmatmul.mubr.f32.gmra.mxu0 %v56
  %v139 = vpop.f32.mrf.mxu0
  %v140 = vadd.f32 %v43, %v139
  %v141 = vpop.f32.mrf.mxu0
  %142 = vdwg.mxu0
  %v143 = vmax.f32 %v125, 0.0
  %v144 = vmax.f32 %v130, 0.0
  %v145 = vmax.f32 %v135, 0.0
  %v146 = vmax.f32 %v140, 0.0
  %v147 = vld [vmem:[%s3] sm:$0xff]
  %v148 = vld [vmem:[%s3 + $0x8] sm:$0xff]
  %v149 = vld [vmem:[%s3 + $0x10] sm:$0xff]
  %v150 = vld [vmem:[%s3 + $0x18] sm:$0xff]
  %v151 = vld [vmem:[%s4] sm:$0x1]
  %v153 = vlaneseq
  %v154 = vshrl.u32 %v153, 7
  %v155 = vsub.s32 0, %v154
  %v156 = vrot.slane %v151, %v155
  %vm158 = vcmask 261120
  %v160 = vsel %vm158, %v143, 0
  %v163 = vsel %vm158, %v144, 0
  %v166 = vsel %vm158, %v145, 0
  %v169 = vsel %vm158, %v146, 0
  %171 = vmatprep.subr.mxu0 0.0
  %172 = vmatpush1.msra.mxu0 0.0
  %173 = vmatprep.subr.mxu0 0.0
  %174 = vmatpush1.msra.mxu0 0.0
  %175 = vmatprep.subr.mxu0 0.0
  %176 = vmatpush1.msra.mxu0 0.0
  %177 = vmatprep.subr.mxu0 0.0
  %178 = vmatpush1.msra.mxu0 0.0
  %179 = vmatprep.subr.mxu0 0.0
  %180 = vmatpush1.msra.mxu0 0.0
  %181 = vmatprep.subr.mxu0 0.0
  %182 = vmatpush1.msra.mxu0 0.0
  %183 = vmatprep.subr.mxu0 0.0
  %184 = vmatpush1.msra.mxu0 0.0
  %185 = vmatprep.subr.mxu0 0.0
  %186 = vmatpush1.msra.mxu0 0.0
  %187 = vmatprep.subr.mxu0 0.0
  %188 = vmatpush1.msra.mxu0 0.0
  %189 = vmatprep.subr.mxu0 0.0
  %190 = vmatpush1.msra.mxu0 0.0
  %191 = vmatprep.subr.mxu0 0.0
  %192 = vmatpush1.msra.mxu0 0.0
  %193 = vmatprep.subr.mxu0 0.0
  %194 = vmatpush1.msra.mxu0 0.0
  %195 = vmatprep.subr.mxu0 0.0
  %196 = vmatpush1.msra.mxu0 %v150
  %197 = vmatprep.subr.mxu0 0.0
  %198 = vmatpush1.msra.mxu0 %v149
  %199 = vmatprep.subr.mxu0 0.0
  %200 = vmatpush1.msra.mxu0 %v148
  %201 = vmatprep.subr.mxu0 0.0
  %202 = vmatpush1.msra.mxu0 %v147
  %203 = vmatprep.subr.mxu0 0.0
  %204 = vmatpush2.msra.mxu0 0.0
  %205 = vmatprep.subr.mxu0 0.0
  %206 = vmatpush2.msra.mxu0 0.0
  %207 = vmatprep.subr.mxu0 0.0
  %208 = vmatpush2.msra.mxu0 0.0
  %209 = vmatprep.subr.mxu0 0.0
  %210 = vmatpush2.msra.mxu0 0.0
  %211 = vmatprep.subr.mxu0 0.0
  %212 = vmatpush2.msra.mxu0 0.0
  %213 = vmatprep.subr.mxu0 0.0
  %214 = vmatpush2.msra.mxu0 0.0
  %215 = vmatprep.subr.mxu0 0.0
  %216 = vmatpush2.msra.mxu0 0.0
  %217 = vmatprep.subr.mxu0 0.0
  %218 = vmatpush2.msra.mxu0 0.0
  %219 = vmatprep.subr.mxu0 0.0
  %220 = vmatpush2.msra.mxu0 0.0
  %221 = vmatprep.subr.mxu0 0.0
  %222 = vmatpush2.msra.mxu0 0.0
  %223 = vmatprep.subr.mxu0 0.0
  %224 = vmatpush2.msra.mxu0 0.0
  %225 = vmatprep.subr.mxu0 0.0
  %226 = vmatpush2.msra.mxu0 0.0
  %227 = vmatprep.subr.mxu0 0.0
  %228 = vmatpush2.msra.mxu0 0.0
  %229 = vmatprep.subr.mxu0 0.0
  %230 = vmatpush2.msra.mxu0 0.0
  %231 = vmatprep.subr.mxu0 0.0
  %232 = vmatpush2.msra.mxu0 0.0
  %233 = vmatprep.subr.mxu0 0.0
  %234 = vmatpush2.msra.mxu0 0.0
  %235 = vmatprep.mubr.f32.mxu0 0.0
  %236 = vmatmul.mubr.f32.gmra.mxu0 %v160
  %v237 = vpop.f32.mrf.mxu0
  %v238 = vadd.f32 %v156, %v237
  %v239 = vpop.f32.mrf.mxu0
  %240 = vmatprep.mubr.f32.mxu0 0.0
  %241 = vmatmul.mubr.f32.gmra.mxu0 %v163
  %v242 = vpop.f32.mrf.mxu0
  %v243 = vadd.f32 %v156, %v242
  %v244 = vpop.f32.mrf.mxu0
  %245 = vmatprep.mubr.f32.mxu0 0.0
  %246 = vmatmul.mubr.f32.gmra.mxu0 %v166
  %v247 = vpop.f32.mrf.mxu0
  %v248 = vadd.f32 %v156, %v247
  %v249 = vpop.f32.mrf.mxu0
  %250 = vmatprep.mubr.f32.mxu0 0.0
  %251 = vmatmul.mubr.f32.gmra.mxu0 %v169
  %v252 = vpop.f32.mrf.mxu0
  %v253 = vadd.f32 %v156, %v252
  %v254 = vpop.f32.mrf.mxu0
  %255 = vdwg.mxu0
  %v256 = vmax.f32 %v238, 0.0
  %v257 = vmax.f32 %v243, 0.0
  %v258 = vmax.f32 %v248, 0.0
  %v259 = vmax.f32 %v253, 0.0
  %v260 = vld [vmem:[%s5] sm:$0xff]
  %v261 = vld [vmem:[%s5 + $0x8] sm:$0xff]
  %v262 = vld [vmem:[%s5 + $0x10] sm:$0xff]
  %v263 = vld [vmem:[%s5 + $0x18] sm:$0xff]
  %v264 = vld [vmem:[%s6] sm:$0x1]
  %v266 = vlaneseq
  %v267 = vshrl.u32 %v266, 7
  %v268 = vsub.s32 0, %v267
  %v269 = vrot.slane %v264, %v268
  %v272 = vsel %vm158, %v256, 0
  %v275 = vsel %vm158, %v257, 0
  %v278 = vsel %vm158, %v258, 0
  %v281 = vsel %vm158, %v259, 0
  %283 = vmatprep.subr.mxu0 0.0
  %284 = vmatpush1.msra.mxu0 0.0
  %285 = vmatprep.subr.mxu0 0.0
  %286 = vmatpush1.msra.mxu0 0.0
  %287 = vmatprep.subr.mxu0 0.0
  %288 = vmatpush1.msra.mxu0 0.0
  %289 = vmatprep.subr.mxu0 0.0
  %290 = vmatpush1.msra.mxu0 0.0
  %291 = vmatprep.subr.mxu0 0.0
  %292 = vmatpush1.msra.mxu0 0.0
  %293 = vmatprep.subr.mxu0 0.0
  %294 = vmatpush1.msra.mxu0 0.0
  %295 = vmatprep.subr.mxu0 0.0
  %296 = vmatpush1.msra.mxu0 0.0
  %297 = vmatprep.subr.mxu0 0.0
  %298 = vmatpush1.msra.mxu0 0.0
  %299 = vmatprep.subr.mxu0 0.0
  %300 = vmatpush1.msra.mxu0 0.0
  %301 = vmatprep.subr.mxu0 0.0
  %302 = vmatpush1.msra.mxu0 0.0
  %303 = vmatprep.subr.mxu0 0.0
  %304 = vmatpush1.msra.mxu0 0.0
  %305 = vmatprep.subr.mxu0 0.0
  %306 = vmatpush1.msra.mxu0 0.0
  %307 = vmatprep.subr.mxu0 0.0
  %308 = vmatpush1.msra.mxu0 %v263
  %309 = vmatprep.subr.mxu0 0.0
  %310 = vmatpush1.msra.mxu0 %v262
  %311 = vmatprep.subr.mxu0 0.0
  %312 = vmatpush1.msra.mxu0 %v261
  %313 = vmatprep.subr.mxu0 0.0
  %314 = vmatpush1.msra.mxu0 %v260
  %315 = vmatprep.subr.mxu0 0.0
  %316 = vmatpush2.msra.mxu0 0.0
  %317 = vmatprep.subr.mxu0 0.0
  %318 = vmatpush2.msra.mxu0 0.0
  %319 = vmatprep.subr.mxu0 0.0
  %320 = vmatpush2.msra.mxu0 0.0
  %321 = vmatprep.subr.mxu0 0.0
  %322 = vmatpush2.msra.mxu0 0.0
  %323 = vmatprep.subr.mxu0 0.0
  %324 = vmatpush2.msra.mxu0 0.0
  %325 = vmatprep.subr.mxu0 0.0
  %326 = vmatpush2.msra.mxu0 0.0
  %327 = vmatprep.subr.mxu0 0.0
  %328 = vmatpush2.msra.mxu0 0.0
  %329 = vmatprep.subr.mxu0 0.0
  %330 = vmatpush2.msra.mxu0 0.0
  %331 = vmatprep.subr.mxu0 0.0
  %332 = vmatpush2.msra.mxu0 0.0
  %333 = vmatprep.subr.mxu0 0.0
  %334 = vmatpush2.msra.mxu0 0.0
  %335 = vmatprep.subr.mxu0 0.0
  %336 = vmatpush2.msra.mxu0 0.0
  %337 = vmatprep.subr.mxu0 0.0
  %338 = vmatpush2.msra.mxu0 0.0
  %339 = vmatprep.subr.mxu0 0.0
  %340 = vmatpush2.msra.mxu0 0.0
  %341 = vmatprep.subr.mxu0 0.0
  %342 = vmatpush2.msra.mxu0 0.0
  %343 = vmatprep.subr.mxu0 0.0
  %344 = vmatpush2.msra.mxu0 0.0
  %345 = vmatprep.subr.mxu0 0.0
  %346 = vmatpush2.msra.mxu0 0.0
  %347 = vmatprep.mubr.f32.mxu0 0.0
  %348 = vmatmul.mubr.f32.gmra.mxu0 %v272
  %v349 = vpop.f32.mrf.mxu0
  %v350 = vadd.f32 %v269, %v349
  %v351 = vpop.f32.mrf.mxu0
  %352 = vmatprep.mubr.f32.mxu0 0.0
  %353 = vmatmul.mubr.f32.gmra.mxu0 %v275
  %v354 = vpop.f32.mrf.mxu0
  %v355 = vadd.f32 %v269, %v354
  %v356 = vpop.f32.mrf.mxu0
  %357 = vmatprep.mubr.f32.mxu0 0.0
  %358 = vmatmul.mubr.f32.gmra.mxu0 %v278
  %v359 = vpop.f32.mrf.mxu0
  %v360 = vadd.f32 %v269, %v359
  %v361 = vpop.f32.mrf.mxu0
  %362 = vmatprep.mubr.f32.mxu0 0.0
  %363 = vmatmul.mubr.f32.gmra.mxu0 %v281
  %v364 = vpop.f32.mrf.mxu0
  %v365 = vadd.f32 %v269, %v364
  %v366 = vpop.f32.mrf.mxu0
  %367 = vdwg.mxu0
  %v368 = vld [vmem:[%s7] sm:$0x1]
  %v369 = vld [vmem:[%s8] sm:$0x1]
  %v370 = vsel %vm158, %v350, 0.0
  %371 = vadd.xlane.f32.xlu0 %v370
  %v372 = vpop.xlane.xlu0 %371
  %v373 = vsel %vm158, %v355, 0.0
  %374 = vadd.xlane.f32.xlu0 %v373
  %v375 = vpop.xlane.xlu0 %374
  %v376 = vsel %vm158, %v360, 0.0
  %377 = vadd.xlane.f32.xlu0 %v376
  %v378 = vpop.xlane.xlu0 %377
  %v379 = vsel %vm158, %v365, 0.0
  %380 = vadd.xlane.f32.xlu0 %v379
  %v381 = vpop.xlane.xlu0 %380
  %v382 = vrcp.pop 32.0
  %v383 = vmul.f32 %v372, %v382
  %v384 = vmul.f32 %v375, %v382
  %v385 = vmul.f32 %v378, %v382
  %v386 = vmul.f32 %v381, %v382
  %v387 = vsub.f32 %v350, %v383
  %v388 = vsub.f32 %v355, %v384
  %v389 = vsub.f32 %v360, %v385
  %v390 = vsub.f32 %v365, %v386
  %v391 = vmul.f32 %v387, %v387
  %v392 = vmul.f32 %v388, %v388
  %v393 = vmul.f32 %v389, %v389
  %v394 = vmul.f32 %v390, %v390
  %v395 = vsel %vm158, %v391, 0.0
  %396 = vadd.xlane.f32.xlu0 %v395
  %v397 = vpop.xlane.xlu0 %396
  %v398 = vsel %vm158, %v392, 0.0
  %399 = vadd.xlane.f32.xlu0 %v398
  %v400 = vpop.xlane.xlu0 %399
  %v401 = vsel %vm158, %v393, 0.0
  %402 = vadd.xlane.f32.xlu0 %v401
  %v403 = vpop.xlane.xlu0 %402
  %v404 = vsel %vm158, %v394, 0.0
  %405 = vadd.xlane.f32.xlu0 %v404
  %v406 = vpop.xlane.xlu0 %405
  %v407 = vmul.f32 %v397, %v382
  %v408 = vmul.f32 %v400, %v382
  %v409 = vmul.f32 %v403, %v382
  %v410 = vmul.f32 %v406, %v382
  %v411 = vadd.f32 %v407, 1e-05
  %v412 = vadd.f32 %v408, 1e-05
  %v413 = vadd.f32 %v409, 1e-05
  %v414 = vadd.f32 %v410, 1e-05
  %v415 = vrsqrt.pop %v411
  %v416 = vrsqrt.pop %v412
  %v417 = vrsqrt.pop %v413
  %v418 = vrsqrt.pop %v414
  %v419 = vmul.f32 %v387, %v415
  %v420 = vmul.f32 %v388, %v416
  %v421 = vmul.f32 %v389, %v417
  %v422 = vmul.f32 %v390, %v418
  %v424 = vlaneseq
  %v425 = vshrl.u32 %v424, 7
  %v426 = vsub.s32 0, %v425
  %v427 = vrot.slane %v368, %v426
  %v429 = vmul.f32 %v419, %v427
  %v430 = vmul.f32 %v420, %v427
  %v431 = vmul.f32 %v421, %v427
  %v432 = vmul.f32 %v422, %v427
  %v434 = vlaneseq
  %v435 = vshrl.u32 %v434, 7
  %v436 = vsub.s32 0, %v435
  %v437 = vrot.slane %v369, %v436
  %v439 = vadd.f32 %v429, %v437
  %v440 = vadd.f32 %v430, %v437
  %v441 = vadd.f32 %v431, %v437
  %v442 = vadd.f32 %v432, %v437
  %443 = vst.msk [vmem:[%s9] sm:$0xff] %vm158, %v439
  %444 = vst.msk [vmem:[%s9 + $0x8] sm:$0xff] %vm158, %v440
  %445 = vst.msk [vmem:[%s9 + $0x10] sm:$0xff] %vm158, %v441
  %446 = vst.msk [vmem:[%s9 + $0x18] sm:$0xff] %vm158, %v442
  // Predicated region
  $region38: #{forward.7} parent=0 // pred_check
    _
  $region39: #{forward.7} parent=0 // pred_check_branch
    %448 = sbr.rel (0) target = $region41
  $region40: #{forward.7} parent=0 // pred_region
    _
  $region41: #{forward.7} parent=0 // pred_fallthru
    _
  // Predicated region
  $region42: #{forward.7} parent=0 // pred_check
    _
  $region43: #{forward.7} parent=0 // pred_check_branch
    %450 = sbr.rel (0) target = $region45
  $region44: #{forward.7} parent=0 // pred_region
    _
  $region45: #{forward.7} parent=0 // pred_fallthru
    _

// kernel: forward.9
$region0: #{forward.9}
  #allocation0 [shape = 'u32[]', space=smem, size = 0x4, offset = 0x4, fixed_abs, tag = 'smem constant byte address 0x4 - core index']
  #allocation1 [shape = 'u32[144,128]{1,0:T(1,128)}', space=vmem, size = 0x12000, scoped, tag = 'internal scratch']
  %s0 = inlined_call_operand.vmem [shape: f32[64,32], index: 0, kind: input, shape index: {}]
  %s1 = inlined_call_operand.vmem [shape: f32[64,32], index: 1, kind: input, shape index: {}]
  %s2 = inlined_call_operand.vmem [shape: f32[64,32], index: 2, kind: input, shape index: {}]
  %s3 = inlined_call_operand.vmem [shape: f32[32,32], index: 3, kind: input, shape index: {}]
  %s4 = inlined_call_operand.vmem [shape: f32[32,32], index: 4, kind: input, shape index: {}]
  %s5 = inlined_call_operand.vmem [shape: f32[32,32], index: 5, kind: input, shape index: {}]
  %s6 = inlined_call_operand.vmem [shape: f32[1,32], index: 6, kind: input, shape index: {}]
  %s7 = inlined_call_operand.vmem [shape: f32[32,32], index: 7, kind: input, shape index: {}]
  %s8 = inlined_call_operand.vmem [shape: f32[1,32], index: 8, kind: input, shape index: {}]
  %s9 = inlined_call_operand.vmem [shape: f32[32,32], index: 9, kind: input, shape index: {}]
  %s10 = inlined_call_operand.vmem [shape: f32[1,32], index: 10, kind: input, shape index: {}]
  %s11 = inlined_call_operand.vmem [shape: f32[1,32], index: 11, kind: input, shape index: {}]
  %s12 = inlined_call_operand.vmem [shape: f32[1,32], index: 12, kind: input, shape index: {}]
  %s13 = inlined_call_operand.vmem [shape: f32[64,32], index: 13, kind: output, shape index: {}]
  %s14 = sld [smem:[#allocation0]]
  $region62: #{forward.9} parent=0
    _
  %s16 = ssub.s32 1, %s14
  %s17 = scalar_select 0, %s16, %s14
  // Predicated region
  $region2: #{forward.9} parent=0 // pred_check
    _
  $region3: #{forward.9} parent=0 // pred_check_branch
    %19 = sbr.rel (0) target = $region5
  $region4: #{forward.9} parent=0 // pred_region
    _
  $region5: #{forward.9} parent=0 // pred_fallthru
    _
  // Predicated region
  $region6: #{forward.9} parent=0 // pred_check
    _
  $region7: #{forward.9} parent=0 // pred_check_branch
    %21 = sbr.rel (0) target = $region9
  $region8: #{forward.9} parent=0 // pred_region
    _
  $region9: #{forward.9} parent=0 // pred_fallthru
    _
  // Predicated region
  $region10: #{forward.9} parent=0 // pred_check
    _
  $region11: #{forward.9} parent=0 // pred_check_branch
    %23 = sbr.rel (0) target = $region13
  $region12: #{forward.9} parent=0 // pred_region
    _
  $region13: #{forward.9} parent=0 // pred_fallthru
    _
  // Predicated region
  $region14: #{forward.9} parent=0 // pred_check
    _
  $region15: #{forward.9} parent=0 // pred_check_branch
    %25 = sbr.rel (0) target = $region17
  $region16: #{forward.9} parent=0 // pred_region
    _
  $region17: #{forward.9} parent=0 // pred_fallthru
    _
  // Predicated region
  $region18: #{forward.9} parent=0 // pred_check
    _
  $region19: #{forward.9} parent=0 // pred_check_branch
    %27 = sbr.rel (0) target = $region21
  $region20: #{forward.9} parent=0 // pred_region
    _
  $region21: #{forward.9} parent=0 // pred_fallthru
    _
  // Predicated region
  $region22: #{forward.9} parent=0 // pred_check
    _
  $region23: #{forward.9} parent=0 // pred_check_branch
    %29 = sbr.rel (0) target = $region25
  $region24: #{forward.9} parent=0 // pred_region
    _
  $region25: #{forward.9} parent=0 // pred_fallthru
    _
  // Predicated region
  $region26: #{forward.9} parent=0 // pred_check
    _
  $region27: #{forward.9} parent=0 // pred_check_branch
    %31 = sbr.rel (0) target = $region29
  $region28: #{forward.9} parent=0 // pred_region
    _
  $region29: #{forward.9} parent=0 // pred_fallthru
    _
  // Predicated region
  $region30: #{forward.9} parent=0 // pred_check
    _
  $region31: #{forward.9} parent=0 // pred_check_branch
    %33 = sbr.rel (0) target = $region33
  $region32: #{forward.9} parent=0 // pred_region
    _
  $region33: #{forward.9} parent=0 // pred_fallthru
    _
  // Predicated region
  $region34: #{forward.9} parent=0 // pred_check
    _
  $region35: #{forward.9} parent=0 // pred_check_branch
    %35 = sbr.rel (0) target = $region37
  $region36: #{forward.9} parent=0 // pred_region
    _
  $region37: #{forward.9} parent=0 // pred_fallthru
    _
  // Predicated region
  $region38: #{forward.9} parent=0 // pred_check
    _
  $region39: #{forward.9} parent=0 // pred_check_branch
    %37 = sbr.rel (0) target = $region41
  $region40: #{forward.9} parent=0 // pred_region
    _
  $region41: #{forward.9} parent=0 // pred_fallthru
    _
  // Predicated region
  $region42: #{forward.9} parent=0 // pred_check
    _
  $region43: #{forward.9} parent=0 // pred_check_branch
    %39 = sbr.rel (0) target = $region45
  $region44: #{forward.9} parent=0 // pred_region
    _
  $region45: #{forward.9} parent=0 // pred_fallthru
    _
  // Predicated region
  $region46: #{forward.9} parent=0 // pred_check
    _
  $region47: #{forward.9} parent=0 // pred_check_branch
    %41 = sbr.rel (0) target = $region49
  $region48: #{forward.9} parent=0 // pred_region
    _
  $region49: #{forward.9} parent=0 // pred_fallthru
    _
  // Predicated region
  $region50: #{forward.9} parent=0 // pred_check
    _
  $region51: #{forward.9} parent=0 // pred_check_branch
    %43 = sbr.rel (0) target = $region53
  $region52: #{forward.9} parent=0 // pred_region
    _
  $region53: #{forward.9} parent=0 // pred_fallthru
    _
  %v44 = vld [vmem:[%s0] sm:$0xff]
  %v45 = vld [vmem:[%s0 + $0x8] sm:$0xff]
  %v46 = vld [vmem:[%s0 + $0x10] sm:$0xff]
  %v47 = vld [vmem:[%s0 + $0x18] sm:$0xff]
  %v48 = vld [vmem:[%s0 + $0x20] sm:$0xff]
  %v49 = vld [vmem:[%s0 + $0x28] sm:$0xff]
  %v50 = vld [vmem:[%s0 + $0x30] sm:$0xff]
  %v51 = vld [vmem:[%s0 + $0x38] sm:$0xff]
  %v52 = vld [vmem:[%s1] sm:$0xff]
  %v53 = vld [vmem:[%s1 + $0x8] sm:$0xff]
  %v54 = vld [vmem:[%s1 + $0x10] sm:$0xff]
  %v55 = vld [vmem:[%s1 + $0x18] sm:$0xff]
  %v56 = vld [vmem:[%s1 + $0x20] sm:$0xff]
  %v57 = vld [vmem:[%s1 + $0x28] sm:$0xff]
  %v58 = vld [vmem:[%s1 + $0x30] sm:$0xff]
  %v59 = vld [vmem:[%s1 + $0x38] sm:$0xff]
  %v60 = vld [vmem:[%s2] sm:$0xff]
  %v61 = vld [vmem:[%s2 + $0x8] sm:$0xff]
  %v62 = vld [vmem:[%s2 + $0x10] sm:$0xff]
  %v63 = vld [vmem:[%s2 + $0x18] sm:$0xff]
  %v64 = vld [vmem:[%s2 + $0x20] sm:$0xff]
  %v65 = vld [vmem:[%s2 + $0x28] sm:$0xff]
  %v66 = vld [vmem:[%s2 + $0x30] sm:$0xff]
  %v67 = vld [vmem:[%s2 + $0x38] sm:$0xff]
  %v68 = vld [vmem:[%s3] sm:$0xff]
  %v69 = vld [vmem:[%s3 + $0x8] sm:$0xff]
  %v70 = vld [vmem:[%s3 + $0x10] sm:$0xff]
  %v71 = vld [vmem:[%s3 + $0x18] sm:$0xff]
  %v72 = vld [vmem:[%s4] sm:$0xff]
  %v73 = vld [vmem:[%s4 + $0x8] sm:$0xff]
  %v74 = vld [vmem:[%s4 + $0x10] sm:$0xff]
  %v75 = vld [vmem:[%s4 + $0x18] sm:$0xff]
  %vm76 = vcmask 261120
  %v78 = vsel %vm76, %v52, 0
  %v81 = vsel %vm76, %v53, 0
  %v84 = vsel %vm76, %v54, 0
  %v87 = vsel %vm76, %v55, 0
  %v90 = vsel %vm76, %v56, 0
  %v93 = vsel %vm76, %v57, 0
  %v96 = vsel %vm76, %v58, 0
  %v99 = vsel %vm76, %v59, 0
  %101 = vmatprep.subr.mxu0 0.0
  %102 = vmatpush1.msra.mxu0 0.0
  %103 = vmatprep.subr.mxu0 0.0
  %104 = vmatpush1.msra.mxu0 0.0
  %105 = vmatprep.subr.mxu0 0.0
  %106 = vmatpush1.msra.mxu0 0.0
  %107 = vmatprep.subr.mxu0 0.0
  %108 = vmatpush1.msra.mxu0 0.0
  %109 = vmatprep.subr.mxu0 0.0
  %110 = vmatpush1.msra.mxu0 0.0
  %111 = vmatprep.subr.mxu0 0.0
  %112 = vmatpush1.msra.mxu0 0.0
  %113 = vmatprep.subr.mxu0 0.0
  %114 = vmatpush1.msra.mxu0 0.0
  %115 = vmatprep.subr.mxu0 0.0
  %116 = vmatpush1.msra.mxu0 0.0
  %117 = vmatprep.subr.mxu0 0.0
  %118 = vmatpush1.msra.mxu0 0.0
  %119 = vmatprep.subr.mxu0 0.0
  %120 = vmatpush1.msra.mxu0 0.0
  %121 = vmatprep.subr.mxu0 0.0
  %122 = vmatpush1.msra.mxu0 0.0
  %123 = vmatprep.subr.mxu0 0.0
  %124 = vmatpush1.msra.mxu0 0.0
  %125 = vmatprep.subr.mxu0 0.0
  %126 = vmatpush1.msra.mxu0 %v75
  %127 = vmatprep.subr.mxu0 0.0
  %128 = vmatpush1.msra.mxu0 %v74
  %129 = vmatprep.subr.mxu0 0.0
  %130 = vmatpush1.msra.mxu0 %v73
  %131 = vmatprep.subr.mxu0 0.0
  %132 = vmatpush1.msra.mxu0 %v72
  %133 = vmatprep.subr.mxu0 0.0
  %134 = vmatpush2.msra.mxu0 0.0
  %135 = vmatprep.subr.mxu0 0.0
  %136 = vmatpush2.msra.mxu0 0.0
  %137 = vmatprep.subr.mxu0 0.0
  %138 = vmatpush2.msra.mxu0 0.0
  %139 = vmatprep.subr.mxu0 0.0
  %140 = vmatpush2.msra.mxu0 0.0
  %141 = vmatprep.subr.mxu0 0.0
  %142 = vmatpush2.msra.mxu0 0.0
  %143 = vmatprep.subr.mxu0 0.0
  %144 = vmatpush2.msra.mxu0 0.0
  %145 = vmatprep.subr.mxu0 0.0
  %146 = vmatpush2.msra.mxu0 0.0
  %147 = vmatprep.subr.mxu0 0.0
  %148 = vmatpush2.msra.mxu0 0.0
  %149 = vmatprep.subr.mxu0 0.0
  %150 = vmatpush2.msra.mxu0 0.0
  %151 = vmatprep.subr.mxu0 0.0
  %152 = vmatpush2.msra.mxu0 0.0
  %153 = vmatprep.subr.mxu0 0.0
  %154 = vmatpush2.msra.mxu0 0.0
  %155 = vmatprep.subr.mxu0 0.0
  %156 = vmatpush2.msra.mxu0 0.0
  %157 = vmatprep.subr.mxu0 0.0
  %158 = vmatpush2.msra.mxu0 0.0
  %159 = vmatprep.subr.mxu0 0.0
  %160 = vmatpush2.msra.mxu0 0.0
  %161 = vmatprep.subr.mxu0 0.0
  %162 = vmatpush2.msra.mxu0 0.0
  %163 = vmatprep.subr.mxu0 0.0
  %164 = vmatpush2.msra.mxu0 0.0
  %165 = vmatprep.mubr.f32.mxu0 0.0
  %166 = vmatmul.mubr.f32.gmra.mxu0 %v78
  %v167 = vpop.f32.mrf.mxu0
  %v168 = vadd.f32 0.0, %v167
  %v169 = vpop.f32.mrf.mxu0
  %170 = vmatprep.mubr.f32.mxu0 0.0
  %171 = vmatmul.mubr.f32.gmra.mxu0 %v81
  %v172 = vpop.f32.mrf.mxu0
  %v173 = vadd.f32 0.0, %v172
  %v174 = vpop.f32.mrf.mxu0
  %175 = vmatprep.mubr.f32.mxu0 0.0
  %176 = vmatmul.mubr.f32.gmra.mxu0 %v84
  %v177 = vpop.f32.mrf.mxu0
  %v178 = vadd.f32 0.0, %v177
  %v179 = vpop.f32.mrf.mxu0
  %180 = vmatprep.mubr.f32.mxu0 0.0
  %181 = vmatmul.mubr.f32.gmra.mxu0 %v87
  %v182 = vpop.f32.mrf.mxu0
  %v183 = vadd.f32 0.0, %v182
  %v184 = vpop.f32.mrf.mxu0
  %185 = vmatprep.mubr.f32.mxu0 0.0
  %186 = vmatmul.mubr.f32.gmra.mxu0 %v90
  %v187 = vpop.f32.mrf.mxu0
  %v188 = vadd.f32 0.0, %v187
  %v189 = vpop.f32.mrf.mxu0
  %190 = vmatprep.mubr.f32.mxu0 0.0
  %191 = vmatmul.mubr.f32.gmra.mxu0 %v93
  %v192 = vpop.f32.mrf.mxu0
  %v193 = vadd.f32 0.0, %v192
  %v194 = vpop.f32.mrf.mxu0
  %195 = vmatprep.mubr.f32.mxu0 0.0
  %196 = vmatmul.mubr.f32.gmra.mxu0 %v96
  %v197 = vpop.f32.mrf.mxu0
  %v198 = vadd.f32 0.0, %v197
  %v199 = vpop.f32.mrf.mxu0
  %200 = vmatprep.mubr.f32.mxu0 0.0
  %201 = vmatmul.mubr.f32.gmra.mxu0 %v99
  %v202 = vpop.f32.mrf.mxu0
  %v203 = vadd.f32 0.0, %v202
  %v204 = vpop.f32.mrf.mxu0
  %205 = vdwg.mxu0
  %v207 = vsel %vm76, %v44, 0
  %v210 = vsel %vm76, %v45, 0
  %v213 = vsel %vm76, %v46, 0
  %v216 = vsel %vm76, %v47, 0
  %v219 = vsel %vm76, %v48, 0
  %v222 = vsel %vm76, %v49, 0
  %v225 = vsel %vm76, %v50, 0
  %v228 = vsel %vm76, %v51, 0
  %230 = vmatprep.subr.mxu0 0.0
  %231 = vmatpush1.msra.mxu0 0.0
  %232 = vmatprep.subr.mxu0 0.0
  %233 = vmatpush1.msra.mxu0 0.0
  %234 = vmatprep.subr.mxu0 0.0
  %235 = vmatpush1.msra.mxu0 0.0
  %236 = vmatprep.subr.mxu0 0.0
  %237 = vmatpush1.msra.mxu0 0.0
  %238 = vmatprep.subr.mxu0 0.0
  %239 = vmatpush1.msra.mxu0 0.0
  %240 = vmatprep.subr.mxu0 0.0
  %241 = vmatpush1.msra.mxu0 0.0
  %242 = vmatprep.subr.mxu0 0.0
  %243 = vmatpush1.msra.mxu0 0.0
  %244 = vmatprep.subr.mxu0 0.0
  %245 = vmatpush1.msra.mxu0 0.0
  %246 = vmatprep.subr.mxu0 0.0
  %247 = vmatpush1.msra.mxu0 0.0
  %248 = vmatprep.subr.mxu0 0.0
  %249 = vmatpush1.msra.mxu0 0.0
  %250 = vmatprep.subr.mxu0 0.0
  %251 = vmatpush1.msra.mxu0 0.0
  %252 = vmatprep.subr.mxu0 0.0
  %253 = vmatpush1.msra.mxu0 0.0
  %254 = vmatprep.subr.mxu0 0.0
  %255 = vmatpush1.msra.mxu0 %v71
  %256 = vmatprep.subr.mxu0 0.0
  %257 = vmatpush1.msra.mxu0 %v70
  %258 = vmatprep.subr.mxu0 0.0
  %259 = vmatpush1.msra.mxu0 %v69
  %260 = vmatprep.subr.mxu0 0.0
  %261 = vmatpush1.msra.mxu0 %v68
  %262 = vmatprep.subr.mxu0 0.0
  %263 = vmatpush2.msra.mxu0 0.0
  %264 = vmatprep.subr.mxu0 0.0
  %265 = vmatpush2.msra.mxu0 0.0
  %266 = vmatprep.subr.mxu0 0.0
  %267 = vmatpush2.msra.mxu0 0.0
  %268 = vmatprep.subr.mxu0 0.0
  %269 = vmatpush2.msra.mxu0 0.0
  %270 = vmatprep.subr.mxu0 0.0
  %271 = vmatpush2.msra.mxu0 0.0
  %272 = vmatprep.subr.mxu0 0.0
  %273 = vmatpush2.msra.mxu0 0.0
  %274 = vmatprep.subr.mxu0 0.0
  %275 = vmatpush2.msra.mxu0 0.0
  %276 = vmatprep.subr.mxu0 0.0
  %277 = vmatpush2.msra.mxu0 0.0
  %278 = vmatprep.subr.mxu0 0.0
  %279 = vmatpush2.msra.mxu0 0.0
  %280 = vmatprep.subr.mxu0 0.0
  %281 = vmatpush2.msra.mxu0 0.0
  %282 = vmatprep.subr.mxu0 0.0
  %283 = vmatpush2.msra.mxu0 0.0
  %284 = vmatprep.subr.mxu0 0.0
  %285 = vmatpush2.msra.mxu0 0.0
  %286 = vmatprep.subr.mxu0 0.0
  %287 = vmatpush2.msra.mxu0 0.0
  %288 = vmatprep.subr.mxu0 0.0
  %289 = vmatpush2.msra.mxu0 0.0
  %290 = vmatprep.subr.mxu0 0.0
  %291 = vmatpush2.msra.mxu0 0.0
  %292 = vmatprep.subr.mxu0 0.0
  %293 = vmatpush2.msra.mxu0 0.0
  %294 = vmatprep.mubr.f32.mxu0 0.0
  %295 = vmatmul.mubr.f32.gmra.mxu0 %v207
  %v296 = vpop.f32.mrf.mxu0
  %v297 = vadd.f32 %v168, %v296
  %v298 = vpop.f32.mrf.mxu0
  %299 = vmatprep.mubr.f32.mxu0 0.0
  %300 = vmatmul.mubr.f32.gmra.mxu0 %v210
  %v301 = vpop.f32.mrf.mxu0
  %v302 = vadd.f32 %v173, %v301
  %v303 = vpop.f32.mrf.mxu0
  %304 = vmatprep.mubr.f32.mxu0 0.0
  %305 = vmatmul.mubr.f32.gmra.mxu0 %v213
  %v306 = vpop.f32.mrf.mxu0
  %v307 = vadd.f32 %v178, %v306
  %v308 = vpop.f32.mrf.mxu0
  %309 = vmatprep.mubr.f32.mxu0 0.0
  %310 = vmatmul.mubr.f32.gmra.mxu0 %v216
  %v311 = vpop.f32.mrf.mxu0
  %v312 = vadd.f32 %v183, %v311
  %v313 = vpop.f32.mrf.mxu0
  %314 = vmatprep.mubr.f32.mxu0 0.0
  %315 = vmatmul.mubr.f32.gmra.mxu0 %v219
  %v316 = vpop.f32.mrf.mxu0
  %v317 = vadd.f32 %v188, %v316
  %v318 = vpop.f32.mrf.mxu0
  %319 = vmatprep.mubr.f32.mxu0 0.0
  %320 = vmatmul.mubr.f32.gmra.mxu0 %v222
  %v321 = vpop.f32.mrf.mxu0
  %v322 = vadd.f32 %v193, %v321
  %v323 = vpop.f32.mrf.mxu0
  %324 = vmatprep.mubr.f32.mxu0 0.0
  %325 = vmatmul.mubr.f32.gmra.mxu0 %v225
  %v326 = vpop.f32.mrf.mxu0
  %v327 = vadd.f32 %v198, %v326
  %v328 = vpop.f32.mrf.mxu0
  %329 = vmatprep.mubr.f32.mxu0 0.0
  %330 = vmatmul.mubr.f32.gmra.mxu0 %v228
  %v331 = vpop.f32.mrf.mxu0
  %v332 = vadd.f32 %v203, %v331
  %v333 = vpop.f32.mrf.mxu0
  %334 = vdwg.mxu0
  %v335 = vld [vmem:[%s5] sm:$0xff]
  %v336 = vld [vmem:[%s5 + $0x8] sm:$0xff]
  %v337 = vld [vmem:[%s5 + $0x10] sm:$0xff]
  %v338 = vld [vmem:[%s5 + $0x18] sm:$0xff]
  %v340 = vsel %vm76, %v60, 0
  %v343 = vsel %vm76, %v61, 0
  %v346 = vsel %vm76, %v62, 0
  %v349 = vsel %vm76, %v63, 0
  %v352 = vsel %vm76, %v64, 0
  %v355 = vsel %vm76, %v65, 0
  %v358 = vsel %vm76, %v66, 0
  %v361 = vsel %vm76, %v67, 0
  %363 = vmatprep.subr.mxu0 0.0
  %364 = vmatpush1.msra.mxu0 0.0
  %365 = vmatprep.subr.mxu0 0.0
  %366 = vmatpush1.msra.mxu0 0.0
  %367 = vmatprep.subr.mxu0 0.0
  %368 = vmatpush1.msra.mxu0 0.0
  %369 = vmatprep.subr.mxu0 0.0
  %370 = vmatpush1.msra.mxu0 0.0
  %371 = vmatprep.subr.mxu0 0.0
  %372 = vmatpush1.msra.mxu0 0.0
  %373 = vmatprep.subr.mxu0 0.0
  %374 = vmatpush1.msra.mxu0 0.0
  %375 = vmatprep.subr.mxu0 0.0
  %376 = vmatpush1.msra.mxu0 0.0
  %377 = vmatprep.subr.mxu0 0.0
  %378 = vmatpush1.msra.mxu0 0.0
  %379 = vmatprep.subr.mxu0 0.0
  %380 = vmatpush1.msra.mxu0 0.0
  %381 = vmatprep.subr.mxu0 0.0
  %382 = vmatpush1.msra.mxu0 0.0
  %383 = vmatprep.subr.mxu0 0.0
  %384 = vmatpush1.msra.mxu0 0.0
  %385 = vmatprep.subr.mxu0 0.0
  %386 = vmatpush1.msra.mxu0 0.0
  %387 = vmatprep.subr.mxu0 0.0
  %388 = vmatpush1.msra.mxu0 %v338
  %389 = vmatprep.subr.mxu0 0.0
  %390 = vmatpush1.msra.mxu0 %v337
  %391 = vmatprep.subr.mxu0 0.0
  %392 = vmatpush1.msra.mxu0 %v336
  %393 = vmatprep.subr.mxu0 0.0
  %394 = vmatpush1.msra.mxu0 %v335
  %395 = vmatprep.subr.mxu0 0.0
  %396 = vmatpush2.msra.mxu0 0.0
  %397 = vmatprep.subr.mxu0 0.0
  %398 = vmatpush2.msra.mxu0 0.0
  %399 = vmatprep.subr.mxu0 0.0
  %400 = vmatpush2.msra.mxu0 0.0
  %401 = vmatprep.subr.mxu0 0.0
  %402 = vmatpush2.msra.mxu0 0.0
  %403 = vmatprep.subr.mxu0 0.0
  %404 = vmatpush2.msra.mxu0 0.0
  %405 = vmatprep.subr.mxu0 0.0
  %406 = vmatpush2.msra.mxu0 0.0
  %407 = vmatprep.subr.mxu0 0.0
  %408 = vmatpush2.msra.mxu0 0.0
  %409 = vmatprep.subr.mxu0 0.0
  %410 = vmatpush2.msra.mxu0 0.0
  %411 = vmatprep.subr.mxu0 0.0
  %412 = vmatpush2.msra.mxu0 0.0
  %413 = vmatprep.subr.mxu0 0.0
  %414 = vmatpush2.msra.mxu0 0.0
  %415 = vmatprep.subr.mxu0 0.0
  %416 = vmatpush2.msra.mxu0 0.0
  %417 = vmatprep.subr.mxu0 0.0
  %418 = vmatpush2.msra.mxu0 0.0
  %419 = vmatprep.subr.mxu0 0.0
  %420 = vmatpush2.msra.mxu0 0.0
  %421 = vmatprep.subr.mxu0 0.0
  %422 = vmatpush2.msra.mxu0 0.0
  %423 = vmatprep.subr.mxu0 0.0
  %424 = vmatpush2.msra.mxu0 0.0
  %425 = vmatprep.subr.mxu0 0.0
  %426 = vmatpush2.msra.mxu0 0.0
  %427 = vmatprep.mubr.f32.mxu0 0.0
  %428 = vmatmul.mubr.f32.gmra.mxu0 %v340
  %v429 = vpop.f32.mrf.mxu0
  %v430 = vadd.f32 0.0, %v429
  %v431 = vpop.f32.mrf.mxu0
  %432 = vmatprep.mubr.f32.mxu0 0.0
  %433 = vmatmul.mubr.f32.gmra.mxu0 %v343
  %v434 = vpop.f32.mrf.mxu0
  %v435 = vadd.f32 0.0, %v434
  %v436 = vpop.f32.mrf.mxu0
  %437 = vmatprep.mubr.f32.mxu0 0.0
  %438 = vmatmul.mubr.f32.gmra.mxu0 %v346
  %v439 = vpop.f32.mrf.mxu0
  %v440 = vadd.f32 0.0, %v439
  %v441 = vpop.f32.mrf.mxu0
  %442 = vmatprep.mubr.f32.mxu0 0.0
  %443 = vmatmul.mubr.f32.gmra.mxu0 %v349
  %v444 = vpop.f32.mrf.mxu0
  %v445 = vadd.f32 0.0, %v444
  %v446 = vpop.f32.mrf.mxu0
  %447 = vmatprep.mubr.f32.mxu0 0.0
  %448 = vmatmul.mubr.f32.gmra.mxu0 %v352
  %v449 = vpop.f32.mrf.mxu0
  %v450 = vadd.f32 0.0, %v449
  %v451 = vpop.f32.mrf.mxu0
  %452 = vmatprep.mubr.f32.mxu0 0.0
  %453 = vmatmul.mubr.f32.gmra.mxu0 %v355
  %v454 = vpop.f32.mrf.mxu0
  %v455 = vadd.f32 0.0, %v454
  %v456 = vpop.f32.mrf.mxu0
  %457 = vmatprep.mubr.f32.mxu0 0.0
  %458 = vmatmul.mubr.f32.gmra.mxu0 %v358
  %v459 = vpop.f32.mrf.mxu0
  %v460 = vadd.f32 0.0, %v459
  %v461 = vpop.f32.mrf.mxu0
  %462 = vmatprep.mubr.f32.mxu0 0.0
  %463 = vmatmul.mubr.f32.gmra.mxu0 %v361
  %v464 = vpop.f32.mrf.mxu0
  %v465 = vadd.f32 0.0, %v464
  %v466 = vpop.f32.mrf.mxu0
  %467 = vdwg.mxu0
  %v468 = vadd.f32 %v297, %v430
  %v469 = vadd.f32 %v302, %v435
  %v470 = vadd.f32 %v307, %v440
  %v471 = vadd.f32 %v312, %v445
  %v472 = vadd.f32 %v317, %v450
  %v473 = vadd.f32 %v322, %v455
  %v474 = vadd.f32 %v327, %v460
  %v475 = vadd.f32 %v332, %v465
  %v476 = vld [vmem:[%s6] sm:$0x1]
  %v478 = vlaneseq
  %v479 = vshrl.u32 %v478, 7
  %v480 = vsub.s32 0, %v479
  %v481 = vrot.slane %v476, %v480
  %v483 = vadd.f32 %v468, %v481
  %v484 = vadd.f32 %v469, %v481
  %v485 = vadd.f32 %v470, %v481
  %v486 = vadd.f32 %v471, %v481
  %v487 = vadd.f32 %v472, %v481
  %v488 = vadd.f32 %v473, %v481
  %v489 = vadd.f32 %v474, %v481
  %v490 = vadd.f32 %v475, %v481
  %v491 = vmax.f32 %v483, 0.0
  %v492 = vmax.f32 %v484, 0.0
  %v493 = vmax.f32 %v485, 0.0
  %v494 = vmax.f32 %v486, 0.0
  %v495 = vmax.f32 %v487, 0.0
  %v496 = vmax.f32 %v488, 0.0
  %v497 = vmax.f32 %v489, 0.0
  %v498 = vmax.f32 %v490, 0.0
  %v499 = vld [vmem:[%s7] sm:$0xff]
  %v500 = vld [vmem:[%s7 + $0x8] sm:$0xff]
  %v501 = vld [vmem:[%s7 + $0x10] sm:$0xff]
  %v502 = vld [vmem:[%s7 + $0x18] sm:$0xff]
  %v503 = vld [vmem:[%s8] sm:$0x1]
  %v505 = vlaneseq
  %v506 = vshrl.u32 %v505, 7
  %v507 = vsub.s32 0, %v506
  %v508 = vrot.slane %v503, %v507
  %v511 = vsel %vm76, %v491, 0
  %v514 = vsel %vm76, %v492, 0
  %v517 = vsel %vm76, %v493, 0
  %v520 = vsel %vm76, %v494, 0
  %v523 = vsel %vm76, %v495, 0
  %v526 = vsel %vm76, %v496, 0
  %v529 = vsel %vm76, %v497, 0
  %v532 = vsel %vm76, %v498, 0
  %534 = vmatprep.subr.mxu0 0.0
  %535 = vmatpush1.msra.mxu0 0.0
  %536 = vmatprep.subr.mxu0 0.0
  %537 = vmatpush1.msra.mxu0 0.0
  %538 = vmatprep.subr.mxu0 0.0
  %539 = vmatpush1.msra.mxu0 0.0
  %540 = vmatprep.subr.mxu0 0.0
  %541 = vmatpush1.msra.mxu0 0.0
  %542 = vmatprep.subr.mxu0 0.0
  %543 = vmatpush1.msra.mxu0 0.0
  %544 = vmatprep.subr.mxu0 0.0
  %545 = vmatpush1.msra.mxu0 0.0
  %546 = vmatprep.subr.mxu0 0.0
  %547 = vmatpush1.msra.mxu0 0.0
  %548 = vmatprep.subr.mxu0 0.0
  %549 = vmatpush1.msra.mxu0 0.0
  %550 = vmatprep.subr.mxu0 0.0
  %551 = vmatpush1.msra.mxu0 0.0
  %552 = vmatprep.subr.mxu0 0.0
  %553 = vmatpush1.msra.mxu0 0.0
  %554 = vmatprep.subr.mxu0 0.0
  %555 = vmatpush1.msra.mxu0 0.0
  %556 = vmatprep.subr.mxu0 0.0
  %557 = vmatpush1.msra.mxu0 0.0
  %558 = vmatprep.subr.mxu0 0.0
  %559 = vmatpush1.msra.mxu0 %v502
  %560 = vmatprep.subr.mxu0 0.0
  %561 = vmatpush1.msra.mxu0 %v501
  %562 = vmatprep.subr.mxu0 0.0
  %563 = vmatpush1.msra.mxu0 %v500
  %564 = vmatprep.subr.mxu0 0.0
  %565 = vmatpush1.msra.mxu0 %v499
  %566 = vmatprep.subr.mxu0 0.0
  %567 = vmatpush2.msra.mxu0 0.0
  %568 = vmatprep.subr.mxu0 0.0
  %569 = vmatpush2.msra.mxu0 0.0
  %570 = vmatprep.subr.mxu0 0.0
  %571 = vmatpush2.msra.mxu0 0.0
  %572 = vmatprep.subr.mxu0 0.0
  %573 = vmatpush2.msra.mxu0 0.0
  %574 = vmatprep.subr.mxu0 0.0
  %575 = vmatpush2.msra.mxu0 0.0
  %576 = vmatprep.subr.mxu0 0.0
  %577 = vmatpush2.msra.mxu0 0.0
  %578 = vmatprep.subr.mxu0 0.0
  %579 = vmatpush2.msra.mxu0 0.0
  %580 = vmatprep.subr.mxu0 0.0
  %581 = vmatpush2.msra.mxu0 0.0
  %582 = vmatprep.subr.mxu0 0.0
  %583 = vmatpush2.msra.mxu0 0.0
  %584 = vmatprep.subr.mxu0 0.0
  %585 = vmatpush2.msra.mxu0 0.0
  %586 = vmatprep.subr.mxu0 0.0
  %587 = vmatpush2.msra.mxu0 0.0
  %588 = vmatprep.subr.mxu0 0.0
  %589 = vmatpush2.msra.mxu0 0.0
  %590 = vmatprep.subr.mxu0 0.0
  %591 = vmatpush2.msra.mxu0 0.0
  %592 = vmatprep.subr.mxu0 0.0
  %593 = vmatpush2.msra.mxu0 0.0
  %594 = vmatprep.subr.mxu0 0.0
  %595 = vmatpush2.msra.mxu0 0.0
  %596 = vmatprep.subr.mxu0 0.0
  %597 = vmatpush2.msra.mxu0 0.0
  %598 = vmatprep.mubr.f32.mxu0 0.0
  %599 = vmatmul.mubr.f32.gmra.mxu0 %v511
  %v600 = vpop.f32.mrf.mxu0
  %v601 = vadd.f32 %v508, %v600
  %v602 = vpop.f32.mrf.mxu0
  %603 = vmatprep.mubr.f32.mxu0 0.0
  %604 = vmatmul.mubr.f32.gmra.mxu0 %v514
  %v605 = vpop.f32.mrf.mxu0
  %v606 = vadd.f32 %v508, %v605
  %v607 = vpop.f32.mrf.mxu0
  %608 = vmatprep.mubr.f32.mxu0 0.0
  %609 = vmatmul.mubr.f32.gmra.mxu0 %v517
  %v610 = vpop.f32.mrf.mxu0
  %v611 = vadd.f32 %v508, %v610
  %v612 = vpop.f32.mrf.mxu0
  %613 = vmatprep.mubr.f32.mxu0 0.0
  %614 = vmatmul.mubr.f32.gmra.mxu0 %v520
  %v615 = vpop.f32.mrf.mxu0
  %v616 = vadd.f32 %v508, %v615
  %v617 = vpop.f32.mrf.mxu0
  %618 = vmatprep.mubr.f32.mxu0 0.0
  %619 = vmatmul.mubr.f32.gmra.mxu0 %v523
  %v620 = vpop.f32.mrf.mxu0
  %v621 = vadd.f32 %v508, %v620
  %v622 = vpop.f32.mrf.mxu0
  %623 = vmatprep.mubr.f32.mxu0 0.0
  %624 = vmatmul.mubr.f32.gmra.mxu0 %v526
  %v625 = vpop.f32.mrf.mxu0
  %v626 = vadd.f32 %v508, %v625
  %v627 = vpop.f32.mrf.mxu0
  %628 = vmatprep.mubr.f32.mxu0 0.0
  %629 = vmatmul.mubr.f32.gmra.mxu0 %v529
  %v630 = vpop.f32.mrf.mxu0
  %v631 = vadd.f32 %v508, %v630
  %v632 = vpop.f32.mrf.mxu0
  %633 = vmatprep.mubr.f32.mxu0 0.0
  %634 = vmatmul.mubr.f32.gmra.mxu0 %v532
  %v635 = vpop.f32.mrf.mxu0
  %v636 = vadd.f32 %v508, %v635
  %v637 = vpop.f32.mrf.mxu0
  %638 = vdwg.mxu0
  %v639 = vmax.f32 %v601, 0.0
  %v640 = vmax.f32 %v606, 0.0
  %v641 = vmax.f32 %v611, 0.0
  %v642 = vmax.f32 %v616, 0.0
  %v643 = vmax.f32 %v621, 0.0
  %v644 = vmax.f32 %v626, 0.0
  %v645 = vmax.f32 %v631, 0.0
  %v646 = vmax.f32 %v636, 0.0
  %v647 = vld [vmem:[%s9] sm:$0xff]
  %v648 = vld [vmem:[%s9 + $0x8] sm:$0xff]
  %v649 = vld [vmem:[%s9 + $0x10] sm:$0xff]
  %v650 = vld [vmem:[%s9 + $0x18] sm:$0xff]
  %v651 = vld [vmem:[%s10] sm:$0x1]
  %v653 = vlaneseq
  %v654 = vshrl.u32 %v653, 7
  %v655 = vsub.s32 0, %v654
  %v656 = vrot.slane %v651, %v655
  %v659 = vsel %vm76, %v639, 0
  %v662 = vsel %vm76, %v640, 0
  %v665 = vsel %vm76, %v641, 0
  %v668 = vsel %vm76, %v642, 0
  %v671 = vsel %vm76, %v643, 0
  %v674 = vsel %vm76, %v644, 0
  %v677 = vsel %vm76, %v645, 0
  %v680 = vsel %vm76, %v646, 0
  %682 = vmatprep.subr.mxu0 0.0
  %683 = vmatpush1.msra.mxu0 0.0
  %684 = vmatprep.subr.mxu0 0.0
  %685 = vmatpush1.msra.mxu0 0.0
  %686 = vmatprep.subr.mxu0 0.0
  %687 = vmatpush1.msra.mxu0 0.0
  %688 = vmatprep.subr.mxu0 0.0
  %689 = vmatpush1.msra.mxu0 0.0
  %690 = vmatprep.subr.mxu0 0.0
  %691 = vmatpush1.msra.mxu0 0.0
  %692 = vmatprep.subr.mxu0 0.0
  %693 = vmatpush1.msra.mxu0 0.0
  %694 = vmatprep.subr.mxu0 0.0
  %695 = vmatpush1.msra.mxu0 0.0
  %696 = vmatprep.subr.mxu0 0.0
  %697 = vmatpush1.msra.mxu0 0.0
  %698 = vmatprep.subr.mxu0 0.0
  %699 = vmatpush1.msra.mxu0 0.0
  %700 = vmatprep.subr.mxu0 0.0
  %701 = vmatpush1.msra.mxu0 0.0
  %702 = vmatprep.subr.mxu0 0.0
  %703 = vmatpush1.msra.mxu0 0.0
  %704 = vmatprep.subr.mxu0 0.0
  %705 = vmatpush1.msra.mxu0 0.0
  %706 = vmatprep.subr.mxu0 0.0
  %707 = vmatpush1.msra.mxu0 %v650
  %708 = vmatprep.subr.mxu0 0.0
  %709 = vmatpush1.msra.mxu0 %v649
  %710 = vmatprep.subr.mxu0 0.0
  %711 = vmatpush1.msra.mxu0 %v648
  %712 = vmatprep.subr.mxu0 0.0
  %713 = vmatpush1.msra.mxu0 %v647
  %714 = vmatprep.subr.mxu0 0.0
  %715 = vmatpush2.msra.mxu0 0.0
  %716 = vmatprep.subr.mxu0 0.0
  %717 = vmatpush2.msra.mxu0 0.0
  %718 = vmatprep.subr.mxu0 0.0
  %719 = vmatpush2.msra.mxu0 0.0
  %720 = vmatprep.subr.mxu0 0.0
  %721 = vmatpush2.msra.mxu0 0.0
  %722 = vmatprep.subr.mxu0 0.0
  %723 = vmatpush2.msra.mxu0 0.0
  %724 = vmatprep.subr.mxu0 0.0
  %725 = vmatpush2.msra.mxu0 0.0
  %726 = vmatprep.subr.mxu0 0.0
  %727 = vmatpush2.msra.mxu0 0.0
  %728 = vmatprep.subr.mxu0 0.0
  %729 = vmatpush2.msra.mxu0 0.0
  %730 = vmatprep.subr.mxu0 0.0
  %731 = vmatpush2.msra.mxu0 0.0
  %732 = vmatprep.subr.mxu0 0.0
  %733 = vmatpush2.msra.mxu0 0.0
  %734 = vmatprep.subr.mxu0 0.0
  %735 = vmatpush2.msra.mxu0 0.0
  %736 = vmatprep.subr.mxu0 0.0
  %737 = vmatpush2.msra.mxu0 0.0
  %738 = vmatprep.subr.mxu0 0.0
  %739 = vmatpush2.msra.mxu0 0.0
  %740 = vmatprep.subr.mxu0 0.0
  %741 = vmatpush2.msra.mxu0 0.0
  %742 = vmatprep.subr.mxu0 0.0
  %743 = vmatpush2.msra.mxu0 0.0
  %744 = vmatprep.subr.mxu0 0.0
  %745 = vmatpush2.msra.mxu0 0.0
  %746 = vmatprep.mubr.f32.mxu0 0.0
  %747 = vmatmul.mubr.f32.gmra.mxu0 %v659
  %v748 = vpop.f32.mrf.mxu0
  %v749 = vadd.f32 %v656, %v748
  %v750 = vpop.f32.mrf.mxu0
  %751 = vmatprep.mubr.f32.mxu0 0.0
  %752 = vmatmul.mubr.f32.gmra.mxu0 %v662
  %v753 = vpop.f32.mrf.mxu0
  %v754 = vadd.f32 %v656, %v753
  %v755 = vpop.f32.mrf.mxu0
  %756 = vmatprep.mubr.f32.mxu0 0.0
  %757 = vmatmul.mubr.f32.gmra.mxu0 %v665
  %v758 = vpop.f32.mrf.mxu0
  %v759 = vadd.f32 %v656, %v758
  %v760 = vpop.f32.mrf.mxu0
  %761 = vmatprep.mubr.f32.mxu0 0.0
  %762 = vmatmul.mubr.f32.gmra.mxu0 %v668
  %v763 = vpop.f32.mrf.mxu0
  %v764 = vadd.f32 %v656, %v763
  %v765 = vpop.f32.mrf.mxu0
  %766 = vmatprep.mubr.f32.mxu0 0.0
  %767 = vmatmul.mubr.f32.gmra.mxu0 %v671
  %v768 = vpop.f32.mrf.mxu0
  %v769 = vadd.f32 %v656, %v768
  %v770 = vpop.f32.mrf.mxu0
  %771 = vmatprep.mubr.f32.mxu0 0.0
  %772 = vmatmul.mubr.f32.gmra.mxu0 %v674
  %v773 = vpop.f32.mrf.mxu0
  %v774 = vadd.f32 %v656, %v773
  %v775 = vpop.f32.mrf.mxu0
  %776 = vmatprep.mubr.f32.mxu0 0.0
  %777 = vmatmul.mubr.f32.gmra.mxu0 %v677
  %v778 = vpop.f32.mrf.mxu0
  %v779 = vadd.f32 %v656, %v778
  %v780 = vpop.f32.mrf.mxu0
  %781 = vmatprep.mubr.f32.mxu0 0.0
  %782 = vmatmul.mubr.f32.gmra.mxu0 %v680
  %v783 = vpop.f32.mrf.mxu0
  %v784 = vadd.f32 %v656, %v783
  %v785 = vpop.f32.mrf.mxu0
  %786 = vdwg.mxu0
  %v787 = vld [vmem:[%s11] sm:$0x1]
  %v788 = vld [vmem:[%s12] sm:$0x1]
  %v789 = vsel %vm76, %v749, 0.0
  %790 = vadd.xlane.f32.xlu0 %v789
  %v791 = vpop.xlane.xlu0 %790
  %v792 = vsel %vm76, %v754, 0.0
  %793 = vadd.xlane.f32.xlu0 %v792
  %v794 = vpop.xlane.xlu0 %793
  %v795 = vsel %vm76, %v759, 0.0
  %796 = vadd.xlane.f32.xlu0 %v795
  %v797 = vpop.xlane.xlu0 %796
  %v798 = vsel %vm76, %v764, 0.0
  %799 = vadd.xlane.f32.xlu0 %v798
  %v800 = vpop.xlane.xlu0 %799
  %v801 = vsel %vm76, %v769, 0.0
  %802 = vadd.xlane.f32.xlu0 %v801
  %v803 = vpop.xlane.xlu0 %802
  %v804 = vsel %vm76, %v774, 0.0
  %805 = vadd.xlane.f32.xlu0 %v804
  %v806 = vpop.xlane.xlu0 %805
  %v807 = vsel %vm76, %v779, 0.0
  %808 = vadd.xlane.f32.xlu0 %v807
  %v809 = vpop.xlane.xlu0 %808
  %v810 = vsel %vm76, %v784, 0.0
  %811 = vadd.xlane.f32.xlu0 %v810
  %v812 = vpop.xlane.xlu0 %811
  %v813 = vrcp.pop 32.0
  %v814 = vmul.f32 %v791, %v813
  %v815 = vmul.f32 %v794, %v813
  %v816 = vmul.f32 %v797, %v813
  %v817 = vmul.f32 %v800, %v813
  %v818 = vmul.f32 %v803, %v813
  %v819 = vmul.f32 %v806, %v813
  %v820 = vmul.f32 %v809, %v813
  %v821 = vmul.f32 %v812, %v813
  %v822 = vsub.f32 %v749, %v814
  %v823 = vsub.f32 %v754, %v815
  %v824 = vsub.f32 %v759, %v816
  %v825 = vsub.f32 %v764, %v817
  %v826 = vsub.f32 %v769, %v818
  %v827 = vsub.f32 %v774, %v819
  %v828 = vsub.f32 %v779, %v820
  %v829 = vsub.f32 %v784, %v821
  %v830 = vmul.f32 %v822, %v822
  %v831 = vmul.f32 %v823, %v823
  %v832 = vmul.f32 %v824, %v824
  %v833 = vmul.f32 %v825, %v825
  %v834 = vmul.f32 %v826, %v826
  %v835 = vmul.f32 %v827, %v827
  %v836 = vmul.f32 %v828, %v828
  %v837 = vmul.f32 %v829, %v829
  %v838 = vsel %vm76, %v830, 0.0
  %839 = vadd.xlane.f32.xlu0 %v838
  %v840 = vpop.xlane.xlu0 %839
  %v841 = vsel %vm76, %v831, 0.0
  %842 = vadd.xlane.f32.xlu0 %v841
  %v843 = vpop.xlane.xlu0 %842
  %v844 = vsel %vm76, %v832, 0.0
  %845 = vadd.xlane.f32.xlu0 %v844
  %v846 = vpop.xlane.xlu0 %845
  %v847 = vsel %vm76, %v833, 0.0
  %848 = vadd.xlane.f32.xlu0 %v847
  %v849 = vpop.xlane.xlu0 %848
  %v850 = vsel %vm76, %v834, 0.0
  %851 = vadd.xlane.f32.xlu0 %v850
  %v852 = vpop.xlane.xlu0 %851
  %v853 = vsel %vm76, %v835, 0.0
  %854 = vadd.xlane.f32.xlu0 %v853
  %v855 = vpop.xlane.xlu0 %854
  %v856 = vsel %vm76, %v836, 0.0
  %857 = vadd.xlane.f32.xlu0 %v856
  %v858 = vpop.xlane.xlu0 %857
  %v859 = vsel %vm76, %v837, 0.0
  %860 = vadd.xlane.f32.xlu0 %v859
  %v861 = vpop.xlane.xlu0 %860
  %v862 = vmul.f32 %v840, %v813
  %v863 = vmul.f32 %v843, %v813
  %v864 = vmul.f32 %v846, %v813
  %v865 = vmul.f32 %v849, %v813
  %v866 = vmul.f32 %v852, %v813
  %v867 = vmul.f32 %v855, %v813
  %v868 = vmul.f32 %v858, %v813
  %v869 = vmul.f32 %v861, %v813
  %v870 = vadd.f32 %v862, 1e-05
  %v871 = vadd.f32 %v863, 1e-05
  %v872 = vadd.f32 %v864, 1e-05
  %v873 = vadd.f32 %v865, 1e-05
  %v874 = vadd.f32 %v866, 1e-05
  %v875 = vadd.f32 %v867, 1e-05
  %v876 = vadd.f32 %v868, 1e-05
  %v877 = vadd.f32 %v869, 1e-05
  %v878 = vrsqrt.pop %v870
  %v879 = vrsqrt.pop %v871
  %v880 = vrsqrt.pop %v872
  %v881 = vrsqrt.pop %v873
  %v882 = vrsqrt.pop %v874
  %v883 = vrsqrt.pop %v875
  %v884 = vrsqrt.pop %v876
  %v885 = vrsqrt.pop %v877
  %v886 = vmul.f32 %v822, %v878
  %v887 = vmul.f32 %v823, %v879
  %v888 = vmul.f32 %v824, %v880
  %v889 = vmul.f32 %v825, %v881
  %v890 = vmul.f32 %v826, %v882
  %v891 = vmul.f32 %v827, %v883
  %v892 = vmul.f32 %v828, %v884
  %v893 = vmul.f32 %v829, %v885
  %v895 = vlaneseq
  %v896 = vshrl.u32 %v895, 7
  %v897 = vsub.s32 0, %v896
  %v898 = vrot.slane %v787, %v897
  %v900 = vmul.f32 %v886, %v898
  %v901 = vmul.f32 %v887, %v898
  %v902 = vmul.f32 %v888, %v898
  %v903 = vmul.f32 %v889, %v898
  %v904 = vmul.f32 %v890, %v898
  %v905 = vmul.f32 %v891, %v898
  %v906 = vmul.f32 %v892, %v898
  %v907 = vmul.f32 %v893, %v898
  %v909 = vlaneseq
  %v910 = vshrl.u32 %v909, 7
  %v911 = vsub.s32 0, %v910
  %v912 = vrot.slane %v788, %v911
  %v914 = vadd.f32 %v900, %v912
  %v915 = vadd.f32 %v901, %v912
  %v916 = vadd.f32 %v902, %v912
  %v917 = vadd.f32 %v903, %v912
  %v918 = vadd.f32 %v904, %v912
  %v919 = vadd.f32 %v905, %v912
  %v920 = vadd.f32 %v906, %v912
  %v921 = vadd.f32 %v907, %v912
  %922 = vst.msk [vmem:[%s13] sm:$0xff] %vm76, %v914
  %923 = vst.msk [vmem:[%s13 + $0x8] sm:$0xff] %vm76, %v915
  %924 = vst.msk [vmem:[%s13 + $0x10] sm:$0xff] %vm76, %v916
  %925 = vst.msk [vmem:[%s13 + $0x18] sm:$0xff] %vm76, %v917
  %926 = vst.msk [vmem:[%s13 + $0x20] sm:$0xff] %vm76, %v918
  %927 = vst.msk [vmem:[%s13 + $0x28] sm:$0xff] %vm76, %v919
  %928 = vst.msk [vmem:[%s13 + $0x30] sm:$0xff] %vm76, %v920
  %929 = vst.msk [vmem:[%s13 + $0x38] sm:$0xff] %vm76, %v921
  // Predicated region
  $region54: #{forward.9} parent=0 // pred_check
    _
  $region55: #{forward.9} parent=0 // pred_check_branch
    %931 = sbr.rel (0) target = $region57
  $region56: #{forward.9} parent=0 // pred_region
    _
  $region57: #{forward.9} parent=0 // pred_fallthru
    _
  // Predicated region
  $region58: #{forward.9} parent=0 // pred_check
    _
  $region59: #{forward.9} parent=0 // pred_check_branch
    %933 = sbr.rel (0) target = $region61
  $region60: #{forward.9} parent=0 // pred_region
    _
  $region61: #{forward.9} parent=0 // pred_fallthru
    _

// kernel: forward.10
$region0: #{forward.10}
  #allocation0 [shape = 'u32[]', space=smem, size = 0x4, offset = 0x4, fixed_abs, tag = 'smem constant byte address 0x4 - core index']
  #allocation1 [shape = 'u32[144,128]{1,0:T(1,128)}', space=vmem, size = 0x12000, scoped, tag = 'internal scratch']
  #allocation2 [shape = 'f32[32,32]{1,0:T(8,128)}', space=vmem, size = 0x4000, scoped, tag = 'scratch operand']
  %s0 = inlined_call_operand.vmem [shape: s32[1,128], index: 0, kind: input, shape index: {}]
  %s1 = inlined_call_operand.vmem [shape: f32[128,32], index: 1, kind: input, shape index: {}]
  %s2 = inlined_call_operand.vmem [shape: f32[32,32], index: 2, kind: input, shape index: {}]
  %s3 = inlined_call_operand.vmem [shape: f32[32,32], index: 3, kind: input, shape index: {}]
  %s4 = inlined_call_operand.vmem [shape: f32[32,32], index: 4, kind: input, shape index: {}]
  %s5 = inlined_call_operand.vmem [shape: f32[1,32], index: 5, kind: input, shape index: {}]
  %s6 = inlined_call_operand.vmem [shape: f32[32,32], index: 6, kind: input, shape index: {}]
  %s7 = inlined_call_operand.vmem [shape: f32[1,32], index: 7, kind: input, shape index: {}]
  %s8 = inlined_call_operand.vmem [shape: f32[32,32], index: 8, kind: input, shape index: {}]
  %s9 = inlined_call_operand.vmem [shape: f32[1,32], index: 9, kind: input, shape index: {}]
  %s10 = inlined_call_operand.vmem [shape: f32[1,32], index: 10, kind: input, shape index: {}]
  %s11 = inlined_call_operand.vmem [shape: f32[1,32], index: 11, kind: input, shape index: {}]
  %s12 = inlined_call_operand.vmem [shape: f32[32,32], index: 12, kind: output, shape index: {}]
  %s13 = sld [smem:[#allocation0]]
  $region66: #{forward.10} parent=0
    _
  %s15 = ssub.s32 1, %s13
  %s16 = scalar_select 0, %s15, %s13
  // Predicated region
  $region2: #{forward.10} parent=0 // pred_check
    _
  $region3: #{forward.10} parent=0 // pred_check_branch
    %18 = sbr.rel (0) target = $region5
  $region4: #{forward.10} parent=0 // pred_region
    _
  $region5: #{forward.10} parent=0 // pred_fallthru
    _
  // Predicated region
  $region6: #{forward.10} parent=0 // pred_check
    _
  $region7: #{forward.10} parent=0 // pred_check_branch
    %20 = sbr.rel (0) target = $region9
  $region8: #{forward.10} parent=0 // pred_region
    _
  $region9: #{forward.10} parent=0 // pred_fallthru
    _
  // Predicated region
  $region10: #{forward.10} parent=0 // pred_check
    _
  $region11: #{forward.10} parent=0 // pred_check_branch
    %22 = sbr.rel (0) target = $region13
  $region12: #{forward.10} parent=0 // pred_region
    _
  $region13: #{forward.10} parent=0 // pred_fallthru
    _
  // Predicated region
  $region14: #{forward.10} parent=0 // pred_check
    _
  $region15: #{forward.10} parent=0 // pred_check_branch
    %24 = sbr.rel (0) target = $region17
  $region16: #{forward.10} parent=0 // pred_region
    _
  $region17: #{forward.10} parent=0 // pred_fallthru
    _
  // Predicated region
  $region18: #{forward.10} parent=0 // pred_check
    _
  $region19: #{forward.10} parent=0 // pred_check_branch
    %26 = sbr.rel (0) target = $region21
  $region20: #{forward.10} parent=0 // pred_region
    _
  $region21: #{forward.10} parent=0 // pred_fallthru
    _
  // Predicated region
  $region22: #{forward.10} parent=0 // pred_check
    _
  $region23: #{forward.10} parent=0 // pred_check_branch
    %28 = sbr.rel (0) target = $region25
  $region24: #{forward.10} parent=0 // pred_region
    _
  $region25: #{forward.10} parent=0 // pred_fallthru
    _
  // Predicated region
  $region26: #{forward.10} parent=0 // pred_check
    _
  $region27: #{forward.10} parent=0 // pred_check_branch
    %30 = sbr.rel (0) target = $region29
  $region28: #{forward.10} parent=0 // pred_region
    _
  $region29: #{forward.10} parent=0 // pred_fallthru
    _
  // Predicated region
  $region30: #{forward.10} parent=0 // pred_check
    _
  $region31: #{forward.10} parent=0 // pred_check_branch
    %32 = sbr.rel (0) target = $region33
  $region32: #{forward.10} parent=0 // pred_region
    _
  $region33: #{forward.10} parent=0 // pred_fallthru
    _
  // Predicated region
  $region34: #{forward.10} parent=0 // pred_check
    _
  $region35: #{forward.10} parent=0 // pred_check_branch
    %34 = sbr.rel (0) target = $region37
  $region36: #{forward.10} parent=0 // pred_region
    _
  $region37: #{forward.10} parent=0 // pred_fallthru
    _
  // Predicated region
  $region38: #{forward.10} parent=0 // pred_check
    _
  $region39: #{forward.10} parent=0 // pred_check_branch
    %36 = sbr.rel (0) target = $region41
  $region40: #{forward.10} parent=0 // pred_region
    _
  $region41: #{forward.10} parent=0 // pred_fallthru
    _
  // Predicated region
  $region42: #{forward.10} parent=0 // pred_check
    _
  $region43: #{forward.10} parent=0 // pred_check_branch
    %38 = sbr.rel (0) target = $region45
  $region44: #{forward.10} parent=0 // pred_region
    _
  $region45: #{forward.10} parent=0 // pred_fallthru
    _
  // Predicated region
  $region46: #{forward.10} parent=0 // pred_check
    _
  $region47: #{forward.10} parent=0 // pred_check_branch
    %40 = sbr.rel (0) target = $region49
  $region48: #{forward.10} parent=0 // pred_region
    _
  $region49: #{forward.10} parent=0 // pred_fallthru
    _
  %p42 = scmp.eq.s32.totalorder 0, 0
  // Predicated region
  $region50: #{forward.10} parent=0 // pred_check
    %p43 = pneg %p42
  $region51: #{forward.10} parent=0 // pred_check_branch
    %45 = sbr.rel (%p43) target = $region53
  $region52: #{forward.10} parent=0 // pred_region
    %vm46 = vcmask 261120
    %47 = vst.msk [vmem:[#allocation2] sm:$0xff] %vm46, 0.0
    %48 = vst.msk [vmem:[#allocation2 + $0x8] sm:$0xff] %vm46, 0.0
    %49 = vst.msk [vmem:[#allocation2 + $0x10] sm:$0xff] %vm46, 0.0
    %50 = vst.msk [vmem:[#allocation2 + $0x18] sm:$0xff] %vm46, 0.0
  $region53: #{forward.10} parent=0 // pred_fallthru
    _
  %v51 = vld [vmem:[%s0] sm:$0x1]
  %v52 = vld [vmem:[%s1] sm:$0xff]
  %v53 = vld [vmem:[%s1 + $0x8] sm:$0xff]
  %v54 = vld [vmem:[%s1 + $0x10] sm:$0xff]
  %v55 = vld [vmem:[%s1 + $0x18] sm:$0xff]
  %v56 = vld [vmem:[%s1 + $0x20] sm:$0xff]
  %v57 = vld [vmem:[%s1 + $0x28] sm:$0xff]
  %v58 = vld [vmem:[%s1 + $0x30] sm:$0xff]
  %v59 = vld [vmem:[%s1 + $0x38] sm:$0xff]
  %v60 = vld [vmem:[%s1 + $0x40] sm:$0xff]
  %v61 = vld [vmem:[%s1 + $0x48] sm:$0xff]
  %v62 = vld [vmem:[%s1 + $0x50] sm:$0xff]
  %v63 = vld [vmem:[%s1 + $0x58] sm:$0xff]
  %v64 = vld [vmem:[%s1 + $0x60] sm:$0xff]
  %v65 = vld [vmem:[%s1 + $0x68] sm:$0xff]
  %v66 = vld [vmem:[%s1 + $0x70] sm:$0xff]
  %v67 = vld [vmem:[%s1 + $0x78] sm:$0xff]
  %v68 = vpack.c.bf16 %v53, %v52
  %v69 = vpack.c.bf16 %v55, %v54
  %v70 = vpack.c.bf16 %v57, %v56
  %v71 = vpack.c.bf16 %v59, %v58
  %v72 = vpack.c.bf16 %v61, %v60
  %v73 = vpack.c.bf16 %v63, %v62
  %v74 = vpack.c.bf16 %v65, %v64
  %v75 = vpack.c.bf16 %v67, %v66
  %s76 = smul.u32 0, 32
  %v77 = vlaneseq
  %v78 = vshrl.u32 %v77, 7
  %v79 = vadd.s32 %v78, 8
  %v80 = vadd.s32 %v78, 16
  %v81 = vadd.s32 %v78, 24
  %v82 = vstv %s76
  %v83 = vadd.s32 %v82, %v78
  %v84 = vadd.s32 %v82, %v79
  %v85 = vadd.s32 %v82, %v80
  %v86 = vadd.s32 %v82, %v81
  %v87 = vlaneseq
  %v88 = vshrl.u32 %v87, 7
  %v89 = vsub.s32 0, %v88
  %v90 = vrot.slane %v51, %v89
  %vm91 = vcmp.eq.s32.totalorder %v83, %v90
  %vm92 = vcmp.eq.s32.totalorder %v84, %v90
  %vm93 = vcmp.eq.s32.totalorder %v85, %v90
  %vm94 = vcmp.eq.s32.totalorder %v86, %v90
  %v95 = vsel %vm91, 1, 0
  %v96 = vsel %vm92, 1, 0
  %v97 = vsel %vm93, 1, 0
  %v98 = vsel %vm94, 1, 0
  %v99 = vcvt.s32.f32 %v95
  %v100 = vcvt.s32.f32 %v96
  %v101 = vcvt.s32.f32 %v97
  %v102 = vcvt.s32.f32 %v98
  %v103 = vpack.c.bf16 %v100, %v99
  %v104 = vpack.c.bf16 %v102, %v101
  %v105 = vld [vmem:[#allocation2] sm:$0xff]
  %v106 = vld [vmem:[#allocation2 + $0x8] sm:$0xff]
  %v107 = vld [vmem:[#allocation2 + $0x10] sm:$0xff]
  %v108 = vld [vmem:[#allocation2 + $0x18] sm:$0xff]
  %109 = vmatprep.subr.bf16.mxu0 0
  %110 = vmatpush1.bf16.msra.mxu0 %v75
  %111 = vmatprep.subr.bf16.mxu0 0
  %112 = vmatpush1.bf16.msra.mxu0 %v74
  %113 = vmatprep.subr.bf16.mxu0 0
  %114 = vmatpush1.bf16.msra.mxu0 %v73
  %115 = vmatprep.subr.bf16.mxu0 0
  %116 = vmatpush1.bf16.msra.mxu0 %v72
  %117 = vmatprep.subr.bf16.mxu0 0
  %118 = vmatpush1.bf16.msra.mxu0 %v71
  %119 = vmatprep.subr.bf16.mxu0 0
  %120 = vmatpush1.bf16.msra.mxu0 %v70
  %121 = vmatprep.subr.bf16.mxu0 0
  %122 = vmatpush1.bf16.msra.mxu0 %v69
  %123 = vmatprep.subr.bf16.mxu0 0
  %124 = vmatpush1.bf16.msra.mxu0 %v68
  %125 = vmatprep.subr.bf16.mxu0 0
  %126 = vmatpush2.bf16.msra.mxu0 0
  %127 = vmatprep.subr.bf16.mxu0 0
  %128 = vmatpush2.bf16.msra.mxu0 0
  %129 = vmatprep.subr.bf16.mxu0 0
  %130 = vmatpush2.bf16.msra.mxu0 0
  %131 = vmatprep.subr.bf16.mxu0 0
  %132 = vmatpush2.bf16.msra.mxu0 0
  %133 = vmatprep.subr.bf16.mxu0 0
  %134 = vmatpush2.bf16.msra.mxu0 0
  %135 = vmatprep.subr.bf16.mxu0 0
  %136 = vmatpush2.bf16.msra.mxu0 0
  %137 = vmatprep.subr.bf16.mxu0 0
  %138 = vmatpush2.bf16.msra.mxu0 0
  %139 = vmatprep.subr.bf16.mxu0 0
  %140 = vmatpush2.bf16.msra.mxu0 0
  %141 = vmatprep.mubr.bf16.mxu0 0
  %142 = vmatmul.mubr.bf16.gmra.mxu0 %v103
  %v143 = vpop.f32.mrf.mxu0
  %v144 = vadd.f32 0.0, %v143
  %v145 = vpop.f32.mrf.mxu0
  %v146 = vpop.f32.mrf.mxu0
  %v147 = vadd.f32 0.0, %v146
  %v148 = vpop.f32.mrf.mxu0
  %149 = vmatprep.mubr.bf16.mxu0 0
  %150 = vmatmul.mubr.bf16.gmra.mxu0 %v104
  %v151 = vpop.f32.mrf.mxu0
  %v152 = vadd.f32 0.0, %v151
  %v153 = vpop.f32.mrf.mxu0
  %v154 = vpop.f32.mrf.mxu0
  %v155 = vadd.f32 0.0, %v154
  %v156 = vpop.f32.mrf.mxu0
  %157 = vdwg.mxu0
  %v158 = vadd.f32 %v105, %v144
  %v159 = vadd.f32 %v106, %v147
  %v160 = vadd.f32 %v107, %v152
  %v161 = vadd.f32 %v108, %v155
  %vm162 = vcmask 261120
  %163 = vst.msk [vmem:[#allocation2] sm:$0xff] %vm162, %v158
  %164 = vst.msk [vmem:[#allocation2 + $0x8] sm:$0xff] %vm162, %v159
  %165 = vst.msk [vmem:[#allocation2 + $0x10] sm:$0xff] %vm162, %v160
  %166 = vst.msk [vmem:[#allocation2 + $0x18] sm:$0xff] %vm162, %v161
  // Predicated region
  $region54: #{forward.10} parent=0 // pred_check
    %p167 = pneg %p42
  $region55: #{forward.10} parent=0 // pred_check_branch
    %169 = sbr.rel (%p167) target = $region57
  $region56: #{forward.10} parent=0 // pred_region
    %v170 = vld [vmem:[%s2] sm:$0xff]
    %v171 = vld [vmem:[%s2 + $0x8] sm:$0xff]
    %v172 = vld [vmem:[%s2 + $0x10] sm:$0xff]
    %v173 = vld [vmem:[%s2 + $0x18] sm:$0xff]
    %v174 = vld [vmem:[#allocation2] sm:$0xff]
    %v175 = vld [vmem:[#allocation2 + $0x8] sm:$0xff]
    %v176 = vld [vmem:[#allocation2 + $0x10] sm:$0xff]
    %v177 = vld [vmem:[#allocation2 + $0x18] sm:$0xff]
    %v178 = vld [vmem:[%s3] sm:$0xff]
    %v179 = vld [vmem:[%s3 + $0x8] sm:$0xff]
    %v180 = vld [vmem:[%s3 + $0x10] sm:$0xff]
    %v181 = vld [vmem:[%s3 + $0x18] sm:$0xff]
    %v182 = vld [vmem:[%s4] sm:$0xff]
    %v183 = vld [vmem:[%s4 + $0x8] sm:$0xff]
    %v184 = vld [vmem:[%s4 + $0x10] sm:$0xff]
    %v185 = vld [vmem:[%s4 + $0x18] sm:$0xff]
    %v186 = vld [vmem:[%s5] sm:$0x1]
    %v188 = vsel %vm162, %v170, 0
    %v191 = vsel %vm162, %v171, 0
    %v194 = vsel %vm162, %v172, 0
    %v197 = vsel %vm162, %v173, 0
    %199 = vmatprep.subr.mxu0 0.0
    %200 = vmatpush1.msra.mxu0 0.0
    %201 = vmatprep.subr.mxu0 0.0
    %202 = vmatpush1.msra.mxu0 0.0
    %203 = vmatprep.subr.mxu0 0.0
    %204 = vmatpush1.msra.mxu0 0.0
    %205 = vmatprep.subr.mxu0 0.0
    %206 = vmatpush1.msra.mxu0 0.0
    %207 = vmatprep.subr.mxu0 0.0
    %208 = vmatpush1.msra.mxu0 0.0
    %209 = vmatprep.subr.mxu0 0.0
    %210 = vmatpush1.msra.mxu0 0.0
    %211 = vmatprep.subr.mxu0 0.0
    %212 = vmatpush1.msra.mxu0 0.0
    %213 = vmatprep.subr.mxu0 0.0
    %214 = vmatpush1.msra.mxu0 0.0
    %215 = vmatprep.subr.mxu0 0.0
    %216 = vmatpush1.msra.mxu0 0.0
    %217 = vmatprep.subr.mxu0 0.0
    %218 = vmatpush1.msra.mxu0 0.0
    %219 = vmatprep.subr.mxu0 0.0
    %220 = vmatpush1.msra.mxu0 0.0
    %221 = vmatprep.subr.mxu0 0.0
    %222 = vmatpush1.msra.mxu0 0.0
    %223 = vmatprep.subr.mxu0 0.0
    %224 = vmatpush1.msra.mxu0 %v185
    %225 = vmatprep.subr.mxu0 0.0
    %226 = vmatpush1.msra.mxu0 %v184
    %227 = vmatprep.subr.mxu0 0.0
    %228 = vmatpush1.msra.mxu0 %v183
    %229 = vmatprep.subr.mxu0 0.0
    %230 = vmatpush1.msra.mxu0 %v182
    %231 = vmatprep.subr.mxu0 0.0
    %232 = vmatpush2.msra.mxu0 0.0
    %233 = vmatprep.subr.mxu0 0.0
    %234 = vmatpush2.msra.mxu0 0.0
    %235 = vmatprep.subr.mxu0 0.0
    %236 = vmatpush2.msra.mxu0 0.0
    %237 = vmatprep.subr.mxu0 0.0
    %238 = vmatpush2.msra.mxu0 0.0
    %239 = vmatprep.subr.mxu0 0.0
    %240 = vmatpush2.msra.mxu0 0.0
    %241 = vmatprep.subr.mxu0 0.0
    %242 = vmatpush2.msra.mxu0 0.0
    %243 = vmatprep.subr.mxu0 0.0
    %244 = vmatpush2.msra.mxu0 0.0
    %245 = vmatprep.subr.mxu0 0.0
    %246 = vmatpush2.msra.mxu0 0.0
    %247 = vmatprep.subr.mxu0 0.0
    %248 = vmatpush2.msra.mxu0 0.0
    %249 = vmatprep.subr.mxu0 0.0
    %250 = vmatpush2.msra.mxu0 0.0
    %251 = vmatprep.subr.mxu0 0.0
    %252 = vmatpush2.msra.mxu0 0.0
    %253 = vmatprep.subr.mxu0 0.0
    %254 = vmatpush2.msra.mxu0 0.0
    %255 = vmatprep.subr.mxu0 0.0
    %256 = vmatpush2.msra.mxu0 0.0
    %257 = vmatprep.subr.mxu0 0.0
    %258 = vmatpush2.msra.mxu0 0.0
    %259 = vmatprep.subr.mxu0 0.0
    %260 = vmatpush2.msra.mxu0 0.0
    %261 = vmatprep.subr.mxu0 0.0
    %262 = vmatpush2.msra.mxu0 0.0
    %263 = vmatprep.mubr.f32.mxu0 0.0
    %264 = vmatmul.mubr.f32.gmra.mxu0 %v188
    %v265 = vpop.f32.mrf.mxu0
    %v266 = vadd.f32 0.0, %v265
    %v267 = vpop.f32.mrf.mxu0
    %268 = vmatprep.mubr.f32.mxu0 0.0
    %269 = vmatmul.mubr.f32.gmra.mxu0 %v191
    %v270 = vpop.f32.mrf.mxu0
    %v271 = vadd.f32 0.0, %v270
    %v272 = vpop.f32.mrf.mxu0
    %273 = vmatprep.mubr.f32.mxu0 0.0
    %274 = vmatmul.mubr.f32.gmra.mxu0 %v194
    %v275 = vpop.f32.mrf.mxu0
    %v276 = vadd.f32 0.0, %v275
    %v277 = vpop.f32.mrf.mxu0
    %278 = vmatprep.mubr.f32.mxu0 0.0
    %279 = vmatmul.mubr.f32.gmra.mxu0 %v197
    %v280 = vpop.f32.mrf.mxu0
    %v281 = vadd.f32 0.0, %v280
    %v282 = vpop.f32.mrf.mxu0
    %283 = vdwg.mxu0
    %v285 = vsel %vm162, %v174, 0
    %v288 = vsel %vm162, %v175, 0
    %v291 = vsel %vm162, %v176, 0
    %v294 = vsel %vm162, %v177, 0
    %296 = vmatprep.subr.mxu0 0.0
    %297 = vmatpush1.msra.mxu0 0.0
    %298 = vmatprep.subr.mxu0 0.0
    %299 = vmatpush1.msra.mxu0 0.0
    %300 = vmatprep.subr.mxu0 0.0
    %301 = vmatpush1.msra.mxu0 0.0
    %302 = vmatprep.subr.mxu0 0.0
    %303 = vmatpush1.msra.mxu0 0.0
    %304 = vmatprep.subr.mxu0 0.0
    %305 = vmatpush1.msra.mxu0 0.0
    %306 = vmatprep.subr.mxu0 0.0
    %307 = vmatpush1.msra.mxu0 0.0
    %308 = vmatprep.subr.mxu0 0.0
    %309 = vmatpush1.msra.mxu0 0.0
    %310 = vmatprep.subr.mxu0 0.0
    %311 = vmatpush1.msra.mxu0 0.0
    %312 = vmatprep.subr.mxu0 0.0
    %313 = vmatpush1.msra.mxu0 0.0
    %314 = vmatprep.subr.mxu0 0.0
    %315 = vmatpush1.msra.mxu0 0.0
    %316 = vmatprep.subr.mxu0 0.0
    %317 = vmatpush1.msra.mxu0 0.0
    %318 = vmatprep.subr.mxu0 0.0
    %319 = vmatpush1.msra.mxu0 0.0
    %320 = vmatprep.subr.mxu0 0.0
    %321 = vmatpush1.msra.mxu0 %v181
    %322 = vmatprep.subr.mxu0 0.0
    %323 = vmatpush1.msra.mxu0 %v180
    %324 = vmatprep.subr.mxu0 0.0
    %325 = vmatpush1.msra.mxu0 %v179
    %326 = vmatprep.subr.mxu0 0.0
    %327 = vmatpush1.msra.mxu0 %v178
    %328 = vmatprep.subr.mxu0 0.0
    %329 = vmatpush2.msra.mxu0 0.0
    %330 = vmatprep.subr.mxu0 0.0
    %331 = vmatpush2.msra.mxu0 0.0
    %332 = vmatprep.subr.mxu0 0.0
    %333 = vmatpush2.msra.mxu0 0.0
    %334 = vmatprep.subr.mxu0 0.0
    %335 = vmatpush2.msra.mxu0 0.0
    %336 = vmatprep.subr.mxu0 0.0
    %337 = vmatpush2.msra.mxu0 0.0
    %338 = vmatprep.subr.mxu0 0.0
    %339 = vmatpush2.msra.mxu0 0.0
    %340 = vmatprep.subr.mxu0 0.0
    %341 = vmatpush2.msra.mxu0 0.0
    %342 = vmatprep.subr.mxu0 0.0
    %343 = vmatpush2.msra.mxu0 0.0
    %344 = vmatprep.subr.mxu0 0.0
    %345 = vmatpush2.msra.mxu0 0.0
    %346 = vmatprep.subr.mxu0 0.0
    %347 = vmatpush2.msra.mxu0 0.0
    %348 = vmatprep.subr.mxu0 0.0
    %349 = vmatpush2.msra.mxu0 0.0
    %350 = vmatprep.subr.mxu0 0.0
    %351 = vmatpush2.msra.mxu0 0.0
    %352 = vmatprep.subr.mxu0 0.0
    %353 = vmatpush2.msra.mxu0 0.0
    %354 = vmatprep.subr.mxu0 0.0
    %355 = vmatpush2.msra.mxu0 0.0
    %356 = vmatprep.subr.mxu0 0.0
    %357 = vmatpush2.msra.mxu0 0.0
    %358 = vmatprep.subr.mxu0 0.0
    %359 = vmatpush2.msra.mxu0 0.0
    %360 = vmatprep.mubr.f32.mxu0 0.0
    %361 = vmatmul.mubr.f32.gmra.mxu0 %v285
    %v362 = vpop.f32.mrf.mxu0
    %v363 = vadd.f32 %v266, %v362
    %v364 = vpop.f32.mrf.mxu0
    %365 = vmatprep.mubr.f32.mxu0 0.0
    %366 = vmatmul.mubr.f32.gmra.mxu0 %v288
    %v367 = vpop.f32.mrf.mxu0
    %v368 = vadd.f32 %v271, %v367
    %v369 = vpop.f32.mrf.mxu0
    %370 = vmatprep.mubr.f32.mxu0 0.0
    %371 = vmatmul.mubr.f32.gmra.mxu0 %v291
    %v372 = vpop.f32.mrf.mxu0
    %v373 = vadd.f32 %v276, %v372
    %v374 = vpop.f32.mrf.mxu0
    %375 = vmatprep.mubr.f32.mxu0 0.0
    %376 = vmatmul.mubr.f32.gmra.mxu0 %v294
    %v377 = vpop.f32.mrf.mxu0
    %v378 = vadd.f32 %v281, %v377
    %v379 = vpop.f32.mrf.mxu0
    %380 = vdwg.mxu0
    %v382 = vlaneseq
    %v383 = vshrl.u32 %v382, 7
    %v384 = vsub.s32 0, %v383
    %v385 = vrot.slane %v186, %v384
    %v387 = vadd.f32 %v363, %v385
    %v388 = vadd.f32 %v368, %v385
    %v389 = vadd.f32 %v373, %v385
    %v390 = vadd.f32 %v378, %v385
    %v391 = vmax.f32 %v387, 0.0
    %v392 = vmax.f32 %v388, 0.0
    %v393 = vmax.f32 %v389, 0.0
    %v394 = vmax.f32 %v390, 0.0
    %v395 = vld [vmem:[%s6] sm:$0xff]
    %v396 = vld [vmem:[%s6 + $0x8] sm:$0xff]
    %v397 = vld [vmem:[%s6 + $0x10] sm:$0xff]
    %v398 = vld [vmem:[%s6 + $0x18] sm:$0xff]
    %v399 = vld [vmem:[%s7] sm:$0x1]
    %v401 = vlaneseq
    %v402 = vshrl.u32 %v401, 7
    %v403 = vsub.s32 0, %v402
    %v404 = vrot.slane %v399, %v403
    %v407 = vsel %vm162, %v391, 0
    %v410 = vsel %vm162, %v392, 0
    %v413 = vsel %vm162, %v393, 0
    %v416 = vsel %vm162, %v394, 0
    %418 = vmatprep.subr.mxu0 0.0
    %419 = vmatpush1.msra.mxu0 0.0
    %420 = vmatprep.subr.mxu0 0.0
    %421 = vmatpush1.msra.mxu0 0.0
    %422 = vmatprep.subr.mxu0 0.0
    %423 = vmatpush1.msra.mxu0 0.0
    %424 = vmatprep.subr.mxu0 0.0
    %425 = vmatpush1.msra.mxu0 0.0
    %426 = vmatprep.subr.mxu0 0.0
    %427 = vmatpush1.msra.mxu0 0.0
    %428 = vmatprep.subr.mxu0 0.0
    %429 = vmatpush1.msra.mxu0 0.0
    %430 = vmatprep.subr.mxu0 0.0
    %431 = vmatpush1.msra.mxu0 0.0
    %432 = vmatprep.subr.mxu0 0.0
    %433 = vmatpush1.msra.mxu0 0.0
    %434 = vmatprep.subr.mxu0 0.0
    %435 = vmatpush1.msra.mxu0 0.0
    %436 = vmatprep.subr.mxu0 0.0
    %437 = vmatpush1.msra.mxu0 0.0
    %438 = vmatprep.subr.mxu0 0.0
    %439 = vmatpush1.msra.mxu0 0.0
    %440 = vmatprep.subr.mxu0 0.0
    %441 = vmatpush1.msra.mxu0 0.0
    %442 = vmatprep.subr.mxu0 0.0
    %443 = vmatpush1.msra.mxu0 %v398
    %444 = vmatprep.subr.mxu0 0.0
    %445 = vmatpush1.msra.mxu0 %v397
    %446 = vmatprep.subr.mxu0 0.0
    %447 = vmatpush1.msra.mxu0 %v396
    %448 = vmatprep.subr.mxu0 0.0
    %449 = vmatpush1.msra.mxu0 %v395
    %450 = vmatprep.subr.mxu0 0.0
    %451 = vmatpush2.msra.mxu0 0.0
    %452 = vmatprep.subr.mxu0 0.0
    %453 = vmatpush2.msra.mxu0 0.0
    %454 = vmatprep.subr.mxu0 0.0
    %455 = vmatpush2.msra.mxu0 0.0
    %456 = vmatprep.subr.mxu0 0.0
    %457 = vmatpush2.msra.mxu0 0.0
    %458 = vmatprep.subr.mxu0 0.0
    %459 = vmatpush2.msra.mxu0 0.0
    %460 = vmatprep.subr.mxu0 0.0
    %461 = vmatpush2.msra.mxu0 0.0
    %462 = vmatprep.subr.mxu0 0.0
    %463 = vmatpush2.msra.mxu0 0.0
    %464 = vmatprep.subr.mxu0 0.0
    %465 = vmatpush2.msra.mxu0 0.0
    %466 = vmatprep.subr.mxu0 0.0
    %467 = vmatpush2.msra.mxu0 0.0
    %468 = vmatprep.subr.mxu0 0.0
    %469 = vmatpush2.msra.mxu0 0.0
    %470 = vmatprep.subr.mxu0 0.0
    %471 = vmatpush2.msra.mxu0 0.0
    %472 = vmatprep.subr.mxu0 0.0
    %473 = vmatpush2.msra.mxu0 0.0
    %474 = vmatprep.subr.mxu0 0.0
    %475 = vmatpush2.msra.mxu0 0.0
    %476 = vmatprep.subr.mxu0 0.0
    %477 = vmatpush2.msra.mxu0 0.0
    %478 = vmatprep.subr.mxu0 0.0
    %479 = vmatpush2.msra.mxu0 0.0
    %480 = vmatprep.subr.mxu0 0.0
    %481 = vmatpush2.msra.mxu0 0.0
    %482 = vmatprep.mubr.f32.mxu0 0.0
    %483 = vmatmul.mubr.f32.gmra.mxu0 %v407
    %v484 = vpop.f32.mrf.mxu0
    %v485 = vadd.f32 %v404, %v484
    %v486 = vpop.f32.mrf.mxu0
    %487 = vmatprep.mubr.f32.mxu0 0.0
    %488 = vmatmul.mubr.f32.gmra.mxu0 %v410
    %v489 = vpop.f32.mrf.mxu0
    %v490 = vadd.f32 %v404, %v489
    %v491 = vpop.f32.mrf.mxu0
    %492 = vmatprep.mubr.f32.mxu0 0.0
    %493 = vmatmul.mubr.f32.gmra.mxu0 %v413
    %v494 = vpop.f32.mrf.mxu0
    %v495 = vadd.f32 %v404, %v494
    %v496 = vpop.f32.mrf.mxu0
    %497 = vmatprep.mubr.f32.mxu0 0.0
    %498 = vmatmul.mubr.f32.gmra.mxu0 %v416
    %v499 = vpop.f32.mrf.mxu0
    %v500 = vadd.f32 %v404, %v499
    %v501 = vpop.f32.mrf.mxu0
    %502 = vdwg.mxu0
    %v503 = vmax.f32 %v485, 0.0
    %v504 = vmax.f32 %v490, 0.0
    %v505 = vmax.f32 %v495, 0.0
    %v506 = vmax.f32 %v500, 0.0
    %v507 = vld [vmem:[%s8] sm:$0xff]
    %v508 = vld [vmem:[%s8 + $0x8] sm:$0xff]
    %v509 = vld [vmem:[%s8 + $0x10] sm:$0xff]
    %v510 = vld [vmem:[%s8 + $0x18] sm:$0xff]
    %v511 = vld [vmem:[%s9] sm:$0x1]
    %v513 = vlaneseq
    %v514 = vshrl.u32 %v513, 7
    %v515 = vsub.s32 0, %v514
    %v516 = vrot.slane %v511, %v515
    %v519 = vsel %vm162, %v503, 0
    %v522 = vsel %vm162, %v504, 0
    %v525 = vsel %vm162, %v505, 0
    %v528 = vsel %vm162, %v506, 0
    %530 = vmatprep.subr.mxu0 0.0
    %531 = vmatpush1.msra.mxu0 0.0
    %532 = vmatprep.subr.mxu0 0.0
    %533 = vmatpush1.msra.mxu0 0.0
    %534 = vmatprep.subr.mxu0 0.0
    %535 = vmatpush1.msra.mxu0 0.0
    %536 = vmatprep.subr.mxu0 0.0
    %537 = vmatpush1.msra.mxu0 0.0
    %538 = vmatprep.subr.mxu0 0.0
    %539 = vmatpush1.msra.mxu0 0.0
    %540 = vmatprep.subr.mxu0 0.0
    %541 = vmatpush1.msra.mxu0 0.0
    %542 = vmatprep.subr.mxu0 0.0
    %543 = vmatpush1.msra.mxu0 0.0
    %544 = vmatprep.subr.mxu0 0.0
    %545 = vmatpush1.msra.mxu0 0.0
    %546 = vmatprep.subr.mxu0 0.0
    %547 = vmatpush1.msra.mxu0 0.0
    %548 = vmatprep.subr.mxu0 0.0
    %549 = vmatpush1.msra.mxu0 0.0
    %550 = vmatprep.subr.mxu0 0.0
    %551 = vmatpush1.msra.mxu0 0.0
    %552 = vmatprep.subr.mxu0 0.0
    %553 = vmatpush1.msra.mxu0 0.0
    %554 = vmatprep.subr.mxu0 0.0
    %555 = vmatpush1.msra.mxu0 %v510
    %556 = vmatprep.subr.mxu0 0.0
    %557 = vmatpush1.msra.mxu0 %v509
    %558 = vmatprep.subr.mxu0 0.0
    %559 = vmatpush1.msra.mxu0 %v508
    %560 = vmatprep.subr.mxu0 0.0
    %561 = vmatpush1.msra.mxu0 %v507
    %562 = vmatprep.subr.mxu0 0.0
    %563 = vmatpush2.msra.mxu0 0.0
    %564 = vmatprep.subr.mxu0 0.0
    %565 = vmatpush2.msra.mxu0 0.0
    %566 = vmatprep.subr.mxu0 0.0
    %567 = vmatpush2.msra.mxu0 0.0
    %568 = vmatprep.subr.mxu0 0.0
    %569 = vmatpush2.msra.mxu0 0.0
    %570 = vmatprep.subr.mxu0 0.0
    %571 = vmatpush2.msra.mxu0 0.0
    %572 = vmatprep.subr.mxu0 0.0
    %573 = vmatpush2.msra.mxu0 0.0
    %574 = vmatprep.subr.mxu0 0.0
    %575 = vmatpush2.msra.mxu0 0.0
    %576 = vmatprep.subr.mxu0 0.0
    %577 = vmatpush2.msra.mxu0 0.0
    %578 = vmatprep.subr.mxu0 0.0
    %579 = vmatpush2.msra.mxu0 0.0
    %580 = vmatprep.subr.mxu0 0.0
    %581 = vmatpush2.msra.mxu0 0.0
    %582 = vmatprep.subr.mxu0 0.0
    %583 = vmatpush2.msra.mxu0 0.0
    %584 = vmatprep.subr.mxu0 0.0
    %585 = vmatpush2.msra.mxu0 0.0
    %586 = vmatprep.subr.mxu0 0.0
    %587 = vmatpush2.msra.mxu0 0.0
    %588 = vmatprep.subr.mxu0 0.0
    %589 = vmatpush2.msra.mxu0 0.0
    %590 = vmatprep.subr.mxu0 0.0
    %591 = vmatpush2.msra.mxu0 0.0
    %592 = vmatprep.subr.mxu0 0.0
    %593 = vmatpush2.msra.mxu0 0.0
    %594 = vmatprep.mubr.f32.mxu0 0.0
    %595 = vmatmul.mubr.f32.gmra.mxu0 %v519
    %v596 = vpop.f32.mrf.mxu0
    %v597 = vadd.f32 %v516, %v596
    %v598 = vpop.f32.mrf.mxu0
    %599 = vmatprep.mubr.f32.mxu0 0.0
    %600 = vmatmul.mubr.f32.gmra.mxu0 %v522
    %v601 = vpop.f32.mrf.mxu0
    %v602 = vadd.f32 %v516, %v601
    %v603 = vpop.f32.mrf.mxu0
    %604 = vmatprep.mubr.f32.mxu0 0.0
    %605 = vmatmul.mubr.f32.gmra.mxu0 %v525
    %v606 = vpop.f32.mrf.mxu0
    %v607 = vadd.f32 %v516, %v606
    %v608 = vpop.f32.mrf.mxu0
    %609 = vmatprep.mubr.f32.mxu0 0.0
    %610 = vmatmul.mubr.f32.gmra.mxu0 %v528
    %v611 = vpop.f32.mrf.mxu0
    %v612 = vadd.f32 %v516, %v611
    %v613 = vpop.f32.mrf.mxu0
    %614 = vdwg.mxu0
    %v615 = vld [vmem:[%s10] sm:$0x1]
    %v616 = vld [vmem:[%s11] sm:$0x1]
    %v617 = vsel %vm162, %v597, 0.0
    %618 = vadd.xlane.f32.xlu0 %v617
    %v619 = vpop.xlane.xlu0 %618
    %v620 = vsel %vm162, %v602, 0.0
    %621 = vadd.xlane.f32.xlu0 %v620
    %v622 = vpop.xlane.xlu0 %621
    %v623 = vsel %vm162, %v607, 0.0
    %624 = vadd.xlane.f32.xlu0 %v623
    %v625 = vpop.xlane.xlu0 %624
    %v626 = vsel %vm162, %v612, 0.0
    %627 = vadd.xlane.f32.xlu0 %v626
    %v628 = vpop.xlane.xlu0 %627
    %v629 = vrcp.pop 32.0
    %v630 = vmul.f32 %v619, %v629
    %v631 = vmul.f32 %v622, %v629
    %v632 = vmul.f32 %v625, %v629
    %v633 = vmul.f32 %v628, %v629
    %v634 = vsub.f32 %v597, %v630
    %v635 = vsub.f32 %v602, %v631
    %v636 = vsub.f32 %v607, %v632
    %v637 = vsub.f32 %v612, %v633
    %v638 = vmul.f32 %v634, %v634
    %v639 = vmul.f32 %v635, %v635
    %v640 = vmul.f32 %v636, %v636
    %v641 = vmul.f32 %v637, %v637
    %v642 = vsel %vm162, %v638, 0.0
    %643 = vadd.xlane.f32.xlu0 %v642
    %v644 = vpop.xlane.xlu0 %643
    %v645 = vsel %vm162, %v639, 0.0
    %646 = vadd.xlane.f32.xlu0 %v645
    %v647 = vpop.xlane.xlu0 %646
    %v648 = vsel %vm162, %v640, 0.0
    %649 = vadd.xlane.f32.xlu0 %v648
    %v650 = vpop.xlane.xlu0 %649
    %v651 = vsel %vm162, %v641, 0.0
    %652 = vadd.xlane.f32.xlu0 %v651
    %v653 = vpop.xlane.xlu0 %652
    %v654 = vmul.f32 %v644, %v629
    %v655 = vmul.f32 %v647, %v629
    %v656 = vmul.f32 %v650, %v629
    %v657 = vmul.f32 %v653, %v629
    %v658 = vadd.f32 %v654, 1e-05
    %v659 = vadd.f32 %v655, 1e-05
    %v660 = vadd.f32 %v656, 1e-05
    %v661 = vadd.f32 %v657, 1e-05
    %v662 = vrsqrt.pop %v658
    %v663 = vrsqrt.pop %v659
    %v664 = vrsqrt.pop %v660
    %v665 = vrsqrt.pop %v661
    %v666 = vmul.f32 %v634, %v662
    %v667 = vmul.f32 %v635, %v663
    %v668 = vmul.f32 %v636, %v664
    %v669 = vmul.f32 %v637, %v665
    %v671 = vlaneseq
    %v672 = vshrl.u32 %v671, 7
    %v673 = vsub.s32 0, %v672
    %v674 = vrot.slane %v615, %v673
    %v676 = vmul.f32 %v666, %v674
    %v677 = vmul.f32 %v667, %v674
    %v678 = vmul.f32 %v668, %v674
    %v679 = vmul.f32 %v669, %v674
    %v681 = vlaneseq
    %v682 = vshrl.u32 %v681, 7
    %v683 = vsub.s32 0, %v682
    %v684 = vrot.slane %v616, %v683
    %v686 = vadd.f32 %v676, %v684
    %v687 = vadd.f32 %v677, %v684
    %v688 = vadd.f32 %v678, %v684
    %v689 = vadd.f32 %v679, %v684
    %v690 = vadd.f32 %v686, %v170
    %v691 = vadd.f32 %v687, %v171
    %v692 = vadd.f32 %v688, %v172
    %v693 = vadd.f32 %v689, %v173
    %694 = vst.msk [vmem:[%s12] sm:$0xff] %vm162, %v690
    %695 = vst.msk [vmem:[%s12 + $0x8] sm:$0xff] %vm162, %v691
    %696 = vst.msk [vmem:[%s12 + $0x10] sm:$0xff] %vm162, %v692
    %697 = vst.msk [vmem:[%s12 + $0x18] sm:$0xff] %vm162, %v693
  $region57: #{forward.10} parent=0 // pred_fallthru
    _
  // Predicated region
  $region58: #{forward.10} parent=0 // pred_check
    _
  $region59: #{forward.10} parent=0 // pred_check_branch
    %699 = sbr.rel (0) target = $region61
  $region60: #{forward.10} parent=0 // pred_region
    _
  $region61: #{forward.10} parent=0 // pred_fallthru
    _
  // Predicated region
  $region62: #{forward.10} parent=0 // pred_check
    _
  $region63: #{forward.10} parent=0 // pred_check_branch
    %701 = sbr.rel (0) target = $region65
  $region64: #{forward.10} parent=0 // pred_region
    _
  $region65: #{forward.10} parent=0 // pred_fallthru
    _

// kernel: forward.13
$region0: #{forward.13}
  #allocation0 [shape = 'u32[]', space=smem, size = 0x4, offset = 0x4, fixed_abs, tag = 'smem constant byte address 0x4 - core index']
  #allocation1 [shape = 'u32[144,128]{1,0:T(1,128)}', space=vmem, size = 0x12000, scoped, tag = 'internal scratch']
  %s0 = inlined_call_operand.vmem [shape: f32[32,32], index: 0, kind: input, shape index: {}]
  %s1 = inlined_call_operand.vmem [shape: f32[32,32], index: 1, kind: input, shape index: {}]
  %s2 = inlined_call_operand.vmem [shape: f32[1,32], index: 2, kind: input, shape index: {}]
  %s3 = inlined_call_operand.vmem [shape: f32[32,32], index: 3, kind: input, shape index: {}]
  %s4 = inlined_call_operand.vmem [shape: f32[1,32], index: 4, kind: input, shape index: {}]
  %s5 = inlined_call_operand.vmem [shape: f32[32,3], index: 5, kind: input, shape index: {}]
  %s6 = inlined_call_operand.vmem [shape: f32[1,3], index: 6, kind: input, shape index: {}]
  %s7 = inlined_call_operand.vmem [shape: f32[32,3], index: 7, kind: output, shape index: {}]
  %s8 = sld [smem:[#allocation0]]
  $region38: #{forward.13} parent=0
    _
  %s10 = ssub.s32 1, %s8
  %s11 = scalar_select 0, %s10, %s8
  // Predicated region
  $region2: #{forward.13} parent=0 // pred_check
    _
  $region3: #{forward.13} parent=0 // pred_check_branch
    %13 = sbr.rel (0) target = $region5
  $region4: #{forward.13} parent=0 // pred_region
    _
  $region5: #{forward.13} parent=0 // pred_fallthru
    _
  // Predicated region
  $region6: #{forward.13} parent=0 // pred_check
    _
  $region7: #{forward.13} parent=0 // pred_check_branch
    %15 = sbr.rel (0) target = $region9
  $region8: #{forward.13} parent=0 // pred_region
    _
  $region9: #{forward.13} parent=0 // pred_fallthru
    _
  // Predicated region
  $region10: #{forward.13} parent=0 // pred_check
    _
  $region11: #{forward.13} parent=0 // pred_check_branch
    %17 = sbr.rel (0) target = $region13
  $region12: #{forward.13} parent=0 // pred_region
    _
  $region13: #{forward.13} parent=0 // pred_fallthru
    _
  // Predicated region
  $region14: #{forward.13} parent=0 // pred_check
    _
  $region15: #{forward.13} parent=0 // pred_check_branch
    %19 = sbr.rel (0) target = $region17
  $region16: #{forward.13} parent=0 // pred_region
    _
  $region17: #{forward.13} parent=0 // pred_fallthru
    _
  // Predicated region
  $region18: #{forward.13} parent=0 // pred_check
    _
  $region19: #{forward.13} parent=0 // pred_check_branch
    %21 = sbr.rel (0) target = $region21
  $region20: #{forward.13} parent=0 // pred_region
    _
  $region21: #{forward.13} parent=0 // pred_fallthru
    _
  // Predicated region
  $region22: #{forward.13} parent=0 // pred_check
    _
  $region23: #{forward.13} parent=0 // pred_check_branch
    %23 = sbr.rel (0) target = $region25
  $region24: #{forward.13} parent=0 // pred_region
    _
  $region25: #{forward.13} parent=0 // pred_fallthru
    _
  // Predicated region
  $region26: #{forward.13} parent=0 // pred_check
    _
  $region27: #{forward.13} parent=0 // pred_check_branch
    %25 = sbr.rel (0) target = $region29
  $region28: #{forward.13} parent=0 // pred_region
    _
  $region29: #{forward.13} parent=0 // pred_fallthru
    _
  %v26 = vld [vmem:[%s0] sm:$0xff]
  %v27 = vld [vmem:[%s0 + $0x8] sm:$0xff]
  %v28 = vld [vmem:[%s0 + $0x10] sm:$0xff]
  %v29 = vld [vmem:[%s0 + $0x18] sm:$0xff]
  %v30 = vld [vmem:[%s1] sm:$0xff]
  %v31 = vld [vmem:[%s1 + $0x8] sm:$0xff]
  %v32 = vld [vmem:[%s1 + $0x10] sm:$0xff]
  %v33 = vld [vmem:[%s1 + $0x18] sm:$0xff]
  %v34 = vld [vmem:[%s2] sm:$0x1]
  %v36 = vlaneseq
  %v37 = vshrl.u32 %v36, 7
  %v38 = vsub.s32 0, %v37
  %v39 = vrot.slane %v34, %v38
  %vm41 = vcmask 261120
  %v43 = vsel %vm41, %v26, 0
  %v46 = vsel %vm41, %v27, 0
  %v49 = vsel %vm41, %v28, 0
  %v52 = vsel %vm41, %v29, 0
  %54 = vmatprep.subr.mxu0 0.0
  %55 = vmatpush1.msra.mxu0 0.0
  %56 = vmatprep.subr.mxu0 0.0
  %57 = vmatpush1.msra.mxu0 0.0
  %58 = vmatprep.subr.mxu0 0.0
  %59 = vmatpush1.msra.mxu0 0.0
  %60 = vmatprep.subr.mxu0 0.0
  %61 = vmatpush1.msra.mxu0 0.0
  %62 = vmatprep.subr.mxu0 0.0
  %63 = vmatpush1.msra.mxu0 0.0
  %64 = vmatprep.subr.mxu0 0.0
  %65 = vmatpush1.msra.mxu0 0.0
  %66 = vmatprep.subr.mxu0 0.0
  %67 = vmatpush1.msra.mxu0 0.0
  %68 = vmatprep.subr.mxu0 0.0
  %69 = vmatpush1.msra.mxu0 0.0
  %70 = vmatprep.subr.mxu0 0.0
  %71 = vmatpush1.msra.mxu0 0.0
  %72 = vmatprep.subr.mxu0 0.0
  %73 = vmatpush1.msra.mxu0 0.0
  %74 = vmatprep.subr.mxu0 0.0
  %75 = vmatpush1.msra.mxu0 0.0
  %76 = vmatprep.subr.mxu0 0.0
  %77 = vmatpush1.msra.mxu0 0.0
  %78 = vmatprep.subr.mxu0 0.0
  %79 = vmatpush1.msra.mxu0 %v33
  %80 = vmatprep.subr.mxu0 0.0
  %81 = vmatpush1.msra.mxu0 %v32
  %82 = vmatprep.subr.mxu0 0.0
  %83 = vmatpush1.msra.mxu0 %v31
  %84 = vmatprep.subr.mxu0 0.0
  %85 = vmatpush1.msra.mxu0 %v30
  %86 = vmatprep.subr.mxu0 0.0
  %87 = vmatpush2.msra.mxu0 0.0
  %88 = vmatprep.subr.mxu0 0.0
  %89 = vmatpush2.msra.mxu0 0.0
  %90 = vmatprep.subr.mxu0 0.0
  %91 = vmatpush2.msra.mxu0 0.0
  %92 = vmatprep.subr.mxu0 0.0
  %93 = vmatpush2.msra.mxu0 0.0
  %94 = vmatprep.subr.mxu0 0.0
  %95 = vmatpush2.msra.mxu0 0.0
  %96 = vmatprep.subr.mxu0 0.0
  %97 = vmatpush2.msra.mxu0 0.0
  %98 = vmatprep.subr.mxu0 0.0
  %99 = vmatpush2.msra.mxu0 0.0
  %100 = vmatprep.subr.mxu0 0.0
  %101 = vmatpush2.msra.mxu0 0.0
  %102 = vmatprep.subr.mxu0 0.0
  %103 = vmatpush2.msra.mxu0 0.0
  %104 = vmatprep.subr.mxu0 0.0
  %105 = vmatpush2.msra.mxu0 0.0
  %106 = vmatprep.subr.mxu0 0.0
  %107 = vmatpush2.msra.mxu0 0.0
  %108 = vmatprep.subr.mxu0 0.0
  %109 = vmatpush2.msra.mxu0 0.0
  %110 = vmatprep.subr.mxu0 0.0
  %111 = vmatpush2.msra.mxu0 0.0
  %112 = vmatprep.subr.mxu0 0.0
  %113 = vmatpush2.msra.mxu0 0.0
  %114 = vmatprep.subr.mxu0 0.0
  %115 = vmatpush2.msra.mxu0 0.0
  %116 = vmatprep.subr.mxu0 0.0
  %117 = vmatpush2.msra.mxu0 0.0
  %118 = vmatprep.mubr.f32.mxu0 0.0
  %119 = vmatmul.mubr.f32.gmra.mxu0 %v43
  %v120 = vpop.f32.mrf.mxu0
  %v121 = vadd.f32 %v39, %v120
  %v122 = vpop.f32.mrf.mxu0
  %123 = vmatprep.mubr.f32.mxu0 0.0
  %124 = vmatmul.mubr.f32.gmra.mxu0 %v46
  %v125 = vpop.f32.mrf.mxu0
  %v126 = vadd.f32 %v39, %v125
  %v127 = vpop.f32.mrf.mxu0
  %128 = vmatprep.mubr.f32.mxu0 0.0
  %129 = vmatmul.mubr.f32.gmra.mxu0 %v49
  %v130 = vpop.f32.mrf.mxu0
  %v131 = vadd.f32 %v39, %v130
  %v132 = vpop.f32.mrf.mxu0
  %133 = vmatprep.mubr.f32.mxu0 0.0
  %134 = vmatmul.mubr.f32.gmra.mxu0 %v52
  %v135 = vpop.f32.mrf.mxu0
  %v136 = vadd.f32 %v39, %v135
  %v137 = vpop.f32.mrf.mxu0
  %138 = vdwg.mxu0
  %v139 = vmax.f32 %v121, 0.0
  %v140 = vmax.f32 %v126, 0.0
  %v141 = vmax.f32 %v131, 0.0
  %v142 = vmax.f32 %v136, 0.0
  %v143 = vld [vmem:[%s3] sm:$0xff]
  %v144 = vld [vmem:[%s3 + $0x8] sm:$0xff]
  %v145 = vld [vmem:[%s3 + $0x10] sm:$0xff]
  %v146 = vld [vmem:[%s3 + $0x18] sm:$0xff]
  %v147 = vld [vmem:[%s4] sm:$0x1]
  %v149 = vlaneseq
  %v150 = vshrl.u32 %v149, 7
  %v151 = vsub.s32 0, %v150
  %v152 = vrot.slane %v147, %v151
  %v155 = vsel %vm41, %v139, 0
  %v158 = vsel %vm41, %v140, 0
  %v161 = vsel %vm41, %v141, 0
  %v164 = vsel %vm41, %v142, 0
  %166 = vmatprep.subr.mxu0 0.0
  %167 = vmatpush1.msra.mxu0 0.0
  %168 = vmatprep.subr.mxu0 0.0
  %169 = vmatpush1.msra.mxu0 0.0
  %170 = vmatprep.subr.mxu0 0.0
  %171 = vmatpush1.msra.mxu0 0.0
  %172 = vmatprep.subr.mxu0 0.0
  %173 = vmatpush1.msra.mxu0 0.0
  %174 = vmatprep.subr.mxu0 0.0
  %175 = vmatpush1.msra.mxu0 0.0
  %176 = vmatprep.subr.mxu0 0.0
  %177 = vmatpush1.msra.mxu0 0.0
  %178 = vmatprep.subr.mxu0 0.0
  %179 = vmatpush1.msra.mxu0 0.0
  %180 = vmatprep.subr.mxu0 0.0
  %181 = vmatpush1.msra.mxu0 0.0
  %182 = vmatprep.subr.mxu0 0.0
  %183 = vmatpush1.msra.mxu0 0.0
  %184 = vmatprep.subr.mxu0 0.0
  %185 = vmatpush1.msra.mxu0 0.0
  %186 = vmatprep.subr.mxu0 0.0
  %187 = vmatpush1.msra.mxu0 0.0
  %188 = vmatprep.subr.mxu0 0.0
  %189 = vmatpush1.msra.mxu0 0.0
  %190 = vmatprep.subr.mxu0 0.0
  %191 = vmatpush1.msra.mxu0 %v146
  %192 = vmatprep.subr.mxu0 0.0
  %193 = vmatpush1.msra.mxu0 %v145
  %194 = vmatprep.subr.mxu0 0.0
  %195 = vmatpush1.msra.mxu0 %v144
  %196 = vmatprep.subr.mxu0 0.0
  %197 = vmatpush1.msra.mxu0 %v143
  %198 = vmatprep.subr.mxu0 0.0
  %199 = vmatpush2.msra.mxu0 0.0
  %200 = vmatprep.subr.mxu0 0.0
  %201 = vmatpush2.msra.mxu0 0.0
  %202 = vmatprep.subr.mxu0 0.0
  %203 = vmatpush2.msra.mxu0 0.0
  %204 = vmatprep.subr.mxu0 0.0
  %205 = vmatpush2.msra.mxu0 0.0
  %206 = vmatprep.subr.mxu0 0.0
  %207 = vmatpush2.msra.mxu0 0.0
  %208 = vmatprep.subr.mxu0 0.0
  %209 = vmatpush2.msra.mxu0 0.0
  %210 = vmatprep.subr.mxu0 0.0
  %211 = vmatpush2.msra.mxu0 0.0
  %212 = vmatprep.subr.mxu0 0.0
  %213 = vmatpush2.msra.mxu0 0.0
  %214 = vmatprep.subr.mxu0 0.0
  %215 = vmatpush2.msra.mxu0 0.0
  %216 = vmatprep.subr.mxu0 0.0
  %217 = vmatpush2.msra.mxu0 0.0
  %218 = vmatprep.subr.mxu0 0.0
  %219 = vmatpush2.msra.mxu0 0.0
  %220 = vmatprep.subr.mxu0 0.0
  %221 = vmatpush2.msra.mxu0 0.0
  %222 = vmatprep.subr.mxu0 0.0
  %223 = vmatpush2.msra.mxu0 0.0
  %224 = vmatprep.subr.mxu0 0.0
  %225 = vmatpush2.msra.mxu0 0.0
  %226 = vmatprep.subr.mxu0 0.0
  %227 = vmatpush2.msra.mxu0 0.0
  %228 = vmatprep.subr.mxu0 0.0
  %229 = vmatpush2.msra.mxu0 0.0
  %230 = vmatprep.mubr.f32.mxu0 0.0
  %231 = vmatmul.mubr.f32.gmra.mxu0 %v155
  %v232 = vpop.f32.mrf.mxu0
  %v233 = vadd.f32 %v152, %v232
  %v234 = vpop.f32.mrf.mxu0
  %235 = vmatprep.mubr.f32.mxu0 0.0
  %236 = vmatmul.mubr.f32.gmra.mxu0 %v158
  %v237 = vpop.f32.mrf.mxu0
  %v238 = vadd.f32 %v152, %v237
  %v239 = vpop.f32.mrf.mxu0
  %240 = vmatprep.mubr.f32.mxu0 0.0
  %241 = vmatmul.mubr.f32.gmra.mxu0 %v161
  %v242 = vpop.f32.mrf.mxu0
  %v243 = vadd.f32 %v152, %v242
  %v244 = vpop.f32.mrf.mxu0
  %245 = vmatprep.mubr.f32.mxu0 0.0
  %246 = vmatmul.mubr.f32.gmra.mxu0 %v164
  %v247 = vpop.f32.mrf.mxu0
  %v248 = vadd.f32 %v152, %v247
  %v249 = vpop.f32.mrf.mxu0
  %250 = vdwg.mxu0
  %v251 = vmax.f32 %v233, 0.0
  %v252 = vmax.f32 %v238, 0.0
  %v253 = vmax.f32 %v243, 0.0
  %v254 = vmax.f32 %v248, 0.0
  %v255 = vld [vmem:[%s5] sm:$0xff]
  %v256 = vld [vmem:[%s5 + $0x8] sm:$0xff]
  %v257 = vld [vmem:[%s5 + $0x10] sm:$0xff]
  %v258 = vld [vmem:[%s5 + $0x18] sm:$0xff]
  %v259 = vld [vmem:[%s6] sm:$0x1]
  %v261 = vlaneseq
  %v262 = vshrl.u32 %v261, 7
  %v263 = vsub.s32 0, %v262
  %v264 = vrot.slane %v259, %v263
  %v267 = vsel %vm41, %v251, 0
  %v270 = vsel %vm41, %v252, 0
  %v273 = vsel %vm41, %v253, 0
  %v276 = vsel %vm41, %v254, 0
  %278 = vmatprep.subr.mxu0 0.0
  %279 = vmatpush1.msra.mxu0 0.0
  %280 = vmatprep.subr.mxu0 0.0
  %281 = vmatpush1.msra.mxu0 0.0
  %282 = vmatprep.subr.mxu0 0.0
  %283 = vmatpush1.msra.mxu0 0.0
  %284 = vmatprep.subr.mxu0 0.0
  %285 = vmatpush1.msra.mxu0 0.0
  %286 = vmatprep.subr.mxu0 0.0
  %287 = vmatpush1.msra.mxu0 0.0
  %288 = vmatprep.subr.mxu0 0.0
  %289 = vmatpush1.msra.mxu0 0.0
  %290 = vmatprep.subr.mxu0 0.0
  %291 = vmatpush1.msra.mxu0 0.0
  %292 = vmatprep.subr.mxu0 0.0
  %293 = vmatpush1.msra.mxu0 0.0
  %294 = vmatprep.subr.mxu0 0.0
  %295 = vmatpush1.msra.mxu0 0.0
  %296 = vmatprep.subr.mxu0 0.0
  %297 = vmatpush1.msra.mxu0 0.0
  %298 = vmatprep.subr.mxu0 0.0
  %299 = vmatpush1.msra.mxu0 0.0
  %300 = vmatprep.subr.mxu0 0.0
  %301 = vmatpush1.msra.mxu0 0.0
  %302 = vmatprep.subr.mxu0 0.0
  %303 = vmatpush1.msra.mxu0 %v258
  %304 = vmatprep.subr.mxu0 0.0
  %305 = vmatpush1.msra.mxu0 %v257
  %306 = vmatprep.subr.mxu0 0.0
  %307 = vmatpush1.msra.mxu0 %v256
  %308 = vmatprep.subr.mxu0 0.0
  %309 = vmatpush1.msra.mxu0 %v255
  %310 = vmatprep.subr.mxu0 0.0
  %311 = vmatpush2.msra.mxu0 0.0
  %312 = vmatprep.subr.mxu0 0.0
  %313 = vmatpush2.msra.mxu0 0.0
  %314 = vmatprep.subr.mxu0 0.0
  %315 = vmatpush2.msra.mxu0 0.0
  %316 = vmatprep.subr.mxu0 0.0
  %317 = vmatpush2.msra.mxu0 0.0
  %318 = vmatprep.subr.mxu0 0.0
  %319 = vmatpush2.msra.mxu0 0.0
  %320 = vmatprep.subr.mxu0 0.0
  %321 = vmatpush2.msra.mxu0 0.0
  %322 = vmatprep.subr.mxu0 0.0
  %323 = vmatpush2.msra.mxu0 0.0
  %324 = vmatprep.subr.mxu0 0.0
  %325 = vmatpush2.msra.mxu0 0.0
  %326 = vmatprep.subr.mxu0 0.0
  %327 = vmatpush2.msra.mxu0 0.0
  %328 = vmatprep.subr.mxu0 0.0
  %329 = vmatpush2.msra.mxu0 0.0
  %330 = vmatprep.subr.mxu0 0.0
  %331 = vmatpush2.msra.mxu0 0.0
  %332 = vmatprep.subr.mxu0 0.0
  %333 = vmatpush2.msra.mxu0 0.0
  %334 = vmatprep.subr.mxu0 0.0
  %335 = vmatpush2.msra.mxu0 0.0
  %336 = vmatprep.subr.mxu0 0.0
  %337 = vmatpush2.msra.mxu0 0.0
  %338 = vmatprep.subr.mxu0 0.0
  %339 = vmatpush2.msra.mxu0 0.0
  %340 = vmatprep.subr.mxu0 0.0
  %341 = vmatpush2.msra.mxu0 0.0
  %342 = vmatprep.mubr.f32.mxu0 0.0
  %343 = vmatmul.mubr.f32.gmra.mxu0 %v267
  %v344 = vpop.f32.mrf.mxu0
  %v345 = vadd.f32 %v264, %v344
  %v346 = vpop.f32.mrf.mxu0
  %347 = vmatprep.mubr.f32.mxu0 0.0
  %348 = vmatmul.mubr.f32.gmra.mxu0 %v270
  %v349 = vpop.f32.mrf.mxu0
  %v350 = vadd.f32 %v264, %v349
  %v351 = vpop.f32.mrf.mxu0
  %352 = vmatprep.mubr.f32.mxu0 0.0
  %353 = vmatmul.mubr.f32.gmra.mxu0 %v273
  %v354 = vpop.f32.mrf.mxu0
  %v355 = vadd.f32 %v264, %v354
  %v356 = vpop.f32.mrf.mxu0
  %357 = vmatprep.mubr.f32.mxu0 0.0
  %358 = vmatmul.mubr.f32.gmra.mxu0 %v276
  %v359 = vpop.f32.mrf.mxu0
  %v360 = vadd.f32 %v264, %v359
  %v361 = vpop.f32.mrf.mxu0
  %362 = vdwg.mxu0
  %vm363 = vcmask 23552
  %364 = vst.msk [vmem:[%s7] sm:$0xff] %vm363, %v345
  %365 = vst.msk [vmem:[%s7 + $0x8] sm:$0xff] %vm363, %v350
  %366 = vst.msk [vmem:[%s7 + $0x10] sm:$0xff] %vm363, %v355
  %367 = vst.msk [vmem:[%s7 + $0x18] sm:$0xff] %vm363, %v360
  // Predicated region
  $region30: #{forward.13} parent=0 // pred_check
    _
  $region31: #{forward.13} parent=0 // pred_check_branch
    %369 = sbr.rel (0) target = $region33
  $region32: #{forward.13} parent=0 // pred_region
    _
  $region33: #{forward.13} parent=0 // pred_fallthru
    _
  // Predicated region
  $region34: #{forward.13} parent=0 // pred_check
    _
  $region35: #{forward.13} parent=0 // pred_check_branch
    %371 = sbr.rel (0) target = $region37
  $region36: #{forward.13} parent=0 // pred_region
    _
  $region37: #{forward.13} parent=0 // pred_fallthru
    _

</llo_original>
